<compile_context>
chip_gen: v7x
topology: tpu7x:2x2x1
jax: 0.10.0
libtpu: 0.0.40
codegen_flags: <defaults>
</compile_context>

<pallas_src>
import jax
import jax.numpy as jnp
from jax.experimental import pallas as pl
from jax.experimental.pallas import tpu as pltpu


INPUT_DIM = 784   # 1 * 28 * 28
H_DIM = 400
Z_DIM = 20

# lane-padded sizes
H_PAD = 512          # 4 * 128 (hidden width)
Z_HALF = 64          # mu (or log_var) padded width inside the fused block
ZZ_PAD = 2 * Z_HALF  # 128: [mu | log_var] -> one lane-dense 128-wide block

# offsets inside the single concatenated bias array (all 128-aligned)
_B1_OFF = 0
_B23_OFF = _B1_OFF + H_PAD            # 512
_B4_OFF = _B23_OFF + ZZ_PAD           # 640
_B5_OFF = _B4_OFF + H_PAD             # 1152
_B_TOTAL = _B5_OFF + INPUT_DIM        # 1936


def _vae_kernel(x_ref, eps_ref, w1_ref, w23_ref, w4_ref, w5_ref, bias_ref,
                xhat_ref, mulv_ref):
    f32 = jnp.float32
    bf16 = jnp.bfloat16

    # 128-aligned static lane slices of the fused bias array (f32).
    b1 = bias_ref[:, _B1_OFF:_B1_OFF + H_PAD]
    b23 = bias_ref[:, _B23_OFF:_B23_OFF + ZZ_PAD]
    b4 = bias_ref[:, _B4_OFF:_B4_OFF + H_PAD]
    b5 = bias_ref[:, _B5_OFF:_B5_OFF + INPUT_DIM]

    # ---- encode ----
    xb = x_ref[...].astype(bf16)                              # in-kernel cast
    h = jnp.dot(xb, w1_ref[...], preferred_element_type=f32) + b1
    h = jnp.maximum(h, 0.0)                                   # [tb, 512] f32

    # fused fc2|fc3: one matmul, split into mu / log_var at lane 64
    mu_lv = jnp.dot(h.astype(bf16), w23_ref[...],
                    preferred_element_type=f32) + b23         # [tb, 128] f32
    mu = mu_lv[:, :Z_HALF]
    log_var = mu_lv[:, Z_HALF:]

    # ---- reparameterize: z = mu + exp(0.5 * log_var) * eps (f32, EUP exp) ----
    z = mu + jnp.exp(log_var * 0.5) * eps_ref[...]            # [tb, 64] f32

    # ---- decode ----
    h2 = jnp.dot(z.astype(bf16), w4_ref[...], preferred_element_type=f32) + b4
    h2 = jnp.maximum(h2, 0.0)                                 # [tb, 512] f32
    logits = jnp.dot(h2.astype(bf16), w5_ref[...],
                     preferred_element_type=f32) + b5         # [tb, 784] f32

    # bf16 sigmoid + bf16 store: halves the dominant HBM write and halves EUP
    # work on bf16-capable v6e/v7x.
    xhat_ref[...] = jax.nn.sigmoid(logits.astype(bf16))
    mulv_ref[...] = mu_lv


def _round_up(n, m):
    return (n + m - 1) // m * m


def _pad2(a, rows, cols):
    r, c = a.shape
    return jnp.pad(a, ((0, rows - r), (0, cols - c)))


def init_params(key):
    """Deterministic init matching nn.Linear fan-in scaling. Weights stored as
    [in, out] (transpose of torch Linear.weight) so the kernel computes x@W+b."""
    ks = jax.random.split(key, 10)

    def linear(kw, kb, fan_in, fan_out):
        bound = 1.0 / jnp.sqrt(fan_in)
        w = jax.random.uniform(kw, (fan_in, fan_out), jnp.float32, -bound, bound)
        b = jax.random.uniform(kb, (1, fan_out), jnp.float32, -bound, bound)
        return w, b

    w1, b1 = linear(ks[0], ks[1], INPUT_DIM, H_DIM)
    w2, b2 = linear(ks[2], ks[3], H_DIM, Z_DIM)
    w3, b3 = linear(ks[4], ks[5], H_DIM, Z_DIM)
    w4, b4 = linear(ks[6], ks[7], Z_DIM, H_DIM)
    w5, b5 = linear(ks[8], ks[9], H_DIM, INPUT_DIM)
    return dict(w1=w1, b1=b1, w2=w2, b2=b2, w3=w3, b3=b3,
                w4=w4, b4=b4, w5=w5, b5=b5)


def prepare_params(p):
    """One-time packing: lane-pad only where needed, fuse fc2/fc3 weights,
    concatenate all biases, cast weights to bf16 (biases stay f32)."""
    bf16 = jnp.bfloat16
    w1 = _pad2(p["w1"], INPUT_DIM, H_PAD).astype(bf16)        # [784, 512]
    w2 = _pad2(p["w2"], H_PAD, Z_HALF)
    w3 = _pad2(p["w3"], H_PAD, Z_HALF)
    w23 = jnp.concatenate([w2, w3], axis=1).astype(bf16)      # [512, 128]
    w4 = _pad2(p["w4"], Z_HALF, H_PAD).astype(bf16)           # [64, 512]
    w5 = _pad2(p["w5"], H_PAD, INPUT_DIM).astype(bf16)        # [512, 784]

    bias = jnp.concatenate(
        [_pad2(p["b1"], 1, H_PAD), _pad2(p["b2"], 1, Z_HALF),
         _pad2(p["b3"], 1, Z_HALF), _pad2(p["b4"], 1, H_PAD),
         _pad2(p["b5"], 1, INPUT_DIM)], axis=1)               # [1, 1936] f32
    return dict(w1=w1, w23=w23, w4=w4, w5=w5, bias=bias)


@jax.jit
def vae_forward(x_nchw, eps, packed):
    """x_nchw: [B, 1, 28, 28] f32; eps: [B, Z_DIM] f32.
    Returns (x_hat [B,1,28,28] bf16, mu [B,Z_DIM] f32, log_var [B,Z_DIM] f32)."""
    batch = x_nchw.shape[0]

    # Batch tile: up to 512 rows, chosen as ~half the batch so the parallel
    # grid has >=2 steps (both v7x TensorCores used) whenever batch > 8.
    if batch <= 8:
        tb = batch                         # block == full dim -> always legal
    else:
        tb = min(512, _round_up(-(-batch // 2), 8))
    grid = (pl.cdiv(batch, tb),)

    x = x_nchw.reshape(batch, INPUT_DIM)                 # free reshape, f32
    eps_p = jnp.pad(eps.astype(jnp.float32),
                    ((0, 0), (0, Z_HALF - Z_DIM)))       # tiny pad to 64 lanes

    resident = lambda i: (0, 0)   # weights/biases stay resident across tiles

    xhat, mu_lv = pl.pallas_call(
        _vae_kernel,
        out_shape=(
            jax.ShapeDtypeStruct((batch, INPUT_DIM), jnp.bfloat16),
            jax.ShapeDtypeStruct((batch, ZZ_PAD), jnp.float32),
        ),
        grid=grid,
        in_specs=[
            pl.BlockSpec((tb, INPUT_DIM), lambda i: (i, 0)),   # x tile (f32)
            pl.BlockSpec((tb, Z_HALF), lambda i: (i, 0)),      # eps tile
            pl.BlockSpec((INPUT_DIM, H_PAD), resident),        # w1
            pl.BlockSpec((H_PAD, ZZ_PAD), resident),           # w2|w3
            pl.BlockSpec((Z_HALF, H_PAD), resident),           # w4
            pl.BlockSpec((H_PAD, INPUT_DIM), resident),        # w5
            pl.BlockSpec((1, _B_TOTAL), resident),             # fused biases
        ],
        out_specs=(
            pl.BlockSpec((tb, INPUT_DIM), lambda i: (i, 0)),   # x_hat (bf16)
            pl.BlockSpec((tb, ZZ_PAD), lambda i: (i, 0)),      # mu | log_var
        ),
        compiler_params=pltpu.CompilerParams(
            dimension_semantics=("parallel",)),
    )(x, eps_p, packed["w1"], packed["w23"], packed["w4"], packed["w5"],
      packed["bias"])

    x_hat = xhat.reshape(batch, 1, 28, 28)               # bf16, contiguous
    mu = mu_lv[:, :Z_DIM]
    log_var = mu_lv[:, Z_HALF:Z_HALF + Z_DIM]
    return x_hat, mu, log_var


def reference_forward(x_nchw, eps, p):
    """Plain-JAX reference with matching mixed precision (bf16 matmul inputs,
    f32 accumulation, f32 elementwise, f32 sigmoid) for a sanity check."""
    bf16 = jnp.bfloat16
    batch = x_nchw.shape[0]

    def dot(a, w):
        return jnp.dot(a.astype(bf16), w.astype(bf16),
                       preferred_element_type=jnp.float32)

    x = x_nchw.reshape(batch, INPUT_DIM)
    h = jnp.maximum(dot(x, p["w1"]) + p["b1"], 0.0)
    mu = dot(h, p["w2"]) + p["b2"]
    log_var = dot(h, p["w3"]) + p["b3"]
    z = mu + jnp.exp(0.5 * log_var) * eps
    h2 = jnp.maximum(dot(z, p["w4"]) + p["b4"], 0.0)
    x_hat = jax.nn.sigmoid(dot(h2, p["w5"]) + p["b5"])
    return x_hat.reshape(batch, 1, 28, 28), mu, log_var


if __name__ == "__main__":
    key = jax.random.PRNGKey(0)
    k_params, k_x, k_eps = jax.random.split(key, 3)

    batch = 2
    x = jax.random.uniform(k_x, (batch, 1, 28, 28), jnp.float32)
    # torch.randn_like equivalent: standard-normal noise generated
    # deterministically outside the kernel and passed in.
    eps = jax.random.normal(k_eps, (batch, Z_DIM), jnp.float32)

    params = init_params(k_params)
    packed = prepare_params(params)

    x_hat, mu, log_var = vae_forward(x, eps, packed)
    jax.block_until_ready((x_hat, mu, log_var))

    x_hat_ref, mu_ref, log_var_ref = reference_forward(x, eps, params)
    assert x_hat.shape == (batch, 1, 28, 28)
    assert mu.shape == (batch, Z_DIM) and log_var.shape == (batch, Z_DIM)
    # mu / log_var are f32 throughout -> tight tolerance.
    assert jnp.allclose(mu, mu_ref, atol=2e-3, rtol=2e-3)
    assert jnp.allclose(log_var, log_var_ref, atol=2e-3, rtol=2e-3)
    # x_hat is stored bf16 with a bf16 sigmoid -> relaxed tolerance.
    assert jnp.allclose(x_hat.astype(jnp.float32), x_hat_ref,
                        atol=2e-2, rtol=2e-2)

    print("KERNEL_OK")
</pallas_src>

<mosaic_0001>
module attributes {stable_mosaic.version = 11 : i64} {
  func.func @_vae_kernel(%arg0: i32, %arg1: memref<2x784xf32, #tpu.memory_space<vmem>>, %arg2: memref<2x64xf32, #tpu.memory_space<vmem>>, %arg3: memref<784x512xbf16, #tpu.memory_space<vmem>>, %arg4: memref<512x128xbf16, #tpu.memory_space<vmem>>, %arg5: memref<64x512xbf16, #tpu.memory_space<vmem>>, %arg6: memref<512x784xbf16, #tpu.memory_space<vmem>>, %arg7: memref<1x1936xf32, #tpu.memory_space<vmem>>, %arg8: memref<2x784xbf16, #tpu.memory_space<vmem>>, %arg9: memref<2x128xf32, #tpu.memory_space<vmem>>) attributes {dimension_semantics = [#tpu.dimension_semantics<parallel>], iteration_bounds = array<i64: 1>, scalar_prefetch = 0 : i64, scratch_operands = 0 : i64, tpu.core_type = #tpu.core_type<tc>, window_params = [{transform_indices = @transform_0, window_bounds = array<i64: 2, 784>}, {transform_indices = @transform_1, window_bounds = array<i64: 2, 64>}, {pipeline_mode = #tpu.pipeline_mode<synchronous>, transform_indices = @transform_2, window_bounds = array<i64: 784, 512>}, {pipeline_mode = #tpu.pipeline_mode<synchronous>, transform_indices = @transform_3, window_bounds = array<i64: 512, 128>}, {pipeline_mode = #tpu.pipeline_mode<synchronous>, transform_indices = @transform_4, window_bounds = array<i64: 64, 512>}, {pipeline_mode = #tpu.pipeline_mode<synchronous>, transform_indices = @transform_5, window_bounds = array<i64: 512, 784>}, {pipeline_mode = #tpu.pipeline_mode<synchronous>, transform_indices = @transform_6, window_bounds = array<i64: 1, 1936>}, {transform_indices = @transform_7, window_bounds = array<i64: 2, 784>}, {transform_indices = @transform_8, window_bounds = array<i64: 2, 128>}]} {
    %c0 = arith.constant 0 : index
    %c0_0 = arith.constant 0 : index
    %0 = vector.load %arg7[%c0, %c0_0] : memref<1x1936xf32, #tpu.memory_space<vmem>>, vector<1x512xf32>
    %c0_1 = arith.constant 0 : index
    %c512 = arith.constant 512 : index
    %1 = vector.load %arg7[%c0_1, %c512] : memref<1x1936xf32, #tpu.memory_space<vmem>>, vector<1x128xf32>
    %c0_2 = arith.constant 0 : index
    %c640 = arith.constant 640 : index
    %2 = vector.load %arg7[%c0_2, %c640] : memref<1x1936xf32, #tpu.memory_space<vmem>>, vector<1x512xf32>
    %c0_3 = arith.constant 0 : index
    %c1152 = arith.constant 1152 : index
    %3 = vector.load %arg7[%c0_3, %c1152] : memref<1x1936xf32, #tpu.memory_space<vmem>>, vector<1x784xf32>
    %c0_4 = arith.constant 0 : index
    %c0_5 = arith.constant 0 : index
    %4 = vector.load %arg1[%c0_4, %c0_5] : memref<2x784xf32, #tpu.memory_space<vmem>>, vector<2x784xf32>
    %5 = arith.truncf %4 : vector<2x784xf32> to vector<2x784xbf16>
    %c0_6 = arith.constant 0 : index
    %c0_7 = arith.constant 0 : index
    %6 = vector.load %arg3[%c0_6, %c0_7] : memref<784x512xbf16, #tpu.memory_space<vmem>>, vector<784x512xbf16>
    %cst = arith.constant dense<0.000000e+00> : vector<2x512xf32>
    %7 = tpu.matmul %5, %6, %cst {dimension_numbers = #tpu.dot_dimension_numbers<[1], [0], [0], [1], [0, 0, 1, 1], [], []>} : vector<2x784xbf16>, vector<784x512xbf16>, vector<2x512xf32> -> vector<2x512xf32>
    %8 = vector.broadcast %0 : vector<1x512xf32> to vector<2x512xf32>
    %9 = arith.addf %7, %8 : vector<2x512xf32>
    %cst_8 = arith.constant 0.000000e+00 : f32
    %10 = vector.broadcast %cst_8 : f32 to vector<2x512xf32>
    %11 = arith.maximumf %9, %10 : vector<2x512xf32>
    %12 = arith.truncf %11 : vector<2x512xf32> to vector<2x512xbf16>
    %c0_9 = arith.constant 0 : index
    %c0_10 = arith.constant 0 : index
    %13 = vector.load %arg4[%c0_9, %c0_10] : memref<512x128xbf16, #tpu.memory_space<vmem>>, vector<512x128xbf16>
    %cst_11 = arith.constant dense<0.000000e+00> : vector<2x128xf32>
    %14 = tpu.matmul %12, %13, %cst_11 {dimension_numbers = #tpu.dot_dimension_numbers<[1], [0], [0], [1], [0, 0, 1, 1], [], []>} : vector<2x512xbf16>, vector<512x128xbf16>, vector<2x128xf32> -> vector<2x128xf32>
    %15 = vector.broadcast %1 : vector<1x128xf32> to vector<2x128xf32>
    %16 = arith.addf %14, %15 : vector<2x128xf32>
    %17 = vector.extract_strided_slice %16 {offsets = [0, 0], sizes = [2, 64], strides = [1, 1]} : vector<2x128xf32> to vector<2x64xf32>
    %18 = vector.extract_strided_slice %16 {offsets = [0, 64], sizes = [2, 64], strides = [1, 1]} : vector<2x128xf32> to vector<2x64xf32>
    %cst_12 = arith.constant 5.000000e-01 : f32
    %19 = vector.broadcast %cst_12 : f32 to vector<2x64xf32>
    %20 = arith.mulf %18, %19 : vector<2x64xf32>
    %21 = math.exp %20 : vector<2x64xf32>
    %c0_13 = arith.constant 0 : index
    %c0_14 = arith.constant 0 : index
    %22 = vector.load %arg2[%c0_13, %c0_14] : memref<2x64xf32, #tpu.memory_space<vmem>>, vector<2x64xf32>
    %23 = arith.mulf %21, %22 : vector<2x64xf32>
    %24 = arith.addf %17, %23 : vector<2x64xf32>
    %25 = arith.truncf %24 : vector<2x64xf32> to vector<2x64xbf16>
    %c0_15 = arith.constant 0 : index
    %c0_16 = arith.constant 0 : index
    %26 = vector.load %arg5[%c0_15, %c0_16] : memref<64x512xbf16, #tpu.memory_space<vmem>>, vector<64x512xbf16>
    %cst_17 = arith.constant dense<0.000000e+00> : vector<2x512xf32>
    %27 = tpu.matmul %25, %26, %cst_17 {dimension_numbers = #tpu.dot_dimension_numbers<[1], [0], [0], [1], [0, 0, 1, 1], [], []>} : vector<2x64xbf16>, vector<64x512xbf16>, vector<2x512xf32> -> vector<2x512xf32>
    %28 = vector.broadcast %2 : vector<1x512xf32> to vector<2x512xf32>
    %29 = arith.addf %27, %28 : vector<2x512xf32>
    %cst_18 = arith.constant 0.000000e+00 : f32
    %30 = vector.broadcast %cst_18 : f32 to vector<2x512xf32>
    %31 = arith.maximumf %29, %30 : vector<2x512xf32>
    %32 = arith.truncf %31 : vector<2x512xf32> to vector<2x512xbf16>
    %c0_19 = arith.constant 0 : index
    %c0_20 = arith.constant 0 : index
    %33 = vector.load %arg6[%c0_19, %c0_20] : memref<512x784xbf16, #tpu.memory_space<vmem>>, vector<512x784xbf16>
    %cst_21 = arith.constant dense<0.000000e+00> : vector<2x784xf32>
    %34 = tpu.matmul %32, %33, %cst_21 {dimension_numbers = #tpu.dot_dimension_numbers<[1], [0], [0], [1], [0, 0, 1, 1], [], []>} : vector<2x512xbf16>, vector<512x784xbf16>, vector<2x784xf32> -> vector<2x784xf32>
    %35 = vector.broadcast %3 : vector<1x784xf32> to vector<2x784xf32>
    %36 = arith.addf %34, %35 : vector<2x784xf32>
    %37 = arith.truncf %36 : vector<2x784xf32> to vector<2x784xbf16>
    %38 = arith.negf %37 : vector<2x784xbf16>
    %39 = math.exp %38 : vector<2x784xbf16>
    %cst_22 = arith.constant 1.000000e+00 : bf16
    %40 = vector.broadcast %cst_22 : bf16 to vector<2x784xbf16>
    %41 = arith.addf %40, %39 : vector<2x784xbf16>
    %42 = arith.divf %40, %41 : vector<2x784xbf16>
    %c0_23 = arith.constant 0 : index
    %c0_24 = arith.constant 0 : index
    %43 = vector.load %arg8[%c0_23, %c0_24] : memref<2x784xbf16, #tpu.memory_space<vmem>>, vector<2x784xbf16>
    tpu.vector_store %arg8[%c0_23, %c0_24], %42 {strides = array<i32>} : memref<2x784xbf16, #tpu.memory_space<vmem>>, vector<2x784xbf16>,
    %c0_25 = arith.constant 0 : index
    %c0_26 = arith.constant 0 : index
    %44 = vector.load %arg9[%c0_25, %c0_26] : memref<2x128xf32, #tpu.memory_space<vmem>>, vector<2x128xf32>
    tpu.vector_store %arg9[%c0_25, %c0_26], %16 {strides = array<i32>} : memref<2x128xf32, #tpu.memory_space<vmem>>, vector<2x128xf32>,
    return
  }
  func.func @transform_0(%arg0: i32) -> (i32, i32) {
    %c0_i32 = arith.constant 0 : i32
    %c0_i32_0 = arith.constant 0 : i32
    return %arg0, %c0_i32 : i32, i32
  }
  func.func @transform_1(%arg0: i32) -> (i32, i32) {
    %c0_i32 = arith.constant 0 : i32
    %c0_i32_0 = arith.constant 0 : i32
    return %arg0, %c0_i32 : i32, i32
  }
  func.func @transform_2(%arg0: i32) -> (i32, i32) {
    %c0_i32 = arith.constant 0 : i32
    %c0_i32_0 = arith.constant 0 : i32
    %c0_i32_1 = arith.constant 0 : i32
    return %c0_i32, %c0_i32_0 : i32, i32
  }
  func.func @transform_3(%arg0: i32) -> (i32, i32) {
    %c0_i32 = arith.constant 0 : i32
    %c0_i32_0 = arith.constant 0 : i32
    %c0_i32_1 = arith.constant 0 : i32
    return %c0_i32, %c0_i32_0 : i32, i32
  }
  func.func @transform_4(%arg0: i32) -> (i32, i32) {
    %c0_i32 = arith.constant 0 : i32
    %c0_i32_0 = arith.constant 0 : i32
    %c0_i32_1 = arith.constant 0 : i32
    return %c0_i32, %c0_i32_0 : i32, i32
  }
  func.func @transform_5(%arg0: i32) -> (i32, i32) {
    %c0_i32 = arith.constant 0 : i32
    %c0_i32_0 = arith.constant 0 : i32
    %c0_i32_1 = arith.constant 0 : i32
    return %c0_i32, %c0_i32_0 : i32, i32
  }
  func.func @transform_6(%arg0: i32) -> (i32, i32) {
    %c0_i32 = arith.constant 0 : i32
    %c0_i32_0 = arith.constant 0 : i32
    %c0_i32_1 = arith.constant 0 : i32
    return %c0_i32, %c0_i32_0 : i32, i32
  }
  func.func @transform_7(%arg0: i32) -> (i32, i32) {
    %c0_i32 = arith.constant 0 : i32
    %c0_i32_0 = arith.constant 0 : i32
    return %arg0, %c0_i32 : i32, i32
  }
  func.func @transform_8(%arg0: i32) -> (i32, i32) {
    %c0_i32 = arith.constant 0 : i32
    %c0_i32_0 = arith.constant 0 : i32
    return %arg0, %c0_i32 : i32, i32
  }
}

</mosaic_0001>

<llo_original>
// kernel: vae_forward.1
$region0: #{vae_forward.1}
  #allocation0 [shape = 'u32[]', space=smem, size = 0x4, offset = 0x4, fixed_abs, tag = 'smem constant byte address 0x4 - core index']
  #allocation1 [shape = 'u32[144,128]{1,0:T(1,128)}', space=vmem, size = 0x12000, scoped, tag = 'internal scratch']
  %s0 = inlined_call_operand.vmem [shape: f32[2,784], index: 0, kind: input, shape index: {}]
  %s1 = inlined_call_operand.vmem [shape: f32[2,64], index: 1, kind: input, shape index: {}]
  %s2 = inlined_call_operand.vmem [shape: bf16[784,512], index: 2, kind: input, shape index: {}]
  %s3 = inlined_call_operand.vmem [shape: bf16[512,128], index: 3, kind: input, shape index: {}]
  %s4 = inlined_call_operand.vmem [shape: bf16[64,512], index: 4, kind: input, shape index: {}]
  %s5 = inlined_call_operand.vmem [shape: bf16[512,784], index: 5, kind: input, shape index: {}]
  %s6 = inlined_call_operand.vmem [shape: f32[1,1936], index: 6, kind: input, shape index: {}]
  %s7 = inlined_call_operand.vmem [shape: bf16[2,784], index: 7, kind: output, shape index: {0}]
  %s8 = inlined_call_operand.vmem [shape: f32[2,128], index: 8, kind: output, shape index: {1}]
  %9 = xla_tuple %s7, %s8
  %s10 = sld [smem:[#allocation0]]
  $region46: #{vae_forward.1} parent=0
    _
  %s12 = ssub.s32 1, %s10
  %s13 = scalar_select 0, %s12, %s10
  // Predicated region
  $region2: #{vae_forward.1} parent=0 // pred_check
    _
  $region3: #{vae_forward.1} parent=0 // pred_check_branch
    %15 = sbr.rel (0) target = $region5
  $region4: #{vae_forward.1} parent=0 // pred_region
    _
  $region5: #{vae_forward.1} parent=0 // pred_fallthru
    _
  // Predicated region
  $region6: #{vae_forward.1} parent=0 // pred_check
    _
  $region7: #{vae_forward.1} parent=0 // pred_check_branch
    %17 = sbr.rel (0) target = $region9
  $region8: #{vae_forward.1} parent=0 // pred_region
    _
  $region9: #{vae_forward.1} parent=0 // pred_fallthru
    _
  // Predicated region
  $region10: #{vae_forward.1} parent=0 // pred_check
    _
  $region11: #{vae_forward.1} parent=0 // pred_check_branch
    %19 = sbr.rel (0) target = $region13
  $region12: #{vae_forward.1} parent=0 // pred_region
    _
  $region13: #{vae_forward.1} parent=0 // pred_fallthru
    _
  // Predicated region
  $region14: #{vae_forward.1} parent=0 // pred_check
    _
  $region15: #{vae_forward.1} parent=0 // pred_check_branch
    %21 = sbr.rel (0) target = $region17
  $region16: #{vae_forward.1} parent=0 // pred_region
    _
  $region17: #{vae_forward.1} parent=0 // pred_fallthru
    _
  // Predicated region
  $region18: #{vae_forward.1} parent=0 // pred_check
    _
  $region19: #{vae_forward.1} parent=0 // pred_check_branch
    %23 = sbr.rel (0) target = $region21
  $region20: #{vae_forward.1} parent=0 // pred_region
    _
  $region21: #{vae_forward.1} parent=0 // pred_fallthru
    _
  // Predicated region
  $region22: #{vae_forward.1} parent=0 // pred_check
    _
  $region23: #{vae_forward.1} parent=0 // pred_check_branch
    %25 = sbr.rel (0) target = $region25
  $region24: #{vae_forward.1} parent=0 // pred_region
    _
  $region25: #{vae_forward.1} parent=0 // pred_fallthru
    _
  // Predicated region
  $region26: #{vae_forward.1} parent=0 // pred_check
    _
  $region27: #{vae_forward.1} parent=0 // pred_check_branch
    %27 = sbr.rel (0) target = $region29
  $region28: #{vae_forward.1} parent=0 // pred_region
    _
  $region29: #{vae_forward.1} parent=0 // pred_fallthru
    _
  %v30 = vld [vmem:[%s6] sm:$0xf]
  %v31 = vld [vmem:[%s6 + $0x4] sm:$0x1]
  %v32 = vld [vmem:[%s6 + $0x5] sm:$0xf]
  %v33 = vld [vmem:[%s6 + $0x9] sm:$0x7f]
  %v34 = vld [vmem:[%s0] sm:$0xff]
  %v35 = vld [vmem:[%s0 + $0x8] sm:$0x3f]
  %v38 = vcombine.high %v34, %v34
  %v40 = vunpack.c.l.s4 1983009808
  %v41 = vunpack.c.0.s8 %v40
  %v42 = vlaneseq
  %v43 = vshrl.u32 %v42, 7
  %v44 = vsub.s32 %v41, %v43
  %v45 = vrot.slane %v34, %v44
  %v47 = vunpack.c.l.s4 1983009808
  %v48 = vunpack.c.0.s8 %v47
  %v49 = vlaneseq
  %v50 = vshrl.u32 %v49, 7
  %v51 = vsub.s32 %v48, %v50
  %v52 = vrot.slane %v38, %v51
  %v53 = vcombine.high %v45, %v45
  %v54 = vcombine.high %v52, %v52
  %v55 = vcombine.high %v35, %v35
  %v57 = vunpack.c.l.s4 1983009808
  %v58 = vunpack.c.0.s8 %v57
  %v59 = vlaneseq
  %v60 = vshrl.u32 %v59, 7
  %v61 = vsub.s32 %v58, %v60
  %v62 = vrot.slane %v35, %v61
  %v64 = vunpack.c.l.s4 1983009808
  %v65 = vunpack.c.0.s8 %v64
  %v66 = vlaneseq
  %v67 = vshrl.u32 %v66, 7
  %v68 = vsub.s32 %v65, %v67
  %v69 = vrot.slane %v55, %v68
  %v70 = vcombine.high %v62, %v62
  %v78 = vpack.c.bf16 %v45, %v45
  %v79 = vpack.c.bf16 %v53, %v53
  %v80 = vpack.c.bf16 %v52, %v52
  %v81 = vpack.c.bf16 %v54, %v54
  %v82 = vpack.c.bf16 %v62, %v62
  %v83 = vpack.c.bf16 %v70, %v70
  %v84 = vpack.c.bf16 %v69, %v69
  %v85 = vld [vmem:[%s2] sm:$0xff]
  %v86 = vld [vmem:[%s2 + $0x8] sm:$0xff]
  %v87 = vld [vmem:[%s2 + $0x10] sm:$0xff]
  %v88 = vld [vmem:[%s2 + $0x18] sm:$0xff]
  %v89 = vld [vmem:[%s2 + $0x20] sm:$0xff]
  %v90 = vld [vmem:[%s2 + $0x28] sm:$0xff]
  %v91 = vld [vmem:[%s2 + $0x30] sm:$0xff]
  %v92 = vld [vmem:[%s2 + $0x38] sm:$0xff]
  %v93 = vld [vmem:[%s2 + $0x40] sm:$0xff]
  %v94 = vld [vmem:[%s2 + $0x48] sm:$0xff]
  %v95 = vld [vmem:[%s2 + $0x50] sm:$0xff]
  %v96 = vld [vmem:[%s2 + $0x58] sm:$0xff]
  %v97 = vld [vmem:[%s2 + $0x60] sm:$0xff]
  %v98 = vld [vmem:[%s2 + $0x68] sm:$0xff]
  %v99 = vld [vmem:[%s2 + $0x70] sm:$0xff]
  %v100 = vld [vmem:[%s2 + $0x78] sm:$0xff]
  %v101 = vld [vmem:[%s2 + $0x80] sm:$0xff]
  %v102 = vld [vmem:[%s2 + $0x88] sm:$0xff]
  %v103 = vld [vmem:[%s2 + $0x90] sm:$0xff]
  %v104 = vld [vmem:[%s2 + $0x98] sm:$0xff]
  %v105 = vld [vmem:[%s2 + $0xa0] sm:$0xff]
  %v106 = vld [vmem:[%s2 + $0xa8] sm:$0xff]
  %v107 = vld [vmem:[%s2 + $0xb0] sm:$0xff]
  %v108 = vld [vmem:[%s2 + $0xb8] sm:$0xff]
  %v109 = vld [vmem:[%s2 + $0xc0] sm:$0xff]
  %v110 = vld [vmem:[%s2 + $0xc8] sm:$0xff]
  %v111 = vld [vmem:[%s2 + $0xd0] sm:$0xff]
  %v112 = vld [vmem:[%s2 + $0xd8] sm:$0xff]
  %v113 = vld [vmem:[%s2 + $0xe0] sm:$0xff]
  %v114 = vld [vmem:[%s2 + $0xe8] sm:$0xff]
  %v115 = vld [vmem:[%s2 + $0xf0] sm:$0xff]
  %v116 = vld [vmem:[%s2 + $0xf8] sm:$0xff]
  %v117 = vld [vmem:[%s2 + $0x100] sm:$0xff]
  %v118 = vld [vmem:[%s2 + $0x108] sm:$0xff]
  %v119 = vld [vmem:[%s2 + $0x110] sm:$0xff]
  %v120 = vld [vmem:[%s2 + $0x118] sm:$0xff]
  %v121 = vld [vmem:[%s2 + $0x120] sm:$0xff]
  %v122 = vld [vmem:[%s2 + $0x128] sm:$0xff]
  %v123 = vld [vmem:[%s2 + $0x130] sm:$0xff]
  %v124 = vld [vmem:[%s2 + $0x138] sm:$0xff]
  %v125 = vld [vmem:[%s2 + $0x140] sm:$0xff]
  %v126 = vld [vmem:[%s2 + $0x148] sm:$0xff]
  %v127 = vld [vmem:[%s2 + $0x150] sm:$0xff]
  %v128 = vld [vmem:[%s2 + $0x158] sm:$0xff]
  %v129 = vld [vmem:[%s2 + $0x160] sm:$0xff]
  %v130 = vld [vmem:[%s2 + $0x168] sm:$0xff]
  %v131 = vld [vmem:[%s2 + $0x170] sm:$0xff]
  %v132 = vld [vmem:[%s2 + $0x178] sm:$0xff]
  %v133 = vld [vmem:[%s2 + $0x180] sm:$0xff]
  %v134 = vld [vmem:[%s2 + $0x188] sm:$0xff]
  %v135 = vld [vmem:[%s2 + $0x190] sm:$0xff]
  %v136 = vld [vmem:[%s2 + $0x198] sm:$0xff]
  %v137 = vld [vmem:[%s2 + $0x1a0] sm:$0xff]
  %v138 = vld [vmem:[%s2 + $0x1a8] sm:$0xff]
  %v139 = vld [vmem:[%s2 + $0x1b0] sm:$0xff]
  %v140 = vld [vmem:[%s2 + $0x1b8] sm:$0xff]
  %v141 = vld [vmem:[%s2 + $0x1c0] sm:$0xff]
  %v142 = vld [vmem:[%s2 + $0x1c8] sm:$0xff]
  %v143 = vld [vmem:[%s2 + $0x1d0] sm:$0xff]
  %v144 = vld [vmem:[%s2 + $0x1d8] sm:$0xff]
  %v145 = vld [vmem:[%s2 + $0x1e0] sm:$0xff]
  %v146 = vld [vmem:[%s2 + $0x1e8] sm:$0xff]
  %v147 = vld [vmem:[%s2 + $0x1f0] sm:$0xff]
  %v148 = vld [vmem:[%s2 + $0x1f8] sm:$0xff]
  %v149 = vld [vmem:[%s2 + $0x200] sm:$0xff]
  %v150 = vld [vmem:[%s2 + $0x208] sm:$0xff]
  %v151 = vld [vmem:[%s2 + $0x210] sm:$0xff]
  %v152 = vld [vmem:[%s2 + $0x218] sm:$0xff]
  %v153 = vld [vmem:[%s2 + $0x220] sm:$0xff]
  %v154 = vld [vmem:[%s2 + $0x228] sm:$0xff]
  %v155 = vld [vmem:[%s2 + $0x230] sm:$0xff]
  %v156 = vld [vmem:[%s2 + $0x238] sm:$0xff]
  %v157 = vld [vmem:[%s2 + $0x240] sm:$0xff]
  %v158 = vld [vmem:[%s2 + $0x248] sm:$0xff]
  %v159 = vld [vmem:[%s2 + $0x250] sm:$0xff]
  %v160 = vld [vmem:[%s2 + $0x258] sm:$0xff]
  %v161 = vld [vmem:[%s2 + $0x260] sm:$0xff]
  %v162 = vld [vmem:[%s2 + $0x268] sm:$0xff]
  %v163 = vld [vmem:[%s2 + $0x270] sm:$0xff]
  %v164 = vld [vmem:[%s2 + $0x278] sm:$0xff]
  %v165 = vld [vmem:[%s2 + $0x280] sm:$0xff]
  %v166 = vld [vmem:[%s2 + $0x288] sm:$0xff]
  %v167 = vld [vmem:[%s2 + $0x290] sm:$0xff]
  %v168 = vld [vmem:[%s2 + $0x298] sm:$0xff]
  %v169 = vld [vmem:[%s2 + $0x2a0] sm:$0xff]
  %v170 = vld [vmem:[%s2 + $0x2a8] sm:$0xff]
  %v171 = vld [vmem:[%s2 + $0x2b0] sm:$0xff]
  %v172 = vld [vmem:[%s2 + $0x2b8] sm:$0xff]
  %v173 = vld [vmem:[%s2 + $0x2c0] sm:$0xff]
  %v174 = vld [vmem:[%s2 + $0x2c8] sm:$0xff]
  %v175 = vld [vmem:[%s2 + $0x2d0] sm:$0xff]
  %v176 = vld [vmem:[%s2 + $0x2d8] sm:$0xff]
  %v177 = vld [vmem:[%s2 + $0x2e0] sm:$0xff]
  %v178 = vld [vmem:[%s2 + $0x2e8] sm:$0xff]
  %v179 = vld [vmem:[%s2 + $0x2f0] sm:$0xff]
  %v180 = vld [vmem:[%s2 + $0x2f8] sm:$0xff]
  %v181 = vld [vmem:[%s2 + $0x300] sm:$0xff]
  %v182 = vld [vmem:[%s2 + $0x308] sm:$0xff]
  %v183 = vld [vmem:[%s2 + $0x310] sm:$0xff]
  %v184 = vld [vmem:[%s2 + $0x318] sm:$0xff]
  %v185 = vld [vmem:[%s2 + $0x320] sm:$0xff]
  %v186 = vld [vmem:[%s2 + $0x328] sm:$0xff]
  %v187 = vld [vmem:[%s2 + $0x330] sm:$0xff]
  %v188 = vld [vmem:[%s2 + $0x338] sm:$0xff]
  %v189 = vld [vmem:[%s2 + $0x340] sm:$0xff]
  %v190 = vld [vmem:[%s2 + $0x348] sm:$0xff]
  %v191 = vld [vmem:[%s2 + $0x350] sm:$0xff]
  %v192 = vld [vmem:[%s2 + $0x358] sm:$0xff]
  %v193 = vld [vmem:[%s2 + $0x360] sm:$0xff]
  %v194 = vld [vmem:[%s2 + $0x368] sm:$0xff]
  %v195 = vld [vmem:[%s2 + $0x370] sm:$0xff]
  %v196 = vld [vmem:[%s2 + $0x378] sm:$0xff]
  %v197 = vld [vmem:[%s2 + $0x380] sm:$0xff]
  %v198 = vld [vmem:[%s2 + $0x388] sm:$0xff]
  %v199 = vld [vmem:[%s2 + $0x390] sm:$0xff]
  %v200 = vld [vmem:[%s2 + $0x398] sm:$0xff]
  %v201 = vld [vmem:[%s2 + $0x3a0] sm:$0xff]
  %v202 = vld [vmem:[%s2 + $0x3a8] sm:$0xff]
  %v203 = vld [vmem:[%s2 + $0x3b0] sm:$0xff]
  %v204 = vld [vmem:[%s2 + $0x3b8] sm:$0xff]
  %v205 = vld [vmem:[%s2 + $0x3c0] sm:$0xff]
  %v206 = vld [vmem:[%s2 + $0x3c8] sm:$0xff]
  %v207 = vld [vmem:[%s2 + $0x3d0] sm:$0xff]
  %v208 = vld [vmem:[%s2 + $0x3d8] sm:$0xff]
  %v209 = vld [vmem:[%s2 + $0x3e0] sm:$0xff]
  %v210 = vld [vmem:[%s2 + $0x3e8] sm:$0xff]
  %v211 = vld [vmem:[%s2 + $0x3f0] sm:$0xff]
  %v212 = vld [vmem:[%s2 + $0x3f8] sm:$0xff]
  %v213 = vld [vmem:[%s2 + $0x400] sm:$0xff]
  %v214 = vld [vmem:[%s2 + $0x408] sm:$0xff]
  %v215 = vld [vmem:[%s2 + $0x410] sm:$0xff]
  %v216 = vld [vmem:[%s2 + $0x418] sm:$0xff]
  %v217 = vld [vmem:[%s2 + $0x420] sm:$0xff]
  %v218 = vld [vmem:[%s2 + $0x428] sm:$0xff]
  %v219 = vld [vmem:[%s2 + $0x430] sm:$0xff]
  %v220 = vld [vmem:[%s2 + $0x438] sm:$0xff]
  %v221 = vld [vmem:[%s2 + $0x440] sm:$0xff]
  %v222 = vld [vmem:[%s2 + $0x448] sm:$0xff]
  %v223 = vld [vmem:[%s2 + $0x450] sm:$0xff]
  %v224 = vld [vmem:[%s2 + $0x458] sm:$0xff]
  %v225 = vld [vmem:[%s2 + $0x460] sm:$0xff]
  %v226 = vld [vmem:[%s2 + $0x468] sm:$0xff]
  %v227 = vld [vmem:[%s2 + $0x470] sm:$0xff]
  %v228 = vld [vmem:[%s2 + $0x478] sm:$0xff]
  %v229 = vld [vmem:[%s2 + $0x480] sm:$0xff]
  %v230 = vld [vmem:[%s2 + $0x488] sm:$0xff]
  %v231 = vld [vmem:[%s2 + $0x490] sm:$0xff]
  %v232 = vld [vmem:[%s2 + $0x498] sm:$0xff]
  %v233 = vld [vmem:[%s2 + $0x4a0] sm:$0xff]
  %v234 = vld [vmem:[%s2 + $0x4a8] sm:$0xff]
  %v235 = vld [vmem:[%s2 + $0x4b0] sm:$0xff]
  %v236 = vld [vmem:[%s2 + $0x4b8] sm:$0xff]
  %v237 = vld [vmem:[%s2 + $0x4c0] sm:$0xff]
  %v238 = vld [vmem:[%s2 + $0x4c8] sm:$0xff]
  %v239 = vld [vmem:[%s2 + $0x4d0] sm:$0xff]
  %v240 = vld [vmem:[%s2 + $0x4d8] sm:$0xff]
  %v241 = vld [vmem:[%s2 + $0x4e0] sm:$0xff]
  %v242 = vld [vmem:[%s2 + $0x4e8] sm:$0xff]
  %v243 = vld [vmem:[%s2 + $0x4f0] sm:$0xff]
  %v244 = vld [vmem:[%s2 + $0x4f8] sm:$0xff]
  %v245 = vld [vmem:[%s2 + $0x500] sm:$0xff]
  %v246 = vld [vmem:[%s2 + $0x508] sm:$0xff]
  %v247 = vld [vmem:[%s2 + $0x510] sm:$0xff]
  %v248 = vld [vmem:[%s2 + $0x518] sm:$0xff]
  %v249 = vld [vmem:[%s2 + $0x520] sm:$0xff]
  %v250 = vld [vmem:[%s2 + $0x528] sm:$0xff]
  %v251 = vld [vmem:[%s2 + $0x530] sm:$0xff]
  %v252 = vld [vmem:[%s2 + $0x538] sm:$0xff]
  %v253 = vld [vmem:[%s2 + $0x540] sm:$0xff]
  %v254 = vld [vmem:[%s2 + $0x548] sm:$0xff]
  %v255 = vld [vmem:[%s2 + $0x550] sm:$0xff]
  %v256 = vld [vmem:[%s2 + $0x558] sm:$0xff]
  %v257 = vld [vmem:[%s2 + $0x560] sm:$0xff]
  %v258 = vld [vmem:[%s2 + $0x568] sm:$0xff]
  %v259 = vld [vmem:[%s2 + $0x570] sm:$0xff]
  %v260 = vld [vmem:[%s2 + $0x578] sm:$0xff]
  %v261 = vld [vmem:[%s2 + $0x580] sm:$0xff]
  %v262 = vld [vmem:[%s2 + $0x588] sm:$0xff]
  %v263 = vld [vmem:[%s2 + $0x590] sm:$0xff]
  %v264 = vld [vmem:[%s2 + $0x598] sm:$0xff]
  %v265 = vld [vmem:[%s2 + $0x5a0] sm:$0xff]
  %v266 = vld [vmem:[%s2 + $0x5a8] sm:$0xff]
  %v267 = vld [vmem:[%s2 + $0x5b0] sm:$0xff]
  %v268 = vld [vmem:[%s2 + $0x5b8] sm:$0xff]
  %v269 = vld [vmem:[%s2 + $0x5c0] sm:$0xff]
  %v270 = vld [vmem:[%s2 + $0x5c8] sm:$0xff]
  %v271 = vld [vmem:[%s2 + $0x5d0] sm:$0xff]
  %v272 = vld [vmem:[%s2 + $0x5d8] sm:$0xff]
  %v273 = vld [vmem:[%s2 + $0x5e0] sm:$0xff]
  %v274 = vld [vmem:[%s2 + $0x5e8] sm:$0xff]
  %v275 = vld [vmem:[%s2 + $0x5f0] sm:$0xff]
  %v276 = vld [vmem:[%s2 + $0x5f8] sm:$0xff]
  %v277 = vld [vmem:[%s2 + $0x600] sm:$0xff]
  %v278 = vld [vmem:[%s2 + $0x608] sm:$0xff]
  %v279 = vld [vmem:[%s2 + $0x610] sm:$0xff]
  %v280 = vld [vmem:[%s2 + $0x618] sm:$0xff]
  %v282 = vlaneseq
  %v283 = vshrl.u32 %v282, 7
  %v284 = vsub.s32 0, %v283
  %v285 = vrot.slane %v30, %v284
  %v286 = vlaneseq
  %v287 = vshrl.u32 %v286, 7
  %v288 = vsub.s32 1, %v287
  %v289 = vrot.slane %v30, %v288
  %v290 = vlaneseq
  %v291 = vshrl.u32 %v290, 7
  %v292 = vsub.s32 2, %v291
  %v293 = vrot.slane %v30, %v292
  %v294 = vlaneseq
  %v295 = vshrl.u32 %v294, 7
  %v296 = vsub.s32 3, %v295
  %v297 = vrot.slane %v30, %v296
  %v498 = vunpack.c.l.b16 %v85
  %v499 = vunpack.c.h.b16 %v85
  %v500 = vunpack.c.l.b16 %v86
  %v501 = vunpack.c.h.b16 %v86
  %v502 = vunpack.c.l.b16 %v87
  %v503 = vunpack.c.h.b16 %v87
  %v504 = vunpack.c.l.b16 %v88
  %v505 = vunpack.c.h.b16 %v88
  %v506 = vunpack.c.l.b16 %v89
  %v507 = vunpack.c.h.b16 %v89
  %v508 = vunpack.c.l.b16 %v90
  %v509 = vunpack.c.h.b16 %v90
  %v510 = vunpack.c.l.b16 %v91
  %v511 = vunpack.c.h.b16 %v91
  %v512 = vunpack.c.l.b16 %v92
  %v513 = vunpack.c.h.b16 %v92
  %v514 = vunpack.c.l.b16 %v93
  %v515 = vunpack.c.h.b16 %v93
  %v516 = vunpack.c.l.b16 %v94
  %v517 = vunpack.c.h.b16 %v94
  %v518 = vunpack.c.l.b16 %v95
  %v519 = vunpack.c.h.b16 %v95
  %v520 = vunpack.c.l.b16 %v96
  %v521 = vunpack.c.h.b16 %v96
  %v522 = vunpack.c.l.b16 %v97
  %v523 = vunpack.c.h.b16 %v97
  %v524 = vunpack.c.l.b16 %v98
  %v525 = vunpack.c.h.b16 %v98
  %v526 = vunpack.c.l.b16 %v99
  %v527 = vunpack.c.h.b16 %v99
  %v528 = vunpack.c.l.b16 %v100
  %v529 = vunpack.c.h.b16 %v100
  %v530 = vunpack.c.l.b16 %v101
  %v531 = vunpack.c.h.b16 %v101
  %v532 = vunpack.c.l.b16 %v102
  %v533 = vunpack.c.h.b16 %v102
  %v534 = vunpack.c.l.b16 %v103
  %v535 = vunpack.c.h.b16 %v103
  %v536 = vunpack.c.l.b16 %v104
  %v537 = vunpack.c.h.b16 %v104
  %v538 = vunpack.c.l.b16 %v105
  %v539 = vunpack.c.h.b16 %v105
  %v540 = vunpack.c.l.b16 %v106
  %v541 = vunpack.c.h.b16 %v106
  %v542 = vunpack.c.l.b16 %v107
  %v543 = vunpack.c.h.b16 %v107
  %v544 = vunpack.c.l.b16 %v108
  %v545 = vunpack.c.h.b16 %v108
  %v546 = vunpack.c.l.b16 %v109
  %v547 = vunpack.c.h.b16 %v109
  %v548 = vunpack.c.l.b16 %v110
  %v549 = vunpack.c.h.b16 %v110
  %v550 = vunpack.c.l.b16 %v111
  %v551 = vunpack.c.h.b16 %v111
  %v552 = vunpack.c.l.b16 %v112
  %v553 = vunpack.c.h.b16 %v112
  %v554 = vunpack.c.l.b16 %v113
  %v555 = vunpack.c.h.b16 %v113
  %v556 = vunpack.c.l.b16 %v114
  %v557 = vunpack.c.h.b16 %v114
  %v558 = vunpack.c.l.b16 %v115
  %v559 = vunpack.c.h.b16 %v115
  %v560 = vunpack.c.l.b16 %v116
  %v561 = vunpack.c.h.b16 %v116
  %v562 = vunpack.c.l.b16 %v117
  %v563 = vunpack.c.h.b16 %v117
  %v564 = vunpack.c.l.b16 %v118
  %v565 = vunpack.c.h.b16 %v118
  %v566 = vunpack.c.l.b16 %v119
  %v567 = vunpack.c.h.b16 %v119
  %v568 = vunpack.c.l.b16 %v120
  %v569 = vunpack.c.h.b16 %v120
  %v570 = vunpack.c.l.b16 %v121
  %v571 = vunpack.c.h.b16 %v121
  %v572 = vunpack.c.l.b16 %v122
  %v573 = vunpack.c.h.b16 %v122
  %v574 = vunpack.c.l.b16 %v123
  %v575 = vunpack.c.h.b16 %v123
  %v576 = vunpack.c.l.b16 %v124
  %v577 = vunpack.c.h.b16 %v124
  %v578 = vunpack.c.l.b16 %v125
  %v579 = vunpack.c.h.b16 %v125
  %v580 = vunpack.c.l.b16 %v126
  %v581 = vunpack.c.h.b16 %v126
  %v582 = vunpack.c.l.b16 %v127
  %v583 = vunpack.c.h.b16 %v127
  %v584 = vunpack.c.l.b16 %v128
  %v585 = vunpack.c.h.b16 %v128
  %v586 = vunpack.c.l.b16 %v129
  %v587 = vunpack.c.h.b16 %v129
  %v588 = vunpack.c.l.b16 %v130
  %v589 = vunpack.c.h.b16 %v130
  %v590 = vunpack.c.l.b16 %v131
  %v591 = vunpack.c.h.b16 %v131
  %v592 = vunpack.c.l.b16 %v132
  %v593 = vunpack.c.h.b16 %v132
  %v594 = vunpack.c.l.b16 %v133
  %v595 = vunpack.c.h.b16 %v133
  %v596 = vunpack.c.l.b16 %v134
  %v597 = vunpack.c.h.b16 %v134
  %v598 = vunpack.c.l.b16 %v135
  %v599 = vunpack.c.h.b16 %v135
  %v600 = vunpack.c.l.b16 %v136
  %v601 = vunpack.c.h.b16 %v136
  %v602 = vunpack.c.l.b16 %v137
  %v603 = vunpack.c.h.b16 %v137
  %v604 = vunpack.c.l.b16 %v138
  %v605 = vunpack.c.h.b16 %v138
  %v606 = vunpack.c.l.b16 %v139
  %v607 = vunpack.c.h.b16 %v139
  %v608 = vunpack.c.l.b16 %v140
  %v609 = vunpack.c.h.b16 %v140
  %v610 = vunpack.c.l.b16 %v141
  %v611 = vunpack.c.h.b16 %v141
  %v612 = vunpack.c.l.b16 %v142
  %v613 = vunpack.c.h.b16 %v142
  %v614 = vunpack.c.l.b16 %v143
  %v615 = vunpack.c.h.b16 %v143
  %v616 = vunpack.c.l.b16 %v144
  %v617 = vunpack.c.h.b16 %v144
  %v618 = vunpack.c.l.b16 %v145
  %v619 = vunpack.c.h.b16 %v145
  %v620 = vunpack.c.l.b16 %v146
  %v621 = vunpack.c.h.b16 %v146
  %v622 = vunpack.c.l.b16 %v147
  %v623 = vunpack.c.h.b16 %v147
  %v624 = vunpack.c.l.b16 %v148
  %v625 = vunpack.c.h.b16 %v148
  %v626 = vunpack.c.l.b16 %v149
  %v627 = vunpack.c.h.b16 %v149
  %v628 = vunpack.c.l.b16 %v150
  %v629 = vunpack.c.h.b16 %v150
  %v630 = vunpack.c.l.b16 %v151
  %v631 = vunpack.c.h.b16 %v151
  %v632 = vunpack.c.l.b16 %v152
  %v633 = vunpack.c.h.b16 %v152
  %v634 = vunpack.c.l.b16 %v153
  %v635 = vunpack.c.h.b16 %v153
  %v636 = vunpack.c.l.b16 %v154
  %v637 = vunpack.c.h.b16 %v154
  %v638 = vunpack.c.l.b16 %v155
  %v639 = vunpack.c.h.b16 %v155
  %v640 = vunpack.c.l.b16 %v156
  %v641 = vunpack.c.h.b16 %v156
  %v642 = vunpack.c.l.b16 %v157
  %v643 = vunpack.c.h.b16 %v157
  %v644 = vunpack.c.l.b16 %v158
  %v645 = vunpack.c.h.b16 %v158
  %v646 = vunpack.c.l.b16 %v159
  %v647 = vunpack.c.h.b16 %v159
  %v648 = vunpack.c.l.b16 %v160
  %v649 = vunpack.c.h.b16 %v160
  %v650 = vunpack.c.l.b16 %v161
  %v651 = vunpack.c.h.b16 %v161
  %v652 = vunpack.c.l.b16 %v162
  %v653 = vunpack.c.h.b16 %v162
  %v654 = vunpack.c.l.b16 %v163
  %v655 = vunpack.c.h.b16 %v163
  %v656 = vunpack.c.l.b16 %v164
  %v657 = vunpack.c.h.b16 %v164
  %v658 = vunpack.c.l.b16 %v165
  %v659 = vunpack.c.h.b16 %v165
  %v660 = vunpack.c.l.b16 %v166
  %v661 = vunpack.c.h.b16 %v166
  %v662 = vunpack.c.l.b16 %v167
  %v663 = vunpack.c.h.b16 %v167
  %v664 = vunpack.c.l.b16 %v168
  %v665 = vunpack.c.h.b16 %v168
  %v666 = vunpack.c.l.b16 %v169
  %v667 = vunpack.c.h.b16 %v169
  %v668 = vunpack.c.l.b16 %v170
  %v669 = vunpack.c.h.b16 %v170
  %v670 = vunpack.c.l.b16 %v171
  %v671 = vunpack.c.h.b16 %v171
  %v672 = vunpack.c.l.b16 %v172
  %v673 = vunpack.c.h.b16 %v172
  %v674 = vunpack.c.l.b16 %v173
  %v675 = vunpack.c.h.b16 %v173
  %v676 = vunpack.c.l.b16 %v174
  %v677 = vunpack.c.h.b16 %v174
  %v678 = vunpack.c.l.b16 %v175
  %v679 = vunpack.c.h.b16 %v175
  %v680 = vunpack.c.l.b16 %v176
  %v681 = vunpack.c.h.b16 %v176
  %v682 = vunpack.c.l.b16 %v177
  %v683 = vunpack.c.h.b16 %v177
  %v684 = vunpack.c.l.b16 %v178
  %v685 = vunpack.c.h.b16 %v178
  %v686 = vunpack.c.l.b16 %v179
  %v687 = vunpack.c.h.b16 %v179
  %v688 = vunpack.c.l.b16 %v180
  %v689 = vunpack.c.h.b16 %v180
  %v690 = vunpack.c.l.b16 %v181
  %v691 = vunpack.c.h.b16 %v181
  %v692 = vunpack.c.l.b16 %v182
  %v693 = vunpack.c.h.b16 %v182
  %v694 = vunpack.c.l.b16 %v183
  %v695 = vunpack.c.h.b16 %v183
  %v696 = vunpack.c.l.b16 %v184
  %v697 = vunpack.c.h.b16 %v184
  %v698 = vunpack.c.l.b16 %v185
  %v699 = vunpack.c.h.b16 %v185
  %v700 = vunpack.c.l.b16 %v186
  %v701 = vunpack.c.h.b16 %v186
  %v702 = vunpack.c.l.b16 %v187
  %v703 = vunpack.c.h.b16 %v187
  %v704 = vunpack.c.l.b16 %v188
  %v705 = vunpack.c.h.b16 %v188
  %v706 = vunpack.c.l.b16 %v189
  %v707 = vunpack.c.h.b16 %v189
  %v708 = vunpack.c.l.b16 %v190
  %v709 = vunpack.c.h.b16 %v190
  %v710 = vunpack.c.l.b16 %v191
  %v711 = vunpack.c.h.b16 %v191
  %v712 = vunpack.c.l.b16 %v192
  %v713 = vunpack.c.h.b16 %v192
  %v714 = vunpack.c.l.b16 %v193
  %v715 = vunpack.c.h.b16 %v193
  %v716 = vunpack.c.l.b16 %v194
  %v717 = vunpack.c.h.b16 %v194
  %v718 = vunpack.c.l.b16 %v195
  %v719 = vunpack.c.h.b16 %v195
  %v720 = vunpack.c.l.b16 %v196
  %v721 = vunpack.c.h.b16 %v196
  %v722 = vunpack.c.l.b16 %v197
  %v723 = vunpack.c.h.b16 %v197
  %v724 = vunpack.c.l.b16 %v198
  %v725 = vunpack.c.h.b16 %v198
  %v726 = vunpack.c.l.b16 %v199
  %v727 = vunpack.c.h.b16 %v199
  %v728 = vunpack.c.l.b16 %v200
  %v729 = vunpack.c.h.b16 %v200
  %v730 = vunpack.c.l.b16 %v201
  %v731 = vunpack.c.h.b16 %v201
  %v732 = vunpack.c.l.b16 %v202
  %v733 = vunpack.c.h.b16 %v202
  %v734 = vunpack.c.l.b16 %v203
  %v735 = vunpack.c.h.b16 %v203
  %v736 = vunpack.c.l.b16 %v204
  %v737 = vunpack.c.h.b16 %v204
  %v738 = vunpack.c.l.b16 %v205
  %v739 = vunpack.c.h.b16 %v205
  %v740 = vunpack.c.l.b16 %v206
  %v741 = vunpack.c.h.b16 %v206
  %v742 = vunpack.c.l.b16 %v207
  %v743 = vunpack.c.h.b16 %v207
  %v744 = vunpack.c.l.b16 %v208
  %v745 = vunpack.c.h.b16 %v208
  %v746 = vunpack.c.l.b16 %v209
  %v747 = vunpack.c.h.b16 %v209
  %v748 = vunpack.c.l.b16 %v210
  %v749 = vunpack.c.h.b16 %v210
  %v750 = vunpack.c.l.b16 %v211
  %v751 = vunpack.c.h.b16 %v211
  %v752 = vunpack.c.l.b16 %v212
  %v753 = vunpack.c.h.b16 %v212
  %v754 = vunpack.c.l.b16 %v213
  %v755 = vunpack.c.h.b16 %v213
  %v756 = vunpack.c.l.b16 %v214
  %v757 = vunpack.c.h.b16 %v214
  %v758 = vunpack.c.l.b16 %v215
  %v759 = vunpack.c.h.b16 %v215
  %v760 = vunpack.c.l.b16 %v216
  %v761 = vunpack.c.h.b16 %v216
  %v762 = vunpack.c.l.b16 %v217
  %v763 = vunpack.c.h.b16 %v217
  %v764 = vunpack.c.l.b16 %v218
  %v765 = vunpack.c.h.b16 %v218
  %v766 = vunpack.c.l.b16 %v219
  %v767 = vunpack.c.h.b16 %v219
  %v768 = vunpack.c.l.b16 %v220
  %v769 = vunpack.c.h.b16 %v220
  %v770 = vunpack.c.l.b16 %v221
  %v771 = vunpack.c.h.b16 %v221
  %v772 = vunpack.c.l.b16 %v222
  %v773 = vunpack.c.h.b16 %v222
  %v774 = vunpack.c.l.b16 %v223
  %v775 = vunpack.c.h.b16 %v223
  %v776 = vunpack.c.l.b16 %v224
  %v777 = vunpack.c.h.b16 %v224
  %v778 = vunpack.c.l.b16 %v225
  %v779 = vunpack.c.h.b16 %v225
  %v780 = vunpack.c.l.b16 %v226
  %v781 = vunpack.c.h.b16 %v226
  %v782 = vunpack.c.l.b16 %v227
  %v783 = vunpack.c.h.b16 %v227
  %v784 = vunpack.c.l.b16 %v228
  %v785 = vunpack.c.h.b16 %v228
  %v786 = vunpack.c.l.b16 %v229
  %v787 = vunpack.c.h.b16 %v229
  %v788 = vunpack.c.l.b16 %v230
  %v789 = vunpack.c.h.b16 %v230
  %v790 = vunpack.c.l.b16 %v231
  %v791 = vunpack.c.h.b16 %v231
  %v792 = vunpack.c.l.b16 %v232
  %v793 = vunpack.c.h.b16 %v232
  %v794 = vunpack.c.l.b16 %v233
  %v795 = vunpack.c.h.b16 %v233
  %v796 = vunpack.c.l.b16 %v234
  %v797 = vunpack.c.h.b16 %v234
  %v798 = vunpack.c.l.b16 %v235
  %v799 = vunpack.c.h.b16 %v235
  %v800 = vunpack.c.l.b16 %v236
  %v801 = vunpack.c.h.b16 %v236
  %v802 = vunpack.c.l.b16 %v237
  %v803 = vunpack.c.h.b16 %v237
  %v804 = vunpack.c.l.b16 %v238
  %v805 = vunpack.c.h.b16 %v238
  %v806 = vunpack.c.l.b16 %v239
  %v807 = vunpack.c.h.b16 %v239
  %v808 = vunpack.c.l.b16 %v240
  %v809 = vunpack.c.h.b16 %v240
  %v810 = vunpack.c.l.b16 %v241
  %v811 = vunpack.c.h.b16 %v241
  %v812 = vunpack.c.l.b16 %v242
  %v813 = vunpack.c.h.b16 %v242
  %v814 = vunpack.c.l.b16 %v243
  %v815 = vunpack.c.h.b16 %v243
  %v816 = vunpack.c.l.b16 %v244
  %v817 = vunpack.c.h.b16 %v244
  %v818 = vunpack.c.l.b16 %v245
  %v819 = vunpack.c.h.b16 %v245
  %v820 = vunpack.c.l.b16 %v246
  %v821 = vunpack.c.h.b16 %v246
  %v822 = vunpack.c.l.b16 %v247
  %v823 = vunpack.c.h.b16 %v247
  %v824 = vunpack.c.l.b16 %v248
  %v825 = vunpack.c.h.b16 %v248
  %v826 = vunpack.c.l.b16 %v249
  %v827 = vunpack.c.h.b16 %v249
  %v828 = vunpack.c.l.b16 %v250
  %v829 = vunpack.c.h.b16 %v250
  %v830 = vunpack.c.l.b16 %v251
  %v831 = vunpack.c.h.b16 %v251
  %v832 = vunpack.c.l.b16 %v252
  %v833 = vunpack.c.h.b16 %v252
  %v834 = vunpack.c.l.b16 %v253
  %v835 = vunpack.c.h.b16 %v253
  %v836 = vunpack.c.l.b16 %v254
  %v837 = vunpack.c.h.b16 %v254
  %v838 = vunpack.c.l.b16 %v255
  %v839 = vunpack.c.h.b16 %v255
  %v840 = vunpack.c.l.b16 %v256
  %v841 = vunpack.c.h.b16 %v256
  %v842 = vunpack.c.l.b16 %v257
  %v843 = vunpack.c.h.b16 %v257
  %v844 = vunpack.c.l.b16 %v258
  %v845 = vunpack.c.h.b16 %v258
  %v846 = vunpack.c.l.b16 %v259
  %v847 = vunpack.c.h.b16 %v259
  %v848 = vunpack.c.l.b16 %v260
  %v849 = vunpack.c.h.b16 %v260
  %v850 = vunpack.c.l.b16 %v261
  %v851 = vunpack.c.h.b16 %v261
  %v852 = vunpack.c.l.b16 %v262
  %v853 = vunpack.c.h.b16 %v262
  %v854 = vunpack.c.l.b16 %v263
  %v855 = vunpack.c.h.b16 %v263
  %v856 = vunpack.c.l.b16 %v264
  %v857 = vunpack.c.h.b16 %v264
  %v858 = vunpack.c.l.b16 %v265
  %v859 = vunpack.c.h.b16 %v265
  %v860 = vunpack.c.l.b16 %v266
  %v861 = vunpack.c.h.b16 %v266
  %v862 = vunpack.c.l.b16 %v267
  %v863 = vunpack.c.h.b16 %v267
  %v864 = vunpack.c.l.b16 %v268
  %v865 = vunpack.c.h.b16 %v268
  %v866 = vunpack.c.l.b16 %v269
  %v867 = vunpack.c.h.b16 %v269
  %v868 = vunpack.c.l.b16 %v270
  %v869 = vunpack.c.h.b16 %v270
  %v870 = vunpack.c.l.b16 %v271
  %v871 = vunpack.c.h.b16 %v271
  %v872 = vunpack.c.l.b16 %v272
  %v873 = vunpack.c.h.b16 %v272
  %v874 = vunpack.c.l.b16 %v273
  %v875 = vunpack.c.h.b16 %v273
  %v876 = vunpack.c.l.b16 %v274
  %v877 = vunpack.c.h.b16 %v274
  %v878 = vunpack.c.l.b16 %v275
  %v879 = vunpack.c.h.b16 %v275
  %v880 = vunpack.c.l.b16 %v276
  %v881 = vunpack.c.h.b16 %v276
  %v882 = vunpack.c.l.b16 %v277
  %v883 = vunpack.c.h.b16 %v277
  %v884 = vunpack.c.l.b16 %v278
  %v885 = vunpack.c.h.b16 %v278
  %v886 = vunpack.c.l.b16 %v279
  %v887 = vunpack.c.h.b16 %v279
  %v888 = vunpack.c.l.b16 %v280
  %v889 = vunpack.c.h.b16 %v280
  %v890 = vpack.c.b16 %v502, %v498
  %v891 = vpack.c.b16 %v503, %v499
  %v892 = vpack.c.b16 %v504, %v500
  %v893 = vpack.c.b16 %v505, %v501
  %v894 = vpack.c.b16 %v510, %v506
  %v895 = vpack.c.b16 %v511, %v507
  %v896 = vpack.c.b16 %v512, %v508
  %v897 = vpack.c.b16 %v513, %v509
  %v898 = vpack.c.b16 %v518, %v514
  %v899 = vpack.c.b16 %v519, %v515
  %v900 = vpack.c.b16 %v520, %v516
  %v901 = vpack.c.b16 %v521, %v517
  %v902 = vpack.c.b16 %v526, %v522
  %v903 = vpack.c.b16 %v527, %v523
  %v904 = vpack.c.b16 %v528, %v524
  %v905 = vpack.c.b16 %v529, %v525
  %v906 = vpack.c.b16 %v534, %v530
  %v907 = vpack.c.b16 %v535, %v531
  %v908 = vpack.c.b16 %v536, %v532
  %v909 = vpack.c.b16 %v537, %v533
  %v910 = vpack.c.b16 %v542, %v538
  %v911 = vpack.c.b16 %v543, %v539
  %v912 = vpack.c.b16 %v544, %v540
  %v913 = vpack.c.b16 %v545, %v541
  %v914 = vpack.c.b16 %v550, %v546
  %v915 = vpack.c.b16 %v551, %v547
  %v916 = vpack.c.b16 %v552, %v548
  %v917 = vpack.c.b16 %v553, %v549
  %v918 = vpack.c.b16 %v558, %v554
  %v919 = vpack.c.b16 %v559, %v555
  %v920 = vpack.c.b16 %v560, %v556
  %v921 = vpack.c.b16 %v561, %v557
  %v922 = vpack.c.b16 %v566, %v562
  %v923 = vpack.c.b16 %v567, %v563
  %v924 = vpack.c.b16 %v568, %v564
  %v925 = vpack.c.b16 %v569, %v565
  %v926 = vpack.c.b16 %v574, %v570
  %v927 = vpack.c.b16 %v575, %v571
  %v928 = vpack.c.b16 %v576, %v572
  %v929 = vpack.c.b16 %v577, %v573
  %v930 = vpack.c.b16 %v582, %v578
  %v931 = vpack.c.b16 %v583, %v579
  %v932 = vpack.c.b16 %v584, %v580
  %v933 = vpack.c.b16 %v585, %v581
  %v934 = vpack.c.b16 %v590, %v586
  %v935 = vpack.c.b16 %v591, %v587
  %v936 = vpack.c.b16 %v592, %v588
  %v937 = vpack.c.b16 %v593, %v589
  %v938 = vpack.c.b16 %v598, %v594
  %v939 = vpack.c.b16 %v599, %v595
  %v940 = vpack.c.b16 %v600, %v596
  %v941 = vpack.c.b16 %v601, %v597
  %v942 = vpack.c.b16 %v606, %v602
  %v943 = vpack.c.b16 %v607, %v603
  %v944 = vpack.c.b16 %v608, %v604
  %v945 = vpack.c.b16 %v609, %v605
  %v946 = vpack.c.b16 %v614, %v610
  %v947 = vpack.c.b16 %v615, %v611
  %v948 = vpack.c.b16 %v616, %v612
  %v949 = vpack.c.b16 %v617, %v613
  %v950 = vpack.c.b16 %v622, %v618
  %v951 = vpack.c.b16 %v623, %v619
  %v952 = vpack.c.b16 %v624, %v620
  %v953 = vpack.c.b16 %v625, %v621
  %v954 = vpack.c.b16 %v630, %v626
  %v955 = vpack.c.b16 %v631, %v627
  %v956 = vpack.c.b16 %v632, %v628
  %v957 = vpack.c.b16 %v633, %v629
  %v958 = vpack.c.b16 %v638, %v634
  %v959 = vpack.c.b16 %v639, %v635
  %v960 = vpack.c.b16 %v640, %v636
  %v961 = vpack.c.b16 %v641, %v637
  %v962 = vpack.c.b16 %v646, %v642
  %v963 = vpack.c.b16 %v647, %v643
  %v964 = vpack.c.b16 %v648, %v644
  %v965 = vpack.c.b16 %v649, %v645
  %v966 = vpack.c.b16 %v654, %v650
  %v967 = vpack.c.b16 %v655, %v651
  %v968 = vpack.c.b16 %v656, %v652
  %v969 = vpack.c.b16 %v657, %v653
  %v970 = vpack.c.b16 %v662, %v658
  %v971 = vpack.c.b16 %v663, %v659
  %v972 = vpack.c.b16 %v664, %v660
  %v973 = vpack.c.b16 %v665, %v661
  %v974 = vpack.c.b16 %v670, %v666
  %v975 = vpack.c.b16 %v671, %v667
  %v976 = vpack.c.b16 %v672, %v668
  %v977 = vpack.c.b16 %v673, %v669
  %v978 = vpack.c.b16 %v678, %v674
  %v979 = vpack.c.b16 %v679, %v675
  %v980 = vpack.c.b16 %v680, %v676
  %v981 = vpack.c.b16 %v681, %v677
  %v982 = vpack.c.b16 %v686, %v682
  %v983 = vpack.c.b16 %v687, %v683
  %v984 = vpack.c.b16 %v688, %v684
  %v985 = vpack.c.b16 %v689, %v685
  %v986 = vpack.c.b16 %v694, %v690
  %v987 = vpack.c.b16 %v695, %v691
  %v988 = vpack.c.b16 %v696, %v692
  %v989 = vpack.c.b16 %v697, %v693
  %v990 = vpack.c.b16 %v702, %v698
  %v991 = vpack.c.b16 %v703, %v699
  %v992 = vpack.c.b16 %v704, %v700
  %v993 = vpack.c.b16 %v705, %v701
  %v994 = vpack.c.b16 %v710, %v706
  %v995 = vpack.c.b16 %v711, %v707
  %v996 = vpack.c.b16 %v712, %v708
  %v997 = vpack.c.b16 %v713, %v709
  %v998 = vpack.c.b16 %v718, %v714
  %v999 = vpack.c.b16 %v719, %v715
  %v1000 = vpack.c.b16 %v720, %v716
  %v1001 = vpack.c.b16 %v721, %v717
  %v1002 = vpack.c.b16 %v726, %v722
  %v1003 = vpack.c.b16 %v727, %v723
  %v1004 = vpack.c.b16 %v728, %v724
  %v1005 = vpack.c.b16 %v729, %v725
  %v1006 = vpack.c.b16 %v734, %v730
  %v1007 = vpack.c.b16 %v735, %v731
  %v1008 = vpack.c.b16 %v736, %v732
  %v1009 = vpack.c.b16 %v737, %v733
  %v1010 = vpack.c.b16 %v742, %v738
  %v1011 = vpack.c.b16 %v743, %v739
  %v1012 = vpack.c.b16 %v744, %v740
  %v1013 = vpack.c.b16 %v745, %v741
  %v1014 = vpack.c.b16 %v750, %v746
  %v1015 = vpack.c.b16 %v751, %v747
  %v1016 = vpack.c.b16 %v752, %v748
  %v1017 = vpack.c.b16 %v753, %v749
  %v1018 = vpack.c.b16 %v758, %v754
  %v1019 = vpack.c.b16 %v759, %v755
  %v1020 = vpack.c.b16 %v760, %v756
  %v1021 = vpack.c.b16 %v761, %v757
  %v1022 = vpack.c.b16 %v766, %v762
  %v1023 = vpack.c.b16 %v767, %v763
  %v1024 = vpack.c.b16 %v768, %v764
  %v1025 = vpack.c.b16 %v769, %v765
  %v1026 = vpack.c.b16 %v774, %v770
  %v1027 = vpack.c.b16 %v775, %v771
  %v1028 = vpack.c.b16 %v776, %v772
  %v1029 = vpack.c.b16 %v777, %v773
  %v1030 = vpack.c.b16 %v782, %v778
  %v1031 = vpack.c.b16 %v783, %v779
  %v1032 = vpack.c.b16 %v784, %v780
  %v1033 = vpack.c.b16 %v785, %v781
  %v1034 = vpack.c.b16 %v790, %v786
  %v1035 = vpack.c.b16 %v791, %v787
  %v1036 = vpack.c.b16 %v792, %v788
  %v1037 = vpack.c.b16 %v793, %v789
  %v1038 = vpack.c.b16 %v798, %v794
  %v1039 = vpack.c.b16 %v799, %v795
  %v1040 = vpack.c.b16 %v800, %v796
  %v1041 = vpack.c.b16 %v801, %v797
  %v1042 = vpack.c.b16 %v806, %v802
  %v1043 = vpack.c.b16 %v807, %v803
  %v1044 = vpack.c.b16 %v808, %v804
  %v1045 = vpack.c.b16 %v809, %v805
  %v1046 = vpack.c.b16 %v814, %v810
  %v1047 = vpack.c.b16 %v815, %v811
  %v1048 = vpack.c.b16 %v816, %v812
  %v1049 = vpack.c.b16 %v817, %v813
  %v1050 = vpack.c.b16 %v822, %v818
  %v1051 = vpack.c.b16 %v823, %v819
  %v1052 = vpack.c.b16 %v824, %v820
  %v1053 = vpack.c.b16 %v825, %v821
  %v1054 = vpack.c.b16 %v830, %v826
  %v1055 = vpack.c.b16 %v831, %v827
  %v1056 = vpack.c.b16 %v832, %v828
  %v1057 = vpack.c.b16 %v833, %v829
  %v1058 = vpack.c.b16 %v838, %v834
  %v1059 = vpack.c.b16 %v839, %v835
  %v1060 = vpack.c.b16 %v840, %v836
  %v1061 = vpack.c.b16 %v841, %v837
  %v1062 = vpack.c.b16 %v846, %v842
  %v1063 = vpack.c.b16 %v847, %v843
  %v1064 = vpack.c.b16 %v848, %v844
  %v1065 = vpack.c.b16 %v849, %v845
  %v1066 = vpack.c.b16 %v854, %v850
  %v1067 = vpack.c.b16 %v855, %v851
  %v1068 = vpack.c.b16 %v856, %v852
  %v1069 = vpack.c.b16 %v857, %v853
  %v1070 = vpack.c.b16 %v862, %v858
  %v1071 = vpack.c.b16 %v863, %v859
  %v1072 = vpack.c.b16 %v864, %v860
  %v1073 = vpack.c.b16 %v865, %v861
  %v1074 = vpack.c.b16 %v870, %v866
  %v1075 = vpack.c.b16 %v871, %v867
  %v1076 = vpack.c.b16 %v872, %v868
  %v1077 = vpack.c.b16 %v873, %v869
  %v1078 = vpack.c.b16 %v878, %v874
  %v1079 = vpack.c.b16 %v879, %v875
  %v1080 = vpack.c.b16 %v880, %v876
  %v1081 = vpack.c.b16 %v881, %v877
  %v1082 = vpack.c.b16 %v886, %v882
  %v1083 = vpack.c.b16 %v887, %v883
  %v1084 = vpack.c.b16 %v888, %v884
  %v1085 = vpack.c.b16 %v889, %v885
  %vm1282 = vcmask 130048
  %v1284 = vsel %vm1282, %v84, 0
  %1286 = vmatprep.subr.bf16.mxu0 %v891
  %1287 = vmatpush1.bf16.msra.mxu0 %v890
  %1288 = vmatprep.subr.bf16.mxu0 %v895
  %1289 = vmatpush1.bf16.msra.mxu0 %v894
  %1290 = vmatprep.subr.bf16.mxu0 %v899
  %1291 = vmatpush1.bf16.msra.mxu0 %v898
  %1292 = vmatprep.subr.bf16.mxu0 %v903
  %1293 = vmatpush1.bf16.msra.mxu0 %v902
  %1294 = vmatprep.subr.bf16.mxu0 %v907
  %1295 = vmatpush1.bf16.msra.mxu0 %v906
  %1296 = vmatprep.subr.bf16.mxu0 %v911
  %1297 = vmatpush1.bf16.msra.mxu0 %v910
  %1298 = vmatprep.subr.bf16.mxu0 %v915
  %1299 = vmatpush1.bf16.msra.mxu0 %v914
  %1300 = vmatprep.subr.bf16.mxu0 %v919
  %1301 = vmatpush1.bf16.msra.mxu0 %v918
  %1302 = vmatprep.subr.bf16.mxu0 %v923
  %1303 = vmatpush1.bf16.msra.mxu0 %v922
  %1304 = vmatprep.subr.bf16.mxu0 %v927
  %1305 = vmatpush1.bf16.msra.mxu0 %v926
  %1306 = vmatprep.subr.bf16.mxu0 %v931
  %1307 = vmatpush1.bf16.msra.mxu0 %v930
  %1308 = vmatprep.subr.bf16.mxu0 %v935
  %1309 = vmatpush1.bf16.msra.mxu0 %v934
  %1310 = vmatprep.subr.bf16.mxu0 %v939
  %1311 = vmatpush1.bf16.msra.mxu0 %v938
  %1312 = vmatprep.subr.bf16.mxu0 %v943
  %1313 = vmatpush1.bf16.msra.mxu0 %v942
  %1314 = vmatprep.subr.bf16.mxu0 %v947
  %1315 = vmatpush1.bf16.msra.mxu0 %v946
  %1316 = vmatprep.subr.bf16.mxu0 %v951
  %1317 = vmatpush1.bf16.msra.mxu0 %v950
  %1318 = vmatprep.mubr.bf16.mxu0 %v79
  %1319 = vmatmul.mubr.bf16.gmra.mrb[0].mxu0 %v78
  %v1320 = vpop.f32.mrb[0].mxu0
  %v1321 = vadd.f32 %v285, %v1320
  %v1322 = vpop.f32.mrb[0].mxu0
  %v1323 = vadd.f32 %v289, %v1322
  %v1324 = vpop.f32.mrb[0].mxu0
  %v1325 = vpop.f32.mrb[0].mxu0
  %1326 = vdwg.mxu0
  %1327 = vmatprep.subr.bf16.mxu0 %v955
  %1328 = vmatpush1.bf16.msra.mxu0 %v954
  %1329 = vmatprep.subr.bf16.mxu0 %v959
  %1330 = vmatpush1.bf16.msra.mxu0 %v958
  %1331 = vmatprep.subr.bf16.mxu0 %v963
  %1332 = vmatpush1.bf16.msra.mxu0 %v962
  %1333 = vmatprep.subr.bf16.mxu0 %v967
  %1334 = vmatpush1.bf16.msra.mxu0 %v966
  %1335 = vmatprep.subr.bf16.mxu0 %v971
  %1336 = vmatpush1.bf16.msra.mxu0 %v970
  %1337 = vmatprep.subr.bf16.mxu0 %v975
  %1338 = vmatpush1.bf16.msra.mxu0 %v974
  %1339 = vmatprep.subr.bf16.mxu0 %v979
  %1340 = vmatpush1.bf16.msra.mxu0 %v978
  %1341 = vmatprep.subr.bf16.mxu0 %v983
  %1342 = vmatpush1.bf16.msra.mxu0 %v982
  %1343 = vmatprep.subr.bf16.mxu0 %v987
  %1344 = vmatpush1.bf16.msra.mxu0 %v986
  %1345 = vmatprep.subr.bf16.mxu0 %v991
  %1346 = vmatpush1.bf16.msra.mxu0 %v990
  %1347 = vmatprep.subr.bf16.mxu0 %v995
  %1348 = vmatpush1.bf16.msra.mxu0 %v994
  %1349 = vmatprep.subr.bf16.mxu0 %v999
  %1350 = vmatpush1.bf16.msra.mxu0 %v998
  %1351 = vmatprep.subr.bf16.mxu0 %v1003
  %1352 = vmatpush1.bf16.msra.mxu0 %v1002
  %1353 = vmatprep.subr.bf16.mxu0 %v1007
  %1354 = vmatpush1.bf16.msra.mxu0 %v1006
  %1355 = vmatprep.subr.bf16.mxu0 %v1011
  %1356 = vmatpush1.bf16.msra.mxu0 %v1010
  %1357 = vmatprep.subr.bf16.mxu0 %v1015
  %1358 = vmatpush1.bf16.msra.mxu0 %v1014
  %1359 = vmatprep.mubr.bf16.mxu0 %v81
  %1360 = vmatmul.mubr.bf16.gmra.mrb[0].mxu0 %v80
  %v1361 = vpop.f32.mrb[0].mxu0
  %v1362 = vadd.f32 %v1321, %v1361
  %v1363 = vpop.f32.mrb[0].mxu0
  %v1364 = vadd.f32 %v1323, %v1363
  %v1365 = vpop.f32.mrb[0].mxu0
  %v1366 = vpop.f32.mrb[0].mxu0
  %1367 = vdwg.mxu0
  %1368 = vmatprep.subr.bf16.mxu0 %v1019
  %1369 = vmatpush1.bf16.msra.mxu0 %v1018
  %1370 = vmatprep.subr.bf16.mxu0 %v1023
  %1371 = vmatpush1.bf16.msra.mxu0 %v1022
  %1372 = vmatprep.subr.bf16.mxu0 %v1027
  %1373 = vmatpush1.bf16.msra.mxu0 %v1026
  %1374 = vmatprep.subr.bf16.mxu0 %v1031
  %1375 = vmatpush1.bf16.msra.mxu0 %v1030
  %1376 = vmatprep.subr.bf16.mxu0 %v1035
  %1377 = vmatpush1.bf16.msra.mxu0 %v1034
  %1378 = vmatprep.subr.bf16.mxu0 %v1039
  %1379 = vmatpush1.bf16.msra.mxu0 %v1038
  %1380 = vmatprep.subr.bf16.mxu0 %v1043
  %1381 = vmatpush1.bf16.msra.mxu0 %v1042
  %1382 = vmatprep.subr.bf16.mxu0 %v1047
  %1383 = vmatpush1.bf16.msra.mxu0 %v1046
  %1384 = vmatprep.subr.bf16.mxu0 %v1051
  %1385 = vmatpush1.bf16.msra.mxu0 %v1050
  %1386 = vmatprep.subr.bf16.mxu0 %v1055
  %1387 = vmatpush1.bf16.msra.mxu0 %v1054
  %1388 = vmatprep.subr.bf16.mxu0 %v1059
  %1389 = vmatpush1.bf16.msra.mxu0 %v1058
  %1390 = vmatprep.subr.bf16.mxu0 %v1063
  %1391 = vmatpush1.bf16.msra.mxu0 %v1062
  %1392 = vmatprep.subr.bf16.mxu0 %v1067
  %1393 = vmatpush1.bf16.msra.mxu0 %v1066
  %1394 = vmatprep.subr.bf16.mxu0 %v1071
  %1395 = vmatpush1.bf16.msra.mxu0 %v1070
  %1396 = vmatprep.subr.bf16.mxu0 %v1075
  %1397 = vmatpush1.bf16.msra.mxu0 %v1074
  %1398 = vmatprep.subr.bf16.mxu0 %v1079
  %1399 = vmatpush1.bf16.msra.mxu0 %v1078
  %1400 = vmatprep.mubr.bf16.mxu0 %v83
  %1401 = vmatmul.mubr.bf16.gmra.mrb[0].mxu0 %v82
  %v1402 = vpop.f32.mrb[0].mxu0
  %v1403 = vadd.f32 %v1362, %v1402
  %v1404 = vpop.f32.mrb[0].mxu0
  %v1405 = vadd.f32 %v1364, %v1404
  %v1406 = vpop.f32.mrb[0].mxu0
  %v1407 = vpop.f32.mrb[0].mxu0
  %1408 = vdwg.mxu0
  %1409 = vmatprep.subr.bf16.mxu0 %v1083
  %1410 = vmatpush1.bf16.msra.mxu0 %v1082
  %1411 = vmatprep.subr.bf16.mxu0 0
  %1412 = vmatpush1.bf16.msra.mxu0 0
  %1413 = vmatprep.subr.bf16.mxu0 0
  %1414 = vmatpush1.bf16.msra.mxu0 0
  %1415 = vmatprep.subr.bf16.mxu0 0
  %1416 = vmatpush1.bf16.msra.mxu0 0
  %1417 = vmatprep.subr.bf16.mxu0 0
  %1418 = vmatpush1.bf16.msra.mxu0 0
  %1419 = vmatprep.subr.bf16.mxu0 0
  %1420 = vmatpush1.bf16.msra.mxu0 0
  %1421 = vmatprep.subr.bf16.mxu0 0
  %1422 = vmatpush1.bf16.msra.mxu0 0
  %1423 = vmatprep.subr.bf16.mxu0 0
  %1424 = vmatpush1.bf16.msra.mxu0 0
  %1425 = vmatprep.subr.bf16.mxu0 0
  %1426 = vmatpush1.bf16.msra.mxu0 0
  %1427 = vmatprep.subr.bf16.mxu0 0
  %1428 = vmatpush1.bf16.msra.mxu0 0
  %1429 = vmatprep.subr.bf16.mxu0 0
  %1430 = vmatpush1.bf16.msra.mxu0 0
  %1431 = vmatprep.subr.bf16.mxu0 0
  %1432 = vmatpush1.bf16.msra.mxu0 0
  %1433 = vmatprep.subr.bf16.mxu0 0
  %1434 = vmatpush1.bf16.msra.mxu0 0
  %1435 = vmatprep.subr.bf16.mxu0 0
  %1436 = vmatpush1.bf16.msra.mxu0 0
  %1437 = vmatprep.subr.bf16.mxu0 0
  %1438 = vmatpush1.bf16.msra.mxu0 0
  %1439 = vmatprep.subr.bf16.mxu0 0
  %1440 = vmatpush1.bf16.msra.mxu0 0
  %1441 = vmatprep.mubr.bf16.mxu0 0
  %1442 = vmatmul.mubr.bf16.gmra.mrb[0].mxu0 %v1284
  %v1443 = vpop.f32.mrb[0].mxu0
  %v1444 = vadd.f32 %v1403, %v1443
  %v1445 = vpop.f32.mrb[0].mxu0
  %v1446 = vadd.f32 %v1405, %v1445
  %v1447 = vpop.f32.mrb[0].mxu0
  %v1448 = vpop.f32.mrb[0].mxu0
  %1449 = vdwg.mxu0
  %1450 = vmatprep.subr.bf16.mxu0 %v893
  %1451 = vmatpush1.bf16.msra.mxu0 %v892
  %1452 = vmatprep.subr.bf16.mxu0 %v897
  %1453 = vmatpush1.bf16.msra.mxu0 %v896
  %1454 = vmatprep.subr.bf16.mxu0 %v901
  %1455 = vmatpush1.bf16.msra.mxu0 %v900
  %1456 = vmatprep.subr.bf16.mxu0 %v905
  %1457 = vmatpush1.bf16.msra.mxu0 %v904
  %1458 = vmatprep.subr.bf16.mxu0 %v909
  %1459 = vmatpush1.bf16.msra.mxu0 %v908
  %1460 = vmatprep.subr.bf16.mxu0 %v913
  %1461 = vmatpush1.bf16.msra.mxu0 %v912
  %1462 = vmatprep.subr.bf16.mxu0 %v917
  %1463 = vmatpush1.bf16.msra.mxu0 %v916
  %1464 = vmatprep.subr.bf16.mxu0 %v921
  %1465 = vmatpush1.bf16.msra.mxu0 %v920
  %1466 = vmatprep.subr.bf16.mxu0 %v925
  %1467 = vmatpush1.bf16.msra.mxu0 %v924
  %1468 = vmatprep.subr.bf16.mxu0 %v929
  %1469 = vmatpush1.bf16.msra.mxu0 %v928
  %1470 = vmatprep.subr.bf16.mxu0 %v933
  %1471 = vmatpush1.bf16.msra.mxu0 %v932
  %1472 = vmatprep.subr.bf16.mxu0 %v937
  %1473 = vmatpush1.bf16.msra.mxu0 %v936
  %1474 = vmatprep.subr.bf16.mxu0 %v941
  %1475 = vmatpush1.bf16.msra.mxu0 %v940
  %1476 = vmatprep.subr.bf16.mxu0 %v945
  %1477 = vmatpush1.bf16.msra.mxu0 %v944
  %1478 = vmatprep.subr.bf16.mxu0 %v949
  %1479 = vmatpush1.bf16.msra.mxu0 %v948
  %1480 = vmatprep.subr.bf16.mxu0 %v953
  %1481 = vmatpush1.bf16.msra.mxu0 %v952
  %1482 = vmatprep.mubr.bf16.mxu0 %v79
  %1483 = vmatmul.mubr.bf16.gmra.mrb[0].mxu0 %v78
  %v1484 = vpop.f32.mrb[0].mxu0
  %v1485 = vadd.f32 %v293, %v1484
  %v1486 = vpop.f32.mrb[0].mxu0
  %v1487 = vadd.f32 %v297, %v1486
  %v1488 = vpop.f32.mrb[0].mxu0
  %v1489 = vpop.f32.mrb[0].mxu0
  %1490 = vdwg.mxu0
  %1491 = vmatprep.subr.bf16.mxu0 %v957
  %1492 = vmatpush1.bf16.msra.mxu0 %v956
  %1493 = vmatprep.subr.bf16.mxu0 %v961
  %1494 = vmatpush1.bf16.msra.mxu0 %v960
  %1495 = vmatprep.subr.bf16.mxu0 %v965
  %1496 = vmatpush1.bf16.msra.mxu0 %v964
  %1497 = vmatprep.subr.bf16.mxu0 %v969
  %1498 = vmatpush1.bf16.msra.mxu0 %v968
  %1499 = vmatprep.subr.bf16.mxu0 %v973
  %1500 = vmatpush1.bf16.msra.mxu0 %v972
  %1501 = vmatprep.subr.bf16.mxu0 %v977
  %1502 = vmatpush1.bf16.msra.mxu0 %v976
  %1503 = vmatprep.subr.bf16.mxu0 %v981
  %1504 = vmatpush1.bf16.msra.mxu0 %v980
  %1505 = vmatprep.subr.bf16.mxu0 %v985
  %1506 = vmatpush1.bf16.msra.mxu0 %v984
  %1507 = vmatprep.subr.bf16.mxu0 %v989
  %1508 = vmatpush1.bf16.msra.mxu0 %v988
  %1509 = vmatprep.subr.bf16.mxu0 %v993
  %1510 = vmatpush1.bf16.msra.mxu0 %v992
  %1511 = vmatprep.subr.bf16.mxu0 %v997
  %1512 = vmatpush1.bf16.msra.mxu0 %v996
  %1513 = vmatprep.subr.bf16.mxu0 %v1001
  %1514 = vmatpush1.bf16.msra.mxu0 %v1000
  %1515 = vmatprep.subr.bf16.mxu0 %v1005
  %1516 = vmatpush1.bf16.msra.mxu0 %v1004
  %1517 = vmatprep.subr.bf16.mxu0 %v1009
  %1518 = vmatpush1.bf16.msra.mxu0 %v1008
  %1519 = vmatprep.subr.bf16.mxu0 %v1013
  %1520 = vmatpush1.bf16.msra.mxu0 %v1012
  %1521 = vmatprep.subr.bf16.mxu0 %v1017
  %1522 = vmatpush1.bf16.msra.mxu0 %v1016
  %1523 = vmatprep.mubr.bf16.mxu0 %v81
  %1524 = vmatmul.mubr.bf16.gmra.mrb[0].mxu0 %v80
  %v1525 = vpop.f32.mrb[0].mxu0
  %v1526 = vadd.f32 %v1485, %v1525
  %v1527 = vpop.f32.mrb[0].mxu0
  %v1528 = vadd.f32 %v1487, %v1527
  %v1529 = vpop.f32.mrb[0].mxu0
  %v1530 = vpop.f32.mrb[0].mxu0
  %1531 = vdwg.mxu0
  %1532 = vmatprep.subr.bf16.mxu0 %v1021
  %1533 = vmatpush1.bf16.msra.mxu0 %v1020
  %1534 = vmatprep.subr.bf16.mxu0 %v1025
  %1535 = vmatpush1.bf16.msra.mxu0 %v1024
  %1536 = vmatprep.subr.bf16.mxu0 %v1029
  %1537 = vmatpush1.bf16.msra.mxu0 %v1028
  %1538 = vmatprep.subr.bf16.mxu0 %v1033
  %1539 = vmatpush1.bf16.msra.mxu0 %v1032
  %1540 = vmatprep.subr.bf16.mxu0 %v1037
  %1541 = vmatpush1.bf16.msra.mxu0 %v1036
  %1542 = vmatprep.subr.bf16.mxu0 %v1041
  %1543 = vmatpush1.bf16.msra.mxu0 %v1040
  %1544 = vmatprep.subr.bf16.mxu0 %v1045
  %1545 = vmatpush1.bf16.msra.mxu0 %v1044
  %1546 = vmatprep.subr.bf16.mxu0 %v1049
  %1547 = vmatpush1.bf16.msra.mxu0 %v1048
  %1548 = vmatprep.subr.bf16.mxu0 %v1053
  %1549 = vmatpush1.bf16.msra.mxu0 %v1052
  %1550 = vmatprep.subr.bf16.mxu0 %v1057
  %1551 = vmatpush1.bf16.msra.mxu0 %v1056
  %1552 = vmatprep.subr.bf16.mxu0 %v1061
  %1553 = vmatpush1.bf16.msra.mxu0 %v1060
  %1554 = vmatprep.subr.bf16.mxu0 %v1065
  %1555 = vmatpush1.bf16.msra.mxu0 %v1064
  %1556 = vmatprep.subr.bf16.mxu0 %v1069
  %1557 = vmatpush1.bf16.msra.mxu0 %v1068
  %1558 = vmatprep.subr.bf16.mxu0 %v1073
  %1559 = vmatpush1.bf16.msra.mxu0 %v1072
  %1560 = vmatprep.subr.bf16.mxu0 %v1077
  %1561 = vmatpush1.bf16.msra.mxu0 %v1076
  %1562 = vmatprep.subr.bf16.mxu0 %v1081
  %1563 = vmatpush1.bf16.msra.mxu0 %v1080
  %1564 = vmatprep.mubr.bf16.mxu0 %v83
  %1565 = vmatmul.mubr.bf16.gmra.mrb[0].mxu0 %v82
  %v1566 = vpop.f32.mrb[0].mxu0
  %v1567 = vadd.f32 %v1526, %v1566
  %v1568 = vpop.f32.mrb[0].mxu0
  %v1569 = vadd.f32 %v1528, %v1568
  %v1570 = vpop.f32.mrb[0].mxu0
  %v1571 = vpop.f32.mrb[0].mxu0
  %1572 = vdwg.mxu0
  %1573 = vmatprep.subr.bf16.mxu0 %v1085
  %1574 = vmatpush1.bf16.msra.mxu0 %v1084
  %1575 = vmatprep.subr.bf16.mxu0 0
  %1576 = vmatpush1.bf16.msra.mxu0 0
  %1577 = vmatprep.subr.bf16.mxu0 0
  %1578 = vmatpush1.bf16.msra.mxu0 0
  %1579 = vmatprep.subr.bf16.mxu0 0
  %1580 = vmatpush1.bf16.msra.mxu0 0
  %1581 = vmatprep.subr.bf16.mxu0 0
  %1582 = vmatpush1.bf16.msra.mxu0 0
  %1583 = vmatprep.subr.bf16.mxu0 0
  %1584 = vmatpush1.bf16.msra.mxu0 0
  %1585 = vmatprep.subr.bf16.mxu0 0
  %1586 = vmatpush1.bf16.msra.mxu0 0
  %1587 = vmatprep.subr.bf16.mxu0 0
  %1588 = vmatpush1.bf16.msra.mxu0 0
  %1589 = vmatprep.subr.bf16.mxu0 0
  %1590 = vmatpush1.bf16.msra.mxu0 0
  %1591 = vmatprep.subr.bf16.mxu0 0
  %1592 = vmatpush1.bf16.msra.mxu0 0
  %1593 = vmatprep.subr.bf16.mxu0 0
  %1594 = vmatpush1.bf16.msra.mxu0 0
  %1595 = vmatprep.subr.bf16.mxu0 0
  %1596 = vmatpush1.bf16.msra.mxu0 0
  %1597 = vmatprep.subr.bf16.mxu0 0
  %1598 = vmatpush1.bf16.msra.mxu0 0
  %1599 = vmatprep.subr.bf16.mxu0 0
  %1600 = vmatpush1.bf16.msra.mxu0 0
  %1601 = vmatprep.subr.bf16.mxu0 0
  %1602 = vmatpush1.bf16.msra.mxu0 0
  %1603 = vmatprep.subr.bf16.mxu0 0
  %1604 = vmatpush1.bf16.msra.mxu0 0
  %1605 = vmatprep.mubr.bf16.mxu0 0
  %1606 = vmatmul.mubr.bf16.gmra.mrb[0].mxu0 %v1284
  %v1607 = vpop.f32.mrb[0].mxu0
  %v1608 = vadd.f32 %v1567, %v1607
  %v1609 = vpop.f32.mrb[0].mxu0
  %v1610 = vadd.f32 %v1569, %v1609
  %v1611 = vpop.f32.mrb[0].mxu0
  %v1612 = vpop.f32.mrb[0].mxu0
  %1613 = vdwg.mxu0
  %v1614 = vmax.f32 %v1444, 0.0
  %v1615 = vmax.f32 %v1446, 0.0
  %v1616 = vmax.f32 %v1608, 0.0
  %v1617 = vmax.f32 %v1610, 0.0
  %v1618 = vpack.c.bf16 %v1614, %v1614
  %v1619 = vpack.c.bf16 %v1615, %v1615
  %v1620 = vpack.c.bf16 %v1616, %v1616
  %v1621 = vpack.c.bf16 %v1617, %v1617
  %v1622 = vld [vmem:[%s3] sm:$0xf]
  %v1623 = vld [vmem:[%s3 + $0x4] sm:$0xf]
  %v1624 = vld [vmem:[%s3 + $0x8] sm:$0xf]
  %v1625 = vld [vmem:[%s3 + $0xc] sm:$0xf]
  %v1626 = vld [vmem:[%s3 + $0x10] sm:$0xf]
  %v1627 = vld [vmem:[%s3 + $0x14] sm:$0xf]
  %v1628 = vld [vmem:[%s3 + $0x18] sm:$0xf]
  %v1629 = vld [vmem:[%s3 + $0x1c] sm:$0xf]
  %v1630 = vld [vmem:[%s3 + $0x20] sm:$0xf]
  %v1631 = vld [vmem:[%s3 + $0x24] sm:$0xf]
  %v1632 = vld [vmem:[%s3 + $0x28] sm:$0xf]
  %v1633 = vld [vmem:[%s3 + $0x2c] sm:$0xf]
  %v1634 = vld [vmem:[%s3 + $0x30] sm:$0xf]
  %v1635 = vld [vmem:[%s3 + $0x34] sm:$0xf]
  %v1636 = vld [vmem:[%s3 + $0x38] sm:$0xf]
  %v1637 = vld [vmem:[%s3 + $0x3c] sm:$0xf]
  %v1638 = vld [vmem:[%s3 + $0x40] sm:$0xf]
  %v1639 = vld [vmem:[%s3 + $0x44] sm:$0xf]
  %v1640 = vld [vmem:[%s3 + $0x48] sm:$0xf]
  %v1641 = vld [vmem:[%s3 + $0x4c] sm:$0xf]
  %v1642 = vld [vmem:[%s3 + $0x50] sm:$0xf]
  %v1643 = vld [vmem:[%s3 + $0x54] sm:$0xf]
  %v1644 = vld [vmem:[%s3 + $0x58] sm:$0xf]
  %v1645 = vld [vmem:[%s3 + $0x5c] sm:$0xf]
  %v1646 = vld [vmem:[%s3 + $0x60] sm:$0xf]
  %v1647 = vld [vmem:[%s3 + $0x64] sm:$0xf]
  %v1648 = vld [vmem:[%s3 + $0x68] sm:$0xf]
  %v1649 = vld [vmem:[%s3 + $0x6c] sm:$0xf]
  %v1650 = vld [vmem:[%s3 + $0x70] sm:$0xf]
  %v1651 = vld [vmem:[%s3 + $0x74] sm:$0xf]
  %v1652 = vld [vmem:[%s3 + $0x78] sm:$0xf]
  %v1653 = vld [vmem:[%s3 + $0x7c] sm:$0xf]
  %v1654 = vld [vmem:[%s3 + $0x80] sm:$0xf]
  %v1655 = vld [vmem:[%s3 + $0x84] sm:$0xf]
  %v1656 = vld [vmem:[%s3 + $0x88] sm:$0xf]
  %v1657 = vld [vmem:[%s3 + $0x8c] sm:$0xf]
  %v1658 = vld [vmem:[%s3 + $0x90] sm:$0xf]
  %v1659 = vld [vmem:[%s3 + $0x94] sm:$0xf]
  %v1660 = vld [vmem:[%s3 + $0x98] sm:$0xf]
  %v1661 = vld [vmem:[%s3 + $0x9c] sm:$0xf]
  %v1662 = vld [vmem:[%s3 + $0xa0] sm:$0xf]
  %v1663 = vld [vmem:[%s3 + $0xa4] sm:$0xf]
  %v1664 = vld [vmem:[%s3 + $0xa8] sm:$0xf]
  %v1665 = vld [vmem:[%s3 + $0xac] sm:$0xf]
  %v1666 = vld [vmem:[%s3 + $0xb0] sm:$0xf]
  %v1667 = vld [vmem:[%s3 + $0xb4] sm:$0xf]
  %v1668 = vld [vmem:[%s3 + $0xb8] sm:$0xf]
  %v1669 = vld [vmem:[%s3 + $0xbc] sm:$0xf]
  %v1670 = vld [vmem:[%s3 + $0xc0] sm:$0xf]
  %v1671 = vld [vmem:[%s3 + $0xc4] sm:$0xf]
  %v1672 = vld [vmem:[%s3 + $0xc8] sm:$0xf]
  %v1673 = vld [vmem:[%s3 + $0xcc] sm:$0xf]
  %v1674 = vld [vmem:[%s3 + $0xd0] sm:$0xf]
  %v1675 = vld [vmem:[%s3 + $0xd4] sm:$0xf]
  %v1676 = vld [vmem:[%s3 + $0xd8] sm:$0xf]
  %v1677 = vld [vmem:[%s3 + $0xdc] sm:$0xf]
  %v1678 = vld [vmem:[%s3 + $0xe0] sm:$0xf]
  %v1679 = vld [vmem:[%s3 + $0xe4] sm:$0xf]
  %v1680 = vld [vmem:[%s3 + $0xe8] sm:$0xf]
  %v1681 = vld [vmem:[%s3 + $0xec] sm:$0xf]
  %v1682 = vld [vmem:[%s3 + $0xf0] sm:$0xf]
  %v1683 = vld [vmem:[%s3 + $0xf4] sm:$0xf]
  %v1684 = vld [vmem:[%s3 + $0xf8] sm:$0xf]
  %v1685 = vld [vmem:[%s3 + $0xfc] sm:$0xf]
  %v1687 = vlaneseq
  %v1688 = vshrl.u32 %v1687, 7
  %v1689 = vsub.s32 0, %v1688
  %v1690 = vrot.slane %v31, %v1689
  %v1756 = vunpack.c.l.b16 %v1622
  %v1757 = vunpack.c.l.b16 %v1623
  %v1758 = vunpack.c.l.b16 %v1624
  %v1759 = vunpack.c.l.b16 %v1625
  %v1760 = vunpack.c.l.b16 %v1626
  %v1761 = vunpack.c.l.b16 %v1627
  %v1762 = vunpack.c.l.b16 %v1628
  %v1763 = vunpack.c.l.b16 %v1629
  %v1764 = vunpack.c.l.b16 %v1630
  %v1765 = vunpack.c.l.b16 %v1631
  %v1766 = vunpack.c.l.b16 %v1632
  %v1767 = vunpack.c.l.b16 %v1633
  %v1768 = vunpack.c.l.b16 %v1634
  %v1769 = vunpack.c.l.b16 %v1635
  %v1770 = vunpack.c.l.b16 %v1636
  %v1771 = vunpack.c.l.b16 %v1637
  %v1772 = vunpack.c.l.b16 %v1638
  %v1773 = vunpack.c.l.b16 %v1639
  %v1774 = vunpack.c.l.b16 %v1640
  %v1775 = vunpack.c.l.b16 %v1641
  %v1776 = vunpack.c.l.b16 %v1642
  %v1777 = vunpack.c.l.b16 %v1643
  %v1778 = vunpack.c.l.b16 %v1644
  %v1779 = vunpack.c.l.b16 %v1645
  %v1780 = vunpack.c.l.b16 %v1646
  %v1781 = vunpack.c.l.b16 %v1647
  %v1782 = vunpack.c.l.b16 %v1648
  %v1783 = vunpack.c.l.b16 %v1649
  %v1784 = vunpack.c.l.b16 %v1650
  %v1785 = vunpack.c.l.b16 %v1651
  %v1786 = vunpack.c.l.b16 %v1652
  %v1787 = vunpack.c.l.b16 %v1653
  %v1788 = vunpack.c.l.b16 %v1654
  %v1789 = vunpack.c.l.b16 %v1655
  %v1790 = vunpack.c.l.b16 %v1656
  %v1791 = vunpack.c.l.b16 %v1657
  %v1792 = vunpack.c.l.b16 %v1658
  %v1793 = vunpack.c.l.b16 %v1659
  %v1794 = vunpack.c.l.b16 %v1660
  %v1795 = vunpack.c.l.b16 %v1661
  %v1796 = vunpack.c.l.b16 %v1662
  %v1797 = vunpack.c.l.b16 %v1663
  %v1798 = vunpack.c.l.b16 %v1664
  %v1799 = vunpack.c.l.b16 %v1665
  %v1800 = vunpack.c.l.b16 %v1666
  %v1801 = vunpack.c.l.b16 %v1667
  %v1802 = vunpack.c.l.b16 %v1668
  %v1803 = vunpack.c.l.b16 %v1669
  %v1804 = vunpack.c.l.b16 %v1670
  %v1805 = vunpack.c.l.b16 %v1671
  %v1806 = vunpack.c.l.b16 %v1672
  %v1807 = vunpack.c.l.b16 %v1673
  %v1808 = vunpack.c.l.b16 %v1674
  %v1809 = vunpack.c.l.b16 %v1675
  %v1810 = vunpack.c.l.b16 %v1676
  %v1811 = vunpack.c.l.b16 %v1677
  %v1812 = vunpack.c.l.b16 %v1678
  %v1813 = vunpack.c.l.b16 %v1679
  %v1814 = vunpack.c.l.b16 %v1680
  %v1815 = vunpack.c.l.b16 %v1681
  %v1816 = vunpack.c.l.b16 %v1682
  %v1817 = vunpack.c.l.b16 %v1683
  %v1818 = vunpack.c.l.b16 %v1684
  %v1819 = vunpack.c.l.b16 %v1685
  %v1820 = vpack.c.b16 %v1757, %v1756
  %v1821 = vpack.c.b16 %v1759, %v1758
  %v1822 = vpack.c.b16 %v1761, %v1760
  %v1823 = vpack.c.b16 %v1763, %v1762
  %v1824 = vpack.c.b16 %v1765, %v1764
  %v1825 = vpack.c.b16 %v1767, %v1766
  %v1826 = vpack.c.b16 %v1769, %v1768
  %v1827 = vpack.c.b16 %v1771, %v1770
  %v1828 = vpack.c.b16 %v1773, %v1772
  %v1829 = vpack.c.b16 %v1775, %v1774
  %v1830 = vpack.c.b16 %v1777, %v1776
  %v1831 = vpack.c.b16 %v1779, %v1778
  %v1832 = vpack.c.b16 %v1781, %v1780
  %v1833 = vpack.c.b16 %v1783, %v1782
  %v1834 = vpack.c.b16 %v1785, %v1784
  %v1835 = vpack.c.b16 %v1787, %v1786
  %v1836 = vpack.c.b16 %v1789, %v1788
  %v1837 = vpack.c.b16 %v1791, %v1790
  %v1838 = vpack.c.b16 %v1793, %v1792
  %v1839 = vpack.c.b16 %v1795, %v1794
  %v1840 = vpack.c.b16 %v1797, %v1796
  %v1841 = vpack.c.b16 %v1799, %v1798
  %v1842 = vpack.c.b16 %v1801, %v1800
  %v1843 = vpack.c.b16 %v1803, %v1802
  %v1844 = vpack.c.b16 %v1805, %v1804
  %v1845 = vpack.c.b16 %v1807, %v1806
  %v1846 = vpack.c.b16 %v1809, %v1808
  %v1847 = vpack.c.b16 %v1811, %v1810
  %v1848 = vpack.c.b16 %v1813, %v1812
  %v1849 = vpack.c.b16 %v1815, %v1814
  %v1850 = vpack.c.b16 %v1817, %v1816
  %v1851 = vpack.c.b16 %v1819, %v1818
  %1884 = vmatprep.subr.bf16.mxu0 0
  %1885 = vmatpush1.bf16.msra.mxu0 %v1820
  %1886 = vmatprep.subr.bf16.mxu0 0
  %1887 = vmatpush1.bf16.msra.mxu0 %v1821
  %1888 = vmatprep.subr.bf16.mxu0 0
  %1889 = vmatpush1.bf16.msra.mxu0 %v1822
  %1890 = vmatprep.subr.bf16.mxu0 0
  %1891 = vmatpush1.bf16.msra.mxu0 %v1823
  %1892 = vmatprep.subr.bf16.mxu0 0
  %1893 = vmatpush1.bf16.msra.mxu0 %v1824
  %1894 = vmatprep.subr.bf16.mxu0 0
  %1895 = vmatpush1.bf16.msra.mxu0 %v1825
  %1896 = vmatprep.subr.bf16.mxu0 0
  %1897 = vmatpush1.bf16.msra.mxu0 %v1826
  %1898 = vmatprep.subr.bf16.mxu0 0
  %1899 = vmatpush1.bf16.msra.mxu0 %v1827
  %1900 = vmatprep.subr.bf16.mxu0 0
  %1901 = vmatpush1.bf16.msra.mxu0 %v1828
  %1902 = vmatprep.subr.bf16.mxu0 0
  %1903 = vmatpush1.bf16.msra.mxu0 %v1829
  %1904 = vmatprep.subr.bf16.mxu0 0
  %1905 = vmatpush1.bf16.msra.mxu0 %v1830
  %1906 = vmatprep.subr.bf16.mxu0 0
  %1907 = vmatpush1.bf16.msra.mxu0 %v1831
  %1908 = vmatprep.subr.bf16.mxu0 0
  %1909 = vmatpush1.bf16.msra.mxu0 %v1832
  %1910 = vmatprep.subr.bf16.mxu0 0
  %1911 = vmatpush1.bf16.msra.mxu0 %v1833
  %1912 = vmatprep.subr.bf16.mxu0 0
  %1913 = vmatpush1.bf16.msra.mxu0 %v1834
  %1914 = vmatprep.subr.bf16.mxu0 0
  %1915 = vmatpush1.bf16.msra.mxu0 %v1835
  %1916 = vmatprep.mubr.bf16.mxu0 %v1619
  %1917 = vmatmul.mubr.bf16.gmra.mrb[0].mxu0 %v1618
  %v1918 = vpop.f32.mrb[0].mxu0
  %v1919 = vadd.f32 %v1690, %v1918
  %v1920 = vpop.f32.mrb[0].mxu0
  %v1921 = vpop.f32.mrb[0].mxu0
  %v1922 = vpop.f32.mrb[0].mxu0
  %1923 = vdwg.mxu0
  %1924 = vmatprep.subr.bf16.mxu0 0
  %1925 = vmatpush1.bf16.msra.mxu0 %v1836
  %1926 = vmatprep.subr.bf16.mxu0 0
  %1927 = vmatpush1.bf16.msra.mxu0 %v1837
  %1928 = vmatprep.subr.bf16.mxu0 0
  %1929 = vmatpush1.bf16.msra.mxu0 %v1838
  %1930 = vmatprep.subr.bf16.mxu0 0
  %1931 = vmatpush1.bf16.msra.mxu0 %v1839
  %1932 = vmatprep.subr.bf16.mxu0 0
  %1933 = vmatpush1.bf16.msra.mxu0 %v1840
  %1934 = vmatprep.subr.bf16.mxu0 0
  %1935 = vmatpush1.bf16.msra.mxu0 %v1841
  %1936 = vmatprep.subr.bf16.mxu0 0
  %1937 = vmatpush1.bf16.msra.mxu0 %v1842
  %1938 = vmatprep.subr.bf16.mxu0 0
  %1939 = vmatpush1.bf16.msra.mxu0 %v1843
  %1940 = vmatprep.subr.bf16.mxu0 0
  %1941 = vmatpush1.bf16.msra.mxu0 %v1844
  %1942 = vmatprep.subr.bf16.mxu0 0
  %1943 = vmatpush1.bf16.msra.mxu0 %v1845
  %1944 = vmatprep.subr.bf16.mxu0 0
  %1945 = vmatpush1.bf16.msra.mxu0 %v1846
  %1946 = vmatprep.subr.bf16.mxu0 0
  %1947 = vmatpush1.bf16.msra.mxu0 %v1847
  %1948 = vmatprep.subr.bf16.mxu0 0
  %1949 = vmatpush1.bf16.msra.mxu0 %v1848
  %1950 = vmatprep.subr.bf16.mxu0 0
  %1951 = vmatpush1.bf16.msra.mxu0 %v1849
  %1952 = vmatprep.subr.bf16.mxu0 0
  %1953 = vmatpush1.bf16.msra.mxu0 %v1850
  %1954 = vmatprep.subr.bf16.mxu0 0
  %1955 = vmatpush1.bf16.msra.mxu0 %v1851
  %1956 = vmatprep.mubr.bf16.mxu0 %v1621
  %1957 = vmatmul.mubr.bf16.gmra.mrb[0].mxu0 %v1620
  %v1958 = vpop.f32.mrb[0].mxu0
  %v1959 = vadd.f32 %v1919, %v1958
  %v1960 = vpop.f32.mrb[0].mxu0
  %v1961 = vpop.f32.mrb[0].mxu0
  %v1962 = vpop.f32.mrb[0].mxu0
  %1963 = vdwg.mxu0
  %v1964 = vmul.f32 %v1959, 0.5
  %v1965 = vmul.f32 %v1964, 1.442695
  %v1966 = vpow.pop %v1965
  %v1967 = vld [vmem:[%s1] sm:$0x3]
  %1969 = vrot.lane.b32.xlu0 %v1967, 64
  %v1970 = vpop.permute.xlu0 %1969
  %v1972 = vmul.f32 %v1966, %v1970
  %1974 = vrot.lane.b32.xlu0 %v1972, 64
  %v1975 = vpop.permute.xlu0 %1974
  %v1977 = vadd.f32 %v1959, %v1975
  %v1978 = vpack.c.bf16 %v1977, %v1977
  %v1979 = vld [vmem:[%s4] sm:$0xff]
  %v1980 = vld [vmem:[%s4 + $0x8] sm:$0xff]
  %v1981 = vld [vmem:[%s4 + $0x10] sm:$0xff]
  %v1982 = vld [vmem:[%s4 + $0x18] sm:$0xff]
  %v1983 = vld [vmem:[%s4 + $0x20] sm:$0xff]
  %v1984 = vld [vmem:[%s4 + $0x28] sm:$0xff]
  %v1985 = vld [vmem:[%s4 + $0x30] sm:$0xff]
  %v1986 = vld [vmem:[%s4 + $0x38] sm:$0xff]
  %v1987 = vld [vmem:[%s4 + $0x40] sm:$0xff]
  %v1988 = vld [vmem:[%s4 + $0x48] sm:$0xff]
  %v1989 = vld [vmem:[%s4 + $0x50] sm:$0xff]
  %v1990 = vld [vmem:[%s4 + $0x58] sm:$0xff]
  %v1991 = vld [vmem:[%s4 + $0x60] sm:$0xff]
  %v1992 = vld [vmem:[%s4 + $0x68] sm:$0xff]
  %v1993 = vld [vmem:[%s4 + $0x70] sm:$0xff]
  %v1994 = vld [vmem:[%s4 + $0x78] sm:$0xff]
  %v1996 = vlaneseq
  %v1997 = vshrl.u32 %v1996, 7
  %v1998 = vsub.s32 0, %v1997
  %v1999 = vrot.slane %v32, %v1998
  %v2000 = vlaneseq
  %v2001 = vshrl.u32 %v2000, 7
  %v2002 = vsub.s32 1, %v2001
  %v2003 = vrot.slane %v32, %v2002
  %v2004 = vlaneseq
  %v2005 = vshrl.u32 %v2004, 7
  %v2006 = vsub.s32 2, %v2005
  %v2007 = vrot.slane %v32, %v2006
  %v2008 = vlaneseq
  %v2009 = vshrl.u32 %v2008, 7
  %v2010 = vsub.s32 3, %v2009
  %v2011 = vrot.slane %v32, %v2010
  %v2032 = vunpack.c.l.b16 %v1979
  %v2033 = vunpack.c.h.b16 %v1979
  %v2034 = vunpack.c.l.b16 %v1980
  %v2035 = vunpack.c.h.b16 %v1980
  %v2036 = vunpack.c.l.b16 %v1981
  %v2037 = vunpack.c.h.b16 %v1981
  %v2038 = vunpack.c.l.b16 %v1982
  %v2039 = vunpack.c.h.b16 %v1982
  %v2040 = vunpack.c.l.b16 %v1983
  %v2041 = vunpack.c.h.b16 %v1983
  %v2042 = vunpack.c.l.b16 %v1984
  %v2043 = vunpack.c.h.b16 %v1984
  %v2044 = vunpack.c.l.b16 %v1985
  %v2045 = vunpack.c.h.b16 %v1985
  %v2046 = vunpack.c.l.b16 %v1986
  %v2047 = vunpack.c.h.b16 %v1986
  %v2048 = vunpack.c.l.b16 %v1987
  %v2049 = vunpack.c.h.b16 %v1987
  %v2050 = vunpack.c.l.b16 %v1988
  %v2051 = vunpack.c.h.b16 %v1988
  %v2052 = vunpack.c.l.b16 %v1989
  %v2053 = vunpack.c.h.b16 %v1989
  %v2054 = vunpack.c.l.b16 %v1990
  %v2055 = vunpack.c.h.b16 %v1990
  %v2056 = vunpack.c.l.b16 %v1991
  %v2057 = vunpack.c.h.b16 %v1991
  %v2058 = vunpack.c.l.b16 %v1992
  %v2059 = vunpack.c.h.b16 %v1992
  %v2060 = vunpack.c.l.b16 %v1993
  %v2061 = vunpack.c.h.b16 %v1993
  %v2062 = vunpack.c.l.b16 %v1994
  %v2063 = vunpack.c.h.b16 %v1994
  %v2064 = vpack.c.b16 %v2036, %v2032
  %v2065 = vpack.c.b16 %v2037, %v2033
  %v2066 = vpack.c.b16 %v2038, %v2034
  %v2067 = vpack.c.b16 %v2039, %v2035
  %v2068 = vpack.c.b16 %v2044, %v2040
  %v2069 = vpack.c.b16 %v2045, %v2041
  %v2070 = vpack.c.b16 %v2046, %v2042
  %v2071 = vpack.c.b16 %v2047, %v2043
  %v2072 = vpack.c.b16 %v2052, %v2048
  %v2073 = vpack.c.b16 %v2053, %v2049
  %v2074 = vpack.c.b16 %v2054, %v2050
  %v2075 = vpack.c.b16 %v2055, %v2051
  %v2076 = vpack.c.b16 %v2060, %v2056
  %v2077 = vpack.c.b16 %v2061, %v2057
  %v2078 = vpack.c.b16 %v2062, %v2058
  %v2079 = vpack.c.b16 %v2063, %v2059
  %vm2096 = vcmask 523264
  %v2098 = vsel %vm2096, %v1978, 0
  %2100 = vmatprep.subr.bf16.mxu0 %v2065
  %2101 = vmatpush1.bf16.msra.mxu0 %v2064
  %2102 = vmatprep.subr.bf16.mxu0 %v2069
  %2103 = vmatpush1.bf16.msra.mxu0 %v2068
  %2104 = vmatprep.subr.bf16.mxu0 %v2073
  %2105 = vmatpush1.bf16.msra.mxu0 %v2072
  %2106 = vmatprep.subr.bf16.mxu0 %v2077
  %2107 = vmatpush1.bf16.msra.mxu0 %v2076
  %2108 = vmatprep.subr.bf16.mxu0 0
  %2109 = vmatpush1.bf16.msra.mxu0 0
  %2110 = vmatprep.subr.bf16.mxu0 0
  %2111 = vmatpush1.bf16.msra.mxu0 0
  %2112 = vmatprep.subr.bf16.mxu0 0
  %2113 = vmatpush1.bf16.msra.mxu0 0
  %2114 = vmatprep.subr.bf16.mxu0 0
  %2115 = vmatpush1.bf16.msra.mxu0 0
  %2116 = vmatprep.subr.bf16.mxu0 0
  %2117 = vmatpush1.bf16.msra.mxu0 0
  %2118 = vmatprep.subr.bf16.mxu0 0
  %2119 = vmatpush1.bf16.msra.mxu0 0
  %2120 = vmatprep.subr.bf16.mxu0 0
  %2121 = vmatpush1.bf16.msra.mxu0 0
  %2122 = vmatprep.subr.bf16.mxu0 0
  %2123 = vmatpush1.bf16.msra.mxu0 0
  %2124 = vmatprep.subr.bf16.mxu0 0
  %2125 = vmatpush1.bf16.msra.mxu0 0
  %2126 = vmatprep.subr.bf16.mxu0 0
  %2127 = vmatpush1.bf16.msra.mxu0 0
  %2128 = vmatprep.subr.bf16.mxu0 0
  %2129 = vmatpush1.bf16.msra.mxu0 0
  %2130 = vmatprep.subr.bf16.mxu0 0
  %2131 = vmatpush1.bf16.msra.mxu0 0
  %2132 = vmatprep.mubr.bf16.mxu0 0
  %2133 = vmatmul.mubr.bf16.gmra.mrb[0].mxu0 %v2098
  %v2134 = vpop.f32.mrb[0].mxu0
  %v2135 = vadd.f32 %v1999, %v2134
  %v2136 = vpop.f32.mrb[0].mxu0
  %v2137 = vadd.f32 %v2003, %v2136
  %v2138 = vpop.f32.mrb[0].mxu0
  %v2139 = vpop.f32.mrb[0].mxu0
  %2140 = vdwg.mxu0
  %2141 = vmatprep.subr.bf16.mxu0 %v2067
  %2142 = vmatpush1.bf16.msra.mxu0 %v2066
  %2143 = vmatprep.subr.bf16.mxu0 %v2071
  %2144 = vmatpush1.bf16.msra.mxu0 %v2070
  %2145 = vmatprep.subr.bf16.mxu0 %v2075
  %2146 = vmatpush1.bf16.msra.mxu0 %v2074
  %2147 = vmatprep.subr.bf16.mxu0 %v2079
  %2148 = vmatpush1.bf16.msra.mxu0 %v2078
  %2149 = vmatprep.subr.bf16.mxu0 0
  %2150 = vmatpush1.bf16.msra.mxu0 0
  %2151 = vmatprep.subr.bf16.mxu0 0
  %2152 = vmatpush1.bf16.msra.mxu0 0
  %2153 = vmatprep.subr.bf16.mxu0 0
  %2154 = vmatpush1.bf16.msra.mxu0 0
  %2155 = vmatprep.subr.bf16.mxu0 0
  %2156 = vmatpush1.bf16.msra.mxu0 0
  %2157 = vmatprep.subr.bf16.mxu0 0
  %2158 = vmatpush1.bf16.msra.mxu0 0
  %2159 = vmatprep.subr.bf16.mxu0 0
  %2160 = vmatpush1.bf16.msra.mxu0 0
  %2161 = vmatprep.subr.bf16.mxu0 0
  %2162 = vmatpush1.bf16.msra.mxu0 0
  %2163 = vmatprep.subr.bf16.mxu0 0
  %2164 = vmatpush1.bf16.msra.mxu0 0
  %2165 = vmatprep.subr.bf16.mxu0 0
  %2166 = vmatpush1.bf16.msra.mxu0 0
  %2167 = vmatprep.subr.bf16.mxu0 0
  %2168 = vmatpush1.bf16.msra.mxu0 0
  %2169 = vmatprep.subr.bf16.mxu0 0
  %2170 = vmatpush1.bf16.msra.mxu0 0
  %2171 = vmatprep.subr.bf16.mxu0 0
  %2172 = vmatpush1.bf16.msra.mxu0 0
  %2173 = vmatprep.mubr.bf16.mxu0 0
  %2174 = vmatmul.mubr.bf16.gmra.mrb[0].mxu0 %v2098
  %v2175 = vpop.f32.mrb[0].mxu0
  %v2176 = vadd.f32 %v2007, %v2175
  %v2177 = vpop.f32.mrb[0].mxu0
  %v2178 = vadd.f32 %v2011, %v2177
  %v2179 = vpop.f32.mrb[0].mxu0
  %v2180 = vpop.f32.mrb[0].mxu0
  %2181 = vdwg.mxu0
  %v2182 = vmax.f32 %v2135, 0.0
  %v2183 = vmax.f32 %v2137, 0.0
  %v2184 = vmax.f32 %v2176, 0.0
  %v2185 = vmax.f32 %v2178, 0.0
  %v2186 = vpack.c.bf16 %v2182, %v2182
  %v2187 = vpack.c.bf16 %v2183, %v2183
  %v2188 = vpack.c.bf16 %v2184, %v2184
  %v2189 = vpack.c.bf16 %v2185, %v2185
  %v2190 = vld [vmem:[%s5] sm:$0xff]
  %v2191 = vld [vmem:[%s5 + $0x8] sm:$0xff]
  %v2192 = vld [vmem:[%s5 + $0x10] sm:$0xff]
  %v2193 = vld [vmem:[%s5 + $0x18] sm:$0xf]
  %v2194 = vld [vmem:[%s5 + $0x1c] sm:$0xff]
  %v2195 = vld [vmem:[%s5 + $0x24] sm:$0xff]
  %v2196 = vld [vmem:[%s5 + $0x2c] sm:$0xff]
  %v2197 = vld [vmem:[%s5 + $0x34] sm:$0xf]
  %v2198 = vld [vmem:[%s5 + $0x38] sm:$0xff]
  %v2199 = vld [vmem:[%s5 + $0x40] sm:$0xff]
  %v2200 = vld [vmem:[%s5 + $0x48] sm:$0xff]
  %v2201 = vld [vmem:[%s5 + $0x50] sm:$0xf]
  %v2202 = vld [vmem:[%s5 + $0x54] sm:$0xff]
  %v2203 = vld [vmem:[%s5 + $0x5c] sm:$0xff]
  %v2204 = vld [vmem:[%s5 + $0x64] sm:$0xff]
  %v2205 = vld [vmem:[%s5 + $0x6c] sm:$0xf]
  %v2206 = vld [vmem:[%s5 + $0x70] sm:$0xff]
  %v2207 = vld [vmem:[%s5 + $0x78] sm:$0xff]
  %v2208 = vld [vmem:[%s5 + $0x80] sm:$0xff]
  %v2209 = vld [vmem:[%s5 + $0x88] sm:$0xf]
  %v2210 = vld [vmem:[%s5 + $0x8c] sm:$0xff]
  %v2211 = vld [vmem:[%s5 + $0x94] sm:$0xff]
  %v2212 = vld [vmem:[%s5 + $0x9c] sm:$0xff]
  %v2213 = vld [vmem:[%s5 + $0xa4] sm:$0xf]
  %v2214 = vld [vmem:[%s5 + $0xa8] sm:$0xff]
  %v2215 = vld [vmem:[%s5 + $0xb0] sm:$0xff]
  %v2216 = vld [vmem:[%s5 + $0xb8] sm:$0xff]
  %v2217 = vld [vmem:[%s5 + $0xc0] sm:$0xf]
  %v2218 = vld [vmem:[%s5 + $0xc4] sm:$0xff]
  %v2219 = vld [vmem:[%s5 + $0xcc] sm:$0xff]
  %v2220 = vld [vmem:[%s5 + $0xd4] sm:$0xff]
  %v2221 = vld [vmem:[%s5 + $0xdc] sm:$0xf]
  %v2222 = vld [vmem:[%s5 + $0xe0] sm:$0xff]
  %v2223 = vld [vmem:[%s5 + $0xe8] sm:$0xff]
  %v2224 = vld [vmem:[%s5 + $0xf0] sm:$0xff]
  %v2225 = vld [vmem:[%s5 + $0xf8] sm:$0xf]
  %v2226 = vld [vmem:[%s5 + $0xfc] sm:$0xff]
  %v2227 = vld [vmem:[%s5 + $0x104] sm:$0xff]
  %v2228 = vld [vmem:[%s5 + $0x10c] sm:$0xff]
  %v2229 = vld [vmem:[%s5 + $0x114] sm:$0xf]
  %v2230 = vld [vmem:[%s5 + $0x118] sm:$0xff]
  %v2231 = vld [vmem:[%s5 + $0x120] sm:$0xff]
  %v2232 = vld [vmem:[%s5 + $0x128] sm:$0xff]
  %v2233 = vld [vmem:[%s5 + $0x130] sm:$0xf]
  %v2234 = vld [vmem:[%s5 + $0x134] sm:$0xff]
  %v2235 = vld [vmem:[%s5 + $0x13c] sm:$0xff]
  %v2236 = vld [vmem:[%s5 + $0x144] sm:$0xff]
  %v2237 = vld [vmem:[%s5 + $0x14c] sm:$0xf]
  %v2238 = vld [vmem:[%s5 + $0x150] sm:$0xff]
  %v2239 = vld [vmem:[%s5 + $0x158] sm:$0xff]
  %v2240 = vld [vmem:[%s5 + $0x160] sm:$0xff]
  %v2241 = vld [vmem:[%s5 + $0x168] sm:$0xf]
  %v2242 = vld [vmem:[%s5 + $0x16c] sm:$0xff]
  %v2243 = vld [vmem:[%s5 + $0x174] sm:$0xff]
  %v2244 = vld [vmem:[%s5 + $0x17c] sm:$0xff]
  %v2245 = vld [vmem:[%s5 + $0x184] sm:$0xf]
  %v2246 = vld [vmem:[%s5 + $0x188] sm:$0xff]
  %v2247 = vld [vmem:[%s5 + $0x190] sm:$0xff]
  %v2248 = vld [vmem:[%s5 + $0x198] sm:$0xff]
  %v2249 = vld [vmem:[%s5 + $0x1a0] sm:$0xf]
  %v2250 = vld [vmem:[%s5 + $0x1a4] sm:$0xff]
  %v2251 = vld [vmem:[%s5 + $0x1ac] sm:$0xff]
  %v2252 = vld [vmem:[%s5 + $0x1b4] sm:$0xff]
  %v2253 = vld [vmem:[%s5 + $0x1bc] sm:$0xf]
  %v2254 = vld [vmem:[%s5 + $0x1c0] sm:$0xff]
  %v2255 = vld [vmem:[%s5 + $0x1c8] sm:$0xff]
  %v2256 = vld [vmem:[%s5 + $0x1d0] sm:$0xff]
  %v2257 = vld [vmem:[%s5 + $0x1d8] sm:$0xf]
  %v2258 = vld [vmem:[%s5 + $0x1dc] sm:$0xff]
  %v2259 = vld [vmem:[%s5 + $0x1e4] sm:$0xff]
  %v2260 = vld [vmem:[%s5 + $0x1ec] sm:$0xff]
  %v2261 = vld [vmem:[%s5 + $0x1f4] sm:$0xf]
  %v2262 = vld [vmem:[%s5 + $0x1f8] sm:$0xff]
  %v2263 = vld [vmem:[%s5 + $0x200] sm:$0xff]
  %v2264 = vld [vmem:[%s5 + $0x208] sm:$0xff]
  %v2265 = vld [vmem:[%s5 + $0x210] sm:$0xf]
  %v2266 = vld [vmem:[%s5 + $0x214] sm:$0xff]
  %v2267 = vld [vmem:[%s5 + $0x21c] sm:$0xff]
  %v2268 = vld [vmem:[%s5 + $0x224] sm:$0xff]
  %v2269 = vld [vmem:[%s5 + $0x22c] sm:$0xf]
  %v2270 = vld [vmem:[%s5 + $0x230] sm:$0xff]
  %v2271 = vld [vmem:[%s5 + $0x238] sm:$0xff]
  %v2272 = vld [vmem:[%s5 + $0x240] sm:$0xff]
  %v2273 = vld [vmem:[%s5 + $0x248] sm:$0xf]
  %v2274 = vld [vmem:[%s5 + $0x24c] sm:$0xff]
  %v2275 = vld [vmem:[%s5 + $0x254] sm:$0xff]
  %v2276 = vld [vmem:[%s5 + $0x25c] sm:$0xff]
  %v2277 = vld [vmem:[%s5 + $0x264] sm:$0xf]
  %v2278 = vld [vmem:[%s5 + $0x268] sm:$0xff]
  %v2279 = vld [vmem:[%s5 + $0x270] sm:$0xff]
  %v2280 = vld [vmem:[%s5 + $0x278] sm:$0xff]
  %v2281 = vld [vmem:[%s5 + $0x280] sm:$0xf]
  %v2282 = vld [vmem:[%s5 + $0x284] sm:$0xff]
  %v2283 = vld [vmem:[%s5 + $0x28c] sm:$0xff]
  %v2284 = vld [vmem:[%s5 + $0x294] sm:$0xff]
  %v2285 = vld [vmem:[%s5 + $0x29c] sm:$0xf]
  %v2286 = vld [vmem:[%s5 + $0x2a0] sm:$0xff]
  %v2287 = vld [vmem:[%s5 + $0x2a8] sm:$0xff]
  %v2288 = vld [vmem:[%s5 + $0x2b0] sm:$0xff]
  %v2289 = vld [vmem:[%s5 + $0x2b8] sm:$0xf]
  %v2290 = vld [vmem:[%s5 + $0x2bc] sm:$0xff]
  %v2291 = vld [vmem:[%s5 + $0x2c4] sm:$0xff]
  %v2292 = vld [vmem:[%s5 + $0x2cc] sm:$0xff]
  %v2293 = vld [vmem:[%s5 + $0x2d4] sm:$0xf]
  %v2294 = vld [vmem:[%s5 + $0x2d8] sm:$0xff]
  %v2295 = vld [vmem:[%s5 + $0x2e0] sm:$0xff]
  %v2296 = vld [vmem:[%s5 + $0x2e8] sm:$0xff]
  %v2297 = vld [vmem:[%s5 + $0x2f0] sm:$0xf]
  %v2298 = vld [vmem:[%s5 + $0x2f4] sm:$0xff]
  %v2299 = vld [vmem:[%s5 + $0x2fc] sm:$0xff]
  %v2300 = vld [vmem:[%s5 + $0x304] sm:$0xff]
  %v2301 = vld [vmem:[%s5 + $0x30c] sm:$0xf]
  %v2302 = vld [vmem:[%s5 + $0x310] sm:$0xff]
  %v2303 = vld [vmem:[%s5 + $0x318] sm:$0xff]
  %v2304 = vld [vmem:[%s5 + $0x320] sm:$0xff]
  %v2305 = vld [vmem:[%s5 + $0x328] sm:$0xf]
  %v2306 = vld [vmem:[%s5 + $0x32c] sm:$0xff]
  %v2307 = vld [vmem:[%s5 + $0x334] sm:$0xff]
  %v2308 = vld [vmem:[%s5 + $0x33c] sm:$0xff]
  %v2309 = vld [vmem:[%s5 + $0x344] sm:$0xf]
  %v2310 = vld [vmem:[%s5 + $0x348] sm:$0xff]
  %v2311 = vld [vmem:[%s5 + $0x350] sm:$0xff]
  %v2312 = vld [vmem:[%s5 + $0x358] sm:$0xff]
  %v2313 = vld [vmem:[%s5 + $0x360] sm:$0xf]
  %v2314 = vld [vmem:[%s5 + $0x364] sm:$0xff]
  %v2315 = vld [vmem:[%s5 + $0x36c] sm:$0xff]
  %v2316 = vld [vmem:[%s5 + $0x374] sm:$0xff]
  %v2317 = vld [vmem:[%s5 + $0x37c] sm:$0xf]
  %v2318 = vld [vmem:[%s5 + $0x380] sm:$0xff]
  %v2319 = vld [vmem:[%s5 + $0x388] sm:$0xff]
  %v2320 = vld [vmem:[%s5 + $0x390] sm:$0xff]
  %v2321 = vld [vmem:[%s5 + $0x398] sm:$0xf]
  %v2322 = vld [vmem:[%s5 + $0x39c] sm:$0xff]
  %v2323 = vld [vmem:[%s5 + $0x3a4] sm:$0xff]
  %v2324 = vld [vmem:[%s5 + $0x3ac] sm:$0xff]
  %v2325 = vld [vmem:[%s5 + $0x3b4] sm:$0xf]
  %v2326 = vld [vmem:[%s5 + $0x3b8] sm:$0xff]
  %v2327 = vld [vmem:[%s5 + $0x3c0] sm:$0xff]
  %v2328 = vld [vmem:[%s5 + $0x3c8] sm:$0xff]
  %v2329 = vld [vmem:[%s5 + $0x3d0] sm:$0xf]
  %v2330 = vld [vmem:[%s5 + $0x3d4] sm:$0xff]
  %v2331 = vld [vmem:[%s5 + $0x3dc] sm:$0xff]
  %v2332 = vld [vmem:[%s5 + $0x3e4] sm:$0xff]
  %v2333 = vld [vmem:[%s5 + $0x3ec] sm:$0xf]
  %v2334 = vld [vmem:[%s5 + $0x3f0] sm:$0xff]
  %v2335 = vld [vmem:[%s5 + $0x3f8] sm:$0xff]
  %v2336 = vld [vmem:[%s5 + $0x400] sm:$0xff]
  %v2337 = vld [vmem:[%s5 + $0x408] sm:$0xf]
  %v2338 = vld [vmem:[%s5 + $0x40c] sm:$0xff]
  %v2339 = vld [vmem:[%s5 + $0x414] sm:$0xff]
  %v2340 = vld [vmem:[%s5 + $0x41c] sm:$0xff]
  %v2341 = vld [vmem:[%s5 + $0x424] sm:$0xf]
  %v2342 = vld [vmem:[%s5 + $0x428] sm:$0xff]
  %v2343 = vld [vmem:[%s5 + $0x430] sm:$0xff]
  %v2344 = vld [vmem:[%s5 + $0x438] sm:$0xff]
  %v2345 = vld [vmem:[%s5 + $0x440] sm:$0xf]
  %v2346 = vld [vmem:[%s5 + $0x444] sm:$0xff]
  %v2347 = vld [vmem:[%s5 + $0x44c] sm:$0xff]
  %v2348 = vld [vmem:[%s5 + $0x454] sm:$0xff]
  %v2349 = vld [vmem:[%s5 + $0x45c] sm:$0xf]
  %v2350 = vld [vmem:[%s5 + $0x460] sm:$0xff]
  %v2351 = vld [vmem:[%s5 + $0x468] sm:$0xff]
  %v2352 = vld [vmem:[%s5 + $0x470] sm:$0xff]
  %v2353 = vld [vmem:[%s5 + $0x478] sm:$0xf]
  %v2354 = vld [vmem:[%s5 + $0x47c] sm:$0xff]
  %v2355 = vld [vmem:[%s5 + $0x484] sm:$0xff]
  %v2356 = vld [vmem:[%s5 + $0x48c] sm:$0xff]
  %v2357 = vld [vmem:[%s5 + $0x494] sm:$0xf]
  %v2358 = vld [vmem:[%s5 + $0x498] sm:$0xff]
  %v2359 = vld [vmem:[%s5 + $0x4a0] sm:$0xff]
  %v2360 = vld [vmem:[%s5 + $0x4a8] sm:$0xff]
  %v2361 = vld [vmem:[%s5 + $0x4b0] sm:$0xf]
  %v2362 = vld [vmem:[%s5 + $0x4b4] sm:$0xff]
  %v2363 = vld [vmem:[%s5 + $0x4bc] sm:$0xff]
  %v2364 = vld [vmem:[%s5 + $0x4c4] sm:$0xff]
  %v2365 = vld [vmem:[%s5 + $0x4cc] sm:$0xf]
  %v2366 = vld [vmem:[%s5 + $0x4d0] sm:$0xff]
  %v2367 = vld [vmem:[%s5 + $0x4d8] sm:$0xff]
  %v2368 = vld [vmem:[%s5 + $0x4e0] sm:$0xff]
  %v2369 = vld [vmem:[%s5 + $0x4e8] sm:$0xf]
  %v2370 = vld [vmem:[%s5 + $0x4ec] sm:$0xff]
  %v2371 = vld [vmem:[%s5 + $0x4f4] sm:$0xff]
  %v2372 = vld [vmem:[%s5 + $0x4fc] sm:$0xff]
  %v2373 = vld [vmem:[%s5 + $0x504] sm:$0xf]
  %v2374 = vld [vmem:[%s5 + $0x508] sm:$0xff]
  %v2375 = vld [vmem:[%s5 + $0x510] sm:$0xff]
  %v2376 = vld [vmem:[%s5 + $0x518] sm:$0xff]
  %v2377 = vld [vmem:[%s5 + $0x520] sm:$0xf]
  %v2378 = vld [vmem:[%s5 + $0x524] sm:$0xff]
  %v2379 = vld [vmem:[%s5 + $0x52c] sm:$0xff]
  %v2380 = vld [vmem:[%s5 + $0x534] sm:$0xff]
  %v2381 = vld [vmem:[%s5 + $0x53c] sm:$0xf]
  %v2382 = vld [vmem:[%s5 + $0x540] sm:$0xff]
  %v2383 = vld [vmem:[%s5 + $0x548] sm:$0xff]
  %v2384 = vld [vmem:[%s5 + $0x550] sm:$0xff]
  %v2385 = vld [vmem:[%s5 + $0x558] sm:$0xf]
  %v2386 = vld [vmem:[%s5 + $0x55c] sm:$0xff]
  %v2387 = vld [vmem:[%s5 + $0x564] sm:$0xff]
  %v2388 = vld [vmem:[%s5 + $0x56c] sm:$0xff]
  %v2389 = vld [vmem:[%s5 + $0x574] sm:$0xf]
  %v2390 = vld [vmem:[%s5 + $0x578] sm:$0xff]
  %v2391 = vld [vmem:[%s5 + $0x580] sm:$0xff]
  %v2392 = vld [vmem:[%s5 + $0x588] sm:$0xff]
  %v2393 = vld [vmem:[%s5 + $0x590] sm:$0xf]
  %v2394 = vld [vmem:[%s5 + $0x594] sm:$0xff]
  %v2395 = vld [vmem:[%s5 + $0x59c] sm:$0xff]
  %v2396 = vld [vmem:[%s5 + $0x5a4] sm:$0xff]
  %v2397 = vld [vmem:[%s5 + $0x5ac] sm:$0xf]
  %v2398 = vld [vmem:[%s5 + $0x5b0] sm:$0xff]
  %v2399 = vld [vmem:[%s5 + $0x5b8] sm:$0xff]
  %v2400 = vld [vmem:[%s5 + $0x5c0] sm:$0xff]
  %v2401 = vld [vmem:[%s5 + $0x5c8] sm:$0xf]
  %v2402 = vld [vmem:[%s5 + $0x5cc] sm:$0xff]
  %v2403 = vld [vmem:[%s5 + $0x5d4] sm:$0xff]
  %v2404 = vld [vmem:[%s5 + $0x5dc] sm:$0xff]
  %v2405 = vld [vmem:[%s5 + $0x5e4] sm:$0xf]
  %v2406 = vld [vmem:[%s5 + $0x5e8] sm:$0xff]
  %v2407 = vld [vmem:[%s5 + $0x5f0] sm:$0xff]
  %v2408 = vld [vmem:[%s5 + $0x5f8] sm:$0xff]
  %v2409 = vld [vmem:[%s5 + $0x600] sm:$0xf]
  %v2410 = vld [vmem:[%s5 + $0x604] sm:$0xff]
  %v2411 = vld [vmem:[%s5 + $0x60c] sm:$0xff]
  %v2412 = vld [vmem:[%s5 + $0x614] sm:$0xff]
  %v2413 = vld [vmem:[%s5 + $0x61c] sm:$0xf]
  %v2414 = vld [vmem:[%s5 + $0x620] sm:$0xff]
  %v2415 = vld [vmem:[%s5 + $0x628] sm:$0xff]
  %v2416 = vld [vmem:[%s5 + $0x630] sm:$0xff]
  %v2417 = vld [vmem:[%s5 + $0x638] sm:$0xf]
  %v2418 = vld [vmem:[%s5 + $0x63c] sm:$0xff]
  %v2419 = vld [vmem:[%s5 + $0x644] sm:$0xff]
  %v2420 = vld [vmem:[%s5 + $0x64c] sm:$0xff]
  %v2421 = vld [vmem:[%s5 + $0x654] sm:$0xf]
  %v2422 = vld [vmem:[%s5 + $0x658] sm:$0xff]
  %v2423 = vld [vmem:[%s5 + $0x660] sm:$0xff]
  %v2424 = vld [vmem:[%s5 + $0x668] sm:$0xff]
  %v2425 = vld [vmem:[%s5 + $0x670] sm:$0xf]
  %v2426 = vld [vmem:[%s5 + $0x674] sm:$0xff]
  %v2427 = vld [vmem:[%s5 + $0x67c] sm:$0xff]
  %v2428 = vld [vmem:[%s5 + $0x684] sm:$0xff]
  %v2429 = vld [vmem:[%s5 + $0x68c] sm:$0xf]
  %v2430 = vld [vmem:[%s5 + $0x690] sm:$0xff]
  %v2431 = vld [vmem:[%s5 + $0x698] sm:$0xff]
  %v2432 = vld [vmem:[%s5 + $0x6a0] sm:$0xff]
  %v2433 = vld [vmem:[%s5 + $0x6a8] sm:$0xf]
  %v2434 = vld [vmem:[%s5 + $0x6ac] sm:$0xff]
  %v2435 = vld [vmem:[%s5 + $0x6b4] sm:$0xff]
  %v2436 = vld [vmem:[%s5 + $0x6bc] sm:$0xff]
  %v2437 = vld [vmem:[%s5 + $0x6c4] sm:$0xf]
  %v2438 = vld [vmem:[%s5 + $0x6c8] sm:$0xff]
  %v2439 = vld [vmem:[%s5 + $0x6d0] sm:$0xff]
  %v2440 = vld [vmem:[%s5 + $0x6d8] sm:$0xff]
  %v2441 = vld [vmem:[%s5 + $0x6e0] sm:$0xf]
  %v2442 = vld [vmem:[%s5 + $0x6e4] sm:$0xff]
  %v2443 = vld [vmem:[%s5 + $0x6ec] sm:$0xff]
  %v2444 = vld [vmem:[%s5 + $0x6f4] sm:$0xff]
  %v2445 = vld [vmem:[%s5 + $0x6fc] sm:$0xf]
  %v2447 = vlaneseq
  %v2448 = vshrl.u32 %v2447, 7
  %v2449 = vsub.s32 0, %v2448
  %v2450 = vrot.slane %v33, %v2449
  %v2451 = vlaneseq
  %v2452 = vshrl.u32 %v2451, 7
  %v2453 = vsub.s32 1, %v2452
  %v2454 = vrot.slane %v33, %v2453
  %v2455 = vlaneseq
  %v2456 = vshrl.u32 %v2455, 7
  %v2457 = vsub.s32 2, %v2456
  %v2458 = vrot.slane %v33, %v2457
  %v2459 = vlaneseq
  %v2460 = vshrl.u32 %v2459, 7
  %v2461 = vsub.s32 3, %v2460
  %v2462 = vrot.slane %v33, %v2461
  %v2463 = vlaneseq
  %v2464 = vshrl.u32 %v2463, 7
  %v2465 = vsub.s32 4, %v2464
  %v2466 = vrot.slane %v33, %v2465
  %v2467 = vlaneseq
  %v2468 = vshrl.u32 %v2467, 7
  %v2469 = vsub.s32 5, %v2468
  %v2470 = vrot.slane %v33, %v2469
  %v2471 = vlaneseq
  %v2472 = vshrl.u32 %v2471, 7
  %v2473 = vsub.s32 6, %v2472
  %v2474 = vrot.slane %v33, %v2473
  %v2738 = vunpack.c.l.b16 %v2190
  %v2739 = vunpack.c.h.b16 %v2190
  %v2740 = vunpack.c.l.b16 %v2191
  %v2741 = vunpack.c.h.b16 %v2191
  %v2742 = vunpack.c.l.b16 %v2192
  %v2743 = vunpack.c.h.b16 %v2192
  %v2744 = vunpack.c.l.b16 %v2193
  %v2745 = vunpack.c.l.b16 %v2194
  %v2746 = vunpack.c.h.b16 %v2194
  %v2747 = vunpack.c.l.b16 %v2195
  %v2748 = vunpack.c.h.b16 %v2195
  %v2749 = vunpack.c.l.b16 %v2196
  %v2750 = vunpack.c.h.b16 %v2196
  %v2751 = vunpack.c.l.b16 %v2197
  %v2752 = vunpack.c.l.b16 %v2198
  %v2753 = vunpack.c.h.b16 %v2198
  %v2754 = vunpack.c.l.b16 %v2199
  %v2755 = vunpack.c.h.b16 %v2199
  %v2756 = vunpack.c.l.b16 %v2200
  %v2757 = vunpack.c.h.b16 %v2200
  %v2758 = vunpack.c.l.b16 %v2201
  %v2759 = vunpack.c.l.b16 %v2202
  %v2760 = vunpack.c.h.b16 %v2202
  %v2761 = vunpack.c.l.b16 %v2203
  %v2762 = vunpack.c.h.b16 %v2203
  %v2763 = vunpack.c.l.b16 %v2204
  %v2764 = vunpack.c.h.b16 %v2204
  %v2765 = vunpack.c.l.b16 %v2205
  %v2766 = vunpack.c.l.b16 %v2206
  %v2767 = vunpack.c.h.b16 %v2206
  %v2768 = vunpack.c.l.b16 %v2207
  %v2769 = vunpack.c.h.b16 %v2207
  %v2770 = vunpack.c.l.b16 %v2208
  %v2771 = vunpack.c.h.b16 %v2208
  %v2772 = vunpack.c.l.b16 %v2209
  %v2773 = vunpack.c.l.b16 %v2210
  %v2774 = vunpack.c.h.b16 %v2210
  %v2775 = vunpack.c.l.b16 %v2211
  %v2776 = vunpack.c.h.b16 %v2211
  %v2777 = vunpack.c.l.b16 %v2212
  %v2778 = vunpack.c.h.b16 %v2212
  %v2779 = vunpack.c.l.b16 %v2213
  %v2780 = vunpack.c.l.b16 %v2214
  %v2781 = vunpack.c.h.b16 %v2214
  %v2782 = vunpack.c.l.b16 %v2215
  %v2783 = vunpack.c.h.b16 %v2215
  %v2784 = vunpack.c.l.b16 %v2216
  %v2785 = vunpack.c.h.b16 %v2216
  %v2786 = vunpack.c.l.b16 %v2217
  %v2787 = vunpack.c.l.b16 %v2218
  %v2788 = vunpack.c.h.b16 %v2218
  %v2789 = vunpack.c.l.b16 %v2219
  %v2790 = vunpack.c.h.b16 %v2219
  %v2791 = vunpack.c.l.b16 %v2220
  %v2792 = vunpack.c.h.b16 %v2220
  %v2793 = vunpack.c.l.b16 %v2221
  %v2794 = vunpack.c.l.b16 %v2222
  %v2795 = vunpack.c.h.b16 %v2222
  %v2796 = vunpack.c.l.b16 %v2223
  %v2797 = vunpack.c.h.b16 %v2223
  %v2798 = vunpack.c.l.b16 %v2224
  %v2799 = vunpack.c.h.b16 %v2224
  %v2800 = vunpack.c.l.b16 %v2225
  %v2801 = vunpack.c.l.b16 %v2226
  %v2802 = vunpack.c.h.b16 %v2226
  %v2803 = vunpack.c.l.b16 %v2227
  %v2804 = vunpack.c.h.b16 %v2227
  %v2805 = vunpack.c.l.b16 %v2228
  %v2806 = vunpack.c.h.b16 %v2228
  %v2807 = vunpack.c.l.b16 %v2229
  %v2808 = vunpack.c.l.b16 %v2230
  %v2809 = vunpack.c.h.b16 %v2230
  %v2810 = vunpack.c.l.b16 %v2231
  %v2811 = vunpack.c.h.b16 %v2231
  %v2812 = vunpack.c.l.b16 %v2232
  %v2813 = vunpack.c.h.b16 %v2232
  %v2814 = vunpack.c.l.b16 %v2233
  %v2815 = vunpack.c.l.b16 %v2234
  %v2816 = vunpack.c.h.b16 %v2234
  %v2817 = vunpack.c.l.b16 %v2235
  %v2818 = vunpack.c.h.b16 %v2235
  %v2819 = vunpack.c.l.b16 %v2236
  %v2820 = vunpack.c.h.b16 %v2236
  %v2821 = vunpack.c.l.b16 %v2237
  %v2822 = vunpack.c.l.b16 %v2238
  %v2823 = vunpack.c.h.b16 %v2238
  %v2824 = vunpack.c.l.b16 %v2239
  %v2825 = vunpack.c.h.b16 %v2239
  %v2826 = vunpack.c.l.b16 %v2240
  %v2827 = vunpack.c.h.b16 %v2240
  %v2828 = vunpack.c.l.b16 %v2241
  %v2829 = vunpack.c.l.b16 %v2242
  %v2830 = vunpack.c.h.b16 %v2242
  %v2831 = vunpack.c.l.b16 %v2243
  %v2832 = vunpack.c.h.b16 %v2243
  %v2833 = vunpack.c.l.b16 %v2244
  %v2834 = vunpack.c.h.b16 %v2244
  %v2835 = vunpack.c.l.b16 %v2245
  %v2836 = vunpack.c.l.b16 %v2246
  %v2837 = vunpack.c.h.b16 %v2246
  %v2838 = vunpack.c.l.b16 %v2247
  %v2839 = vunpack.c.h.b16 %v2247
  %v2840 = vunpack.c.l.b16 %v2248
  %v2841 = vunpack.c.h.b16 %v2248
  %v2842 = vunpack.c.l.b16 %v2249
  %v2843 = vunpack.c.l.b16 %v2250
  %v2844 = vunpack.c.h.b16 %v2250
  %v2845 = vunpack.c.l.b16 %v2251
  %v2846 = vunpack.c.h.b16 %v2251
  %v2847 = vunpack.c.l.b16 %v2252
  %v2848 = vunpack.c.h.b16 %v2252
  %v2849 = vunpack.c.l.b16 %v2253
  %v2850 = vunpack.c.l.b16 %v2254
  %v2851 = vunpack.c.h.b16 %v2254
  %v2852 = vunpack.c.l.b16 %v2255
  %v2853 = vunpack.c.h.b16 %v2255
  %v2854 = vunpack.c.l.b16 %v2256
  %v2855 = vunpack.c.h.b16 %v2256
  %v2856 = vunpack.c.l.b16 %v2257
  %v2857 = vunpack.c.l.b16 %v2258
  %v2858 = vunpack.c.h.b16 %v2258
  %v2859 = vunpack.c.l.b16 %v2259
  %v2860 = vunpack.c.h.b16 %v2259
  %v2861 = vunpack.c.l.b16 %v2260
  %v2862 = vunpack.c.h.b16 %v2260
  %v2863 = vunpack.c.l.b16 %v2261
  %v2864 = vunpack.c.l.b16 %v2262
  %v2865 = vunpack.c.h.b16 %v2262
  %v2866 = vunpack.c.l.b16 %v2263
  %v2867 = vunpack.c.h.b16 %v2263
  %v2868 = vunpack.c.l.b16 %v2264
  %v2869 = vunpack.c.h.b16 %v2264
  %v2870 = vunpack.c.l.b16 %v2265
  %v2871 = vunpack.c.l.b16 %v2266
  %v2872 = vunpack.c.h.b16 %v2266
  %v2873 = vunpack.c.l.b16 %v2267
  %v2874 = vunpack.c.h.b16 %v2267
  %v2875 = vunpack.c.l.b16 %v2268
  %v2876 = vunpack.c.h.b16 %v2268
  %v2877 = vunpack.c.l.b16 %v2269
  %v2878 = vunpack.c.l.b16 %v2270
  %v2879 = vunpack.c.h.b16 %v2270
  %v2880 = vunpack.c.l.b16 %v2271
  %v2881 = vunpack.c.h.b16 %v2271
  %v2882 = vunpack.c.l.b16 %v2272
  %v2883 = vunpack.c.h.b16 %v2272
  %v2884 = vunpack.c.l.b16 %v2273
  %v2885 = vunpack.c.l.b16 %v2274
  %v2886 = vunpack.c.h.b16 %v2274
  %v2887 = vunpack.c.l.b16 %v2275
  %v2888 = vunpack.c.h.b16 %v2275
  %v2889 = vunpack.c.l.b16 %v2276
  %v2890 = vunpack.c.h.b16 %v2276
  %v2891 = vunpack.c.l.b16 %v2277
  %v2892 = vunpack.c.l.b16 %v2278
  %v2893 = vunpack.c.h.b16 %v2278
  %v2894 = vunpack.c.l.b16 %v2279
  %v2895 = vunpack.c.h.b16 %v2279
  %v2896 = vunpack.c.l.b16 %v2280
  %v2897 = vunpack.c.h.b16 %v2280
  %v2898 = vunpack.c.l.b16 %v2281
  %v2899 = vunpack.c.l.b16 %v2282
  %v2900 = vunpack.c.h.b16 %v2282
  %v2901 = vunpack.c.l.b16 %v2283
  %v2902 = vunpack.c.h.b16 %v2283
  %v2903 = vunpack.c.l.b16 %v2284
  %v2904 = vunpack.c.h.b16 %v2284
  %v2905 = vunpack.c.l.b16 %v2285
  %v2906 = vunpack.c.l.b16 %v2286
  %v2907 = vunpack.c.h.b16 %v2286
  %v2908 = vunpack.c.l.b16 %v2287
  %v2909 = vunpack.c.h.b16 %v2287
  %v2910 = vunpack.c.l.b16 %v2288
  %v2911 = vunpack.c.h.b16 %v2288
  %v2912 = vunpack.c.l.b16 %v2289
  %v2913 = vunpack.c.l.b16 %v2290
  %v2914 = vunpack.c.h.b16 %v2290
  %v2915 = vunpack.c.l.b16 %v2291
  %v2916 = vunpack.c.h.b16 %v2291
  %v2917 = vunpack.c.l.b16 %v2292
  %v2918 = vunpack.c.h.b16 %v2292
  %v2919 = vunpack.c.l.b16 %v2293
  %v2920 = vunpack.c.l.b16 %v2294
  %v2921 = vunpack.c.h.b16 %v2294
  %v2922 = vunpack.c.l.b16 %v2295
  %v2923 = vunpack.c.h.b16 %v2295
  %v2924 = vunpack.c.l.b16 %v2296
  %v2925 = vunpack.c.h.b16 %v2296
  %v2926 = vunpack.c.l.b16 %v2297
  %v2927 = vunpack.c.l.b16 %v2298
  %v2928 = vunpack.c.h.b16 %v2298
  %v2929 = vunpack.c.l.b16 %v2299
  %v2930 = vunpack.c.h.b16 %v2299
  %v2931 = vunpack.c.l.b16 %v2300
  %v2932 = vunpack.c.h.b16 %v2300
  %v2933 = vunpack.c.l.b16 %v2301
  %v2934 = vunpack.c.l.b16 %v2302
  %v2935 = vunpack.c.h.b16 %v2302
  %v2936 = vunpack.c.l.b16 %v2303
  %v2937 = vunpack.c.h.b16 %v2303
  %v2938 = vunpack.c.l.b16 %v2304
  %v2939 = vunpack.c.h.b16 %v2304
  %v2940 = vunpack.c.l.b16 %v2305
  %v2941 = vunpack.c.l.b16 %v2306
  %v2942 = vunpack.c.h.b16 %v2306
  %v2943 = vunpack.c.l.b16 %v2307
  %v2944 = vunpack.c.h.b16 %v2307
  %v2945 = vunpack.c.l.b16 %v2308
  %v2946 = vunpack.c.h.b16 %v2308
  %v2947 = vunpack.c.l.b16 %v2309
  %v2948 = vunpack.c.l.b16 %v2310
  %v2949 = vunpack.c.h.b16 %v2310
  %v2950 = vunpack.c.l.b16 %v2311
  %v2951 = vunpack.c.h.b16 %v2311
  %v2952 = vunpack.c.l.b16 %v2312
  %v2953 = vunpack.c.h.b16 %v2312
  %v2954 = vunpack.c.l.b16 %v2313
  %v2955 = vunpack.c.l.b16 %v2314
  %v2956 = vunpack.c.h.b16 %v2314
  %v2957 = vunpack.c.l.b16 %v2315
  %v2958 = vunpack.c.h.b16 %v2315
  %v2959 = vunpack.c.l.b16 %v2316
  %v2960 = vunpack.c.h.b16 %v2316
  %v2961 = vunpack.c.l.b16 %v2317
  %v2962 = vunpack.c.l.b16 %v2318
  %v2963 = vunpack.c.h.b16 %v2318
  %v2964 = vunpack.c.l.b16 %v2319
  %v2965 = vunpack.c.h.b16 %v2319
  %v2966 = vunpack.c.l.b16 %v2320
  %v2967 = vunpack.c.h.b16 %v2320
  %v2968 = vunpack.c.l.b16 %v2321
  %v2969 = vunpack.c.l.b16 %v2322
  %v2970 = vunpack.c.h.b16 %v2322
  %v2971 = vunpack.c.l.b16 %v2323
  %v2972 = vunpack.c.h.b16 %v2323
  %v2973 = vunpack.c.l.b16 %v2324
  %v2974 = vunpack.c.h.b16 %v2324
  %v2975 = vunpack.c.l.b16 %v2325
  %v2976 = vunpack.c.l.b16 %v2326
  %v2977 = vunpack.c.h.b16 %v2326
  %v2978 = vunpack.c.l.b16 %v2327
  %v2979 = vunpack.c.h.b16 %v2327
  %v2980 = vunpack.c.l.b16 %v2328
  %v2981 = vunpack.c.h.b16 %v2328
  %v2982 = vunpack.c.l.b16 %v2329
  %v2983 = vunpack.c.l.b16 %v2330
  %v2984 = vunpack.c.h.b16 %v2330
  %v2985 = vunpack.c.l.b16 %v2331
  %v2986 = vunpack.c.h.b16 %v2331
  %v2987 = vunpack.c.l.b16 %v2332
  %v2988 = vunpack.c.h.b16 %v2332
  %v2989 = vunpack.c.l.b16 %v2333
  %v2990 = vunpack.c.l.b16 %v2334
  %v2991 = vunpack.c.h.b16 %v2334
  %v2992 = vunpack.c.l.b16 %v2335
  %v2993 = vunpack.c.h.b16 %v2335
  %v2994 = vunpack.c.l.b16 %v2336
  %v2995 = vunpack.c.h.b16 %v2336
  %v2996 = vunpack.c.l.b16 %v2337
  %v2997 = vunpack.c.l.b16 %v2338
  %v2998 = vunpack.c.h.b16 %v2338
  %v2999 = vunpack.c.l.b16 %v2339
  %v3000 = vunpack.c.h.b16 %v2339
  %v3001 = vunpack.c.l.b16 %v2340
  %v3002 = vunpack.c.h.b16 %v2340
  %v3003 = vunpack.c.l.b16 %v2341
  %v3004 = vunpack.c.l.b16 %v2342
  %v3005 = vunpack.c.h.b16 %v2342
  %v3006 = vunpack.c.l.b16 %v2343
  %v3007 = vunpack.c.h.b16 %v2343
  %v3008 = vunpack.c.l.b16 %v2344
  %v3009 = vunpack.c.h.b16 %v2344
  %v3010 = vunpack.c.l.b16 %v2345
  %v3011 = vunpack.c.l.b16 %v2346
  %v3012 = vunpack.c.h.b16 %v2346
  %v3013 = vunpack.c.l.b16 %v2347
  %v3014 = vunpack.c.h.b16 %v2347
  %v3015 = vunpack.c.l.b16 %v2348
  %v3016 = vunpack.c.h.b16 %v2348
  %v3017 = vunpack.c.l.b16 %v2349
  %v3018 = vunpack.c.l.b16 %v2350
  %v3019 = vunpack.c.h.b16 %v2350
  %v3020 = vunpack.c.l.b16 %v2351
  %v3021 = vunpack.c.h.b16 %v2351
  %v3022 = vunpack.c.l.b16 %v2352
  %v3023 = vunpack.c.h.b16 %v2352
  %v3024 = vunpack.c.l.b16 %v2353
  %v3025 = vunpack.c.l.b16 %v2354
  %v3026 = vunpack.c.h.b16 %v2354
  %v3027 = vunpack.c.l.b16 %v2355
  %v3028 = vunpack.c.h.b16 %v2355
  %v3029 = vunpack.c.l.b16 %v2356
  %v3030 = vunpack.c.h.b16 %v2356
  %v3031 = vunpack.c.l.b16 %v2357
  %v3032 = vunpack.c.l.b16 %v2358
  %v3033 = vunpack.c.h.b16 %v2358
  %v3034 = vunpack.c.l.b16 %v2359
  %v3035 = vunpack.c.h.b16 %v2359
  %v3036 = vunpack.c.l.b16 %v2360
  %v3037 = vunpack.c.h.b16 %v2360
  %v3038 = vunpack.c.l.b16 %v2361
  %v3039 = vunpack.c.l.b16 %v2362
  %v3040 = vunpack.c.h.b16 %v2362
  %v3041 = vunpack.c.l.b16 %v2363
  %v3042 = vunpack.c.h.b16 %v2363
  %v3043 = vunpack.c.l.b16 %v2364
  %v3044 = vunpack.c.h.b16 %v2364
  %v3045 = vunpack.c.l.b16 %v2365
  %v3046 = vunpack.c.l.b16 %v2366
  %v3047 = vunpack.c.h.b16 %v2366
  %v3048 = vunpack.c.l.b16 %v2367
  %v3049 = vunpack.c.h.b16 %v2367
  %v3050 = vunpack.c.l.b16 %v2368
  %v3051 = vunpack.c.h.b16 %v2368
  %v3052 = vunpack.c.l.b16 %v2369
  %v3053 = vunpack.c.l.b16 %v2370
  %v3054 = vunpack.c.h.b16 %v2370
  %v3055 = vunpack.c.l.b16 %v2371
  %v3056 = vunpack.c.h.b16 %v2371
  %v3057 = vunpack.c.l.b16 %v2372
  %v3058 = vunpack.c.h.b16 %v2372
  %v3059 = vunpack.c.l.b16 %v2373
  %v3060 = vunpack.c.l.b16 %v2374
  %v3061 = vunpack.c.h.b16 %v2374
  %v3062 = vunpack.c.l.b16 %v2375
  %v3063 = vunpack.c.h.b16 %v2375
  %v3064 = vunpack.c.l.b16 %v2376
  %v3065 = vunpack.c.h.b16 %v2376
  %v3066 = vunpack.c.l.b16 %v2377
  %v3067 = vunpack.c.l.b16 %v2378
  %v3068 = vunpack.c.h.b16 %v2378
  %v3069 = vunpack.c.l.b16 %v2379
  %v3070 = vunpack.c.h.b16 %v2379
  %v3071 = vunpack.c.l.b16 %v2380
  %v3072 = vunpack.c.h.b16 %v2380
  %v3073 = vunpack.c.l.b16 %v2381
  %v3074 = vunpack.c.l.b16 %v2382
  %v3075 = vunpack.c.h.b16 %v2382
  %v3076 = vunpack.c.l.b16 %v2383
  %v3077 = vunpack.c.h.b16 %v2383
  %v3078 = vunpack.c.l.b16 %v2384
  %v3079 = vunpack.c.h.b16 %v2384
  %v3080 = vunpack.c.l.b16 %v2385
  %v3081 = vunpack.c.l.b16 %v2386
  %v3082 = vunpack.c.h.b16 %v2386
  %v3083 = vunpack.c.l.b16 %v2387
  %v3084 = vunpack.c.h.b16 %v2387
  %v3085 = vunpack.c.l.b16 %v2388
  %v3086 = vunpack.c.h.b16 %v2388
  %v3087 = vunpack.c.l.b16 %v2389
  %v3088 = vunpack.c.l.b16 %v2390
  %v3089 = vunpack.c.h.b16 %v2390
  %v3090 = vunpack.c.l.b16 %v2391
  %v3091 = vunpack.c.h.b16 %v2391
  %v3092 = vunpack.c.l.b16 %v2392
  %v3093 = vunpack.c.h.b16 %v2392
  %v3094 = vunpack.c.l.b16 %v2393
  %v3095 = vunpack.c.l.b16 %v2394
  %v3096 = vunpack.c.h.b16 %v2394
  %v3097 = vunpack.c.l.b16 %v2395
  %v3098 = vunpack.c.h.b16 %v2395
  %v3099 = vunpack.c.l.b16 %v2396
  %v3100 = vunpack.c.h.b16 %v2396
  %v3101 = vunpack.c.l.b16 %v2397
  %v3102 = vunpack.c.l.b16 %v2398
  %v3103 = vunpack.c.h.b16 %v2398
  %v3104 = vunpack.c.l.b16 %v2399
  %v3105 = vunpack.c.h.b16 %v2399
  %v3106 = vunpack.c.l.b16 %v2400
  %v3107 = vunpack.c.h.b16 %v2400
  %v3108 = vunpack.c.l.b16 %v2401
  %v3109 = vunpack.c.l.b16 %v2402
  %v3110 = vunpack.c.h.b16 %v2402
  %v3111 = vunpack.c.l.b16 %v2403
  %v3112 = vunpack.c.h.b16 %v2403
  %v3113 = vunpack.c.l.b16 %v2404
  %v3114 = vunpack.c.h.b16 %v2404
  %v3115 = vunpack.c.l.b16 %v2405
  %v3116 = vunpack.c.l.b16 %v2406
  %v3117 = vunpack.c.h.b16 %v2406
  %v3118 = vunpack.c.l.b16 %v2407
  %v3119 = vunpack.c.h.b16 %v2407
  %v3120 = vunpack.c.l.b16 %v2408
  %v3121 = vunpack.c.h.b16 %v2408
  %v3122 = vunpack.c.l.b16 %v2409
  %v3123 = vunpack.c.l.b16 %v2410
  %v3124 = vunpack.c.h.b16 %v2410
  %v3125 = vunpack.c.l.b16 %v2411
  %v3126 = vunpack.c.h.b16 %v2411
  %v3127 = vunpack.c.l.b16 %v2412
  %v3128 = vunpack.c.h.b16 %v2412
  %v3129 = vunpack.c.l.b16 %v2413
  %v3130 = vunpack.c.l.b16 %v2414
  %v3131 = vunpack.c.h.b16 %v2414
  %v3132 = vunpack.c.l.b16 %v2415
  %v3133 = vunpack.c.h.b16 %v2415
  %v3134 = vunpack.c.l.b16 %v2416
  %v3135 = vunpack.c.h.b16 %v2416
  %v3136 = vunpack.c.l.b16 %v2417
  %v3137 = vunpack.c.l.b16 %v2418
  %v3138 = vunpack.c.h.b16 %v2418
  %v3139 = vunpack.c.l.b16 %v2419
  %v3140 = vunpack.c.h.b16 %v2419
  %v3141 = vunpack.c.l.b16 %v2420
  %v3142 = vunpack.c.h.b16 %v2420
  %v3143 = vunpack.c.l.b16 %v2421
  %v3144 = vunpack.c.l.b16 %v2422
  %v3145 = vunpack.c.h.b16 %v2422
  %v3146 = vunpack.c.l.b16 %v2423
  %v3147 = vunpack.c.h.b16 %v2423
  %v3148 = vunpack.c.l.b16 %v2424
  %v3149 = vunpack.c.h.b16 %v2424
  %v3150 = vunpack.c.l.b16 %v2425
  %v3151 = vunpack.c.l.b16 %v2426
  %v3152 = vunpack.c.h.b16 %v2426
  %v3153 = vunpack.c.l.b16 %v2427
  %v3154 = vunpack.c.h.b16 %v2427
  %v3155 = vunpack.c.l.b16 %v2428
  %v3156 = vunpack.c.h.b16 %v2428
  %v3157 = vunpack.c.l.b16 %v2429
  %v3158 = vunpack.c.l.b16 %v2430
  %v3159 = vunpack.c.h.b16 %v2430
  %v3160 = vunpack.c.l.b16 %v2431
  %v3161 = vunpack.c.h.b16 %v2431
  %v3162 = vunpack.c.l.b16 %v2432
  %v3163 = vunpack.c.h.b16 %v2432
  %v3164 = vunpack.c.l.b16 %v2433
  %v3165 = vunpack.c.l.b16 %v2434
  %v3166 = vunpack.c.h.b16 %v2434
  %v3167 = vunpack.c.l.b16 %v2435
  %v3168 = vunpack.c.h.b16 %v2435
  %v3169 = vunpack.c.l.b16 %v2436
  %v3170 = vunpack.c.h.b16 %v2436
  %v3171 = vunpack.c.l.b16 %v2437
  %v3172 = vunpack.c.l.b16 %v2438
  %v3173 = vunpack.c.h.b16 %v2438
  %v3174 = vunpack.c.l.b16 %v2439
  %v3175 = vunpack.c.h.b16 %v2439
  %v3176 = vunpack.c.l.b16 %v2440
  %v3177 = vunpack.c.h.b16 %v2440
  %v3178 = vunpack.c.l.b16 %v2441
  %v3179 = vunpack.c.l.b16 %v2442
  %v3180 = vunpack.c.h.b16 %v2442
  %v3181 = vunpack.c.l.b16 %v2443
  %v3182 = vunpack.c.h.b16 %v2443
  %v3183 = vunpack.c.l.b16 %v2444
  %v3184 = vunpack.c.h.b16 %v2444
  %v3185 = vunpack.c.l.b16 %v2445
  %v3186 = vpack.c.b16 %v2745, %v2738
  %v3187 = vpack.c.b16 %v2746, %v2739
  %v3188 = vpack.c.b16 %v2747, %v2740
  %v3189 = vpack.c.b16 %v2748, %v2741
  %v3190 = vpack.c.b16 %v2749, %v2742
  %v3191 = vpack.c.b16 %v2750, %v2743
  %v3192 = vpack.c.b16 %v2751, %v2744
  %v3193 = vpack.c.b16 %v2759, %v2752
  %v3194 = vpack.c.b16 %v2760, %v2753
  %v3195 = vpack.c.b16 %v2761, %v2754
  %v3196 = vpack.c.b16 %v2762, %v2755
  %v3197 = vpack.c.b16 %v2763, %v2756
  %v3198 = vpack.c.b16 %v2764, %v2757
  %v3199 = vpack.c.b16 %v2765, %v2758
  %v3200 = vpack.c.b16 %v2773, %v2766
  %v3201 = vpack.c.b16 %v2774, %v2767
  %v3202 = vpack.c.b16 %v2775, %v2768
  %v3203 = vpack.c.b16 %v2776, %v2769
  %v3204 = vpack.c.b16 %v2777, %v2770
  %v3205 = vpack.c.b16 %v2778, %v2771
  %v3206 = vpack.c.b16 %v2779, %v2772
  %v3207 = vpack.c.b16 %v2787, %v2780
  %v3208 = vpack.c.b16 %v2788, %v2781
  %v3209 = vpack.c.b16 %v2789, %v2782
  %v3210 = vpack.c.b16 %v2790, %v2783
  %v3211 = vpack.c.b16 %v2791, %v2784
  %v3212 = vpack.c.b16 %v2792, %v2785
  %v3213 = vpack.c.b16 %v2793, %v2786
  %v3214 = vpack.c.b16 %v2801, %v2794
  %v3215 = vpack.c.b16 %v2802, %v2795
  %v3216 = vpack.c.b16 %v2803, %v2796
  %v3217 = vpack.c.b16 %v2804, %v2797
  %v3218 = vpack.c.b16 %v2805, %v2798
  %v3219 = vpack.c.b16 %v2806, %v2799
  %v3220 = vpack.c.b16 %v2807, %v2800
  %v3221 = vpack.c.b16 %v2815, %v2808
  %v3222 = vpack.c.b16 %v2816, %v2809
  %v3223 = vpack.c.b16 %v2817, %v2810
  %v3224 = vpack.c.b16 %v2818, %v2811
  %v3225 = vpack.c.b16 %v2819, %v2812
  %v3226 = vpack.c.b16 %v2820, %v2813
  %v3227 = vpack.c.b16 %v2821, %v2814
  %v3228 = vpack.c.b16 %v2829, %v2822
  %v3229 = vpack.c.b16 %v2830, %v2823
  %v3230 = vpack.c.b16 %v2831, %v2824
  %v3231 = vpack.c.b16 %v2832, %v2825
  %v3232 = vpack.c.b16 %v2833, %v2826
  %v3233 = vpack.c.b16 %v2834, %v2827
  %v3234 = vpack.c.b16 %v2835, %v2828
  %v3235 = vpack.c.b16 %v2843, %v2836
  %v3236 = vpack.c.b16 %v2844, %v2837
  %v3237 = vpack.c.b16 %v2845, %v2838
  %v3238 = vpack.c.b16 %v2846, %v2839
  %v3239 = vpack.c.b16 %v2847, %v2840
  %v3240 = vpack.c.b16 %v2848, %v2841
  %v3241 = vpack.c.b16 %v2849, %v2842
  %v3242 = vpack.c.b16 %v2857, %v2850
  %v3243 = vpack.c.b16 %v2858, %v2851
  %v3244 = vpack.c.b16 %v2859, %v2852
  %v3245 = vpack.c.b16 %v2860, %v2853
  %v3246 = vpack.c.b16 %v2861, %v2854
  %v3247 = vpack.c.b16 %v2862, %v2855
  %v3248 = vpack.c.b16 %v2863, %v2856
  %v3249 = vpack.c.b16 %v2871, %v2864
  %v3250 = vpack.c.b16 %v2872, %v2865
  %v3251 = vpack.c.b16 %v2873, %v2866
  %v3252 = vpack.c.b16 %v2874, %v2867
  %v3253 = vpack.c.b16 %v2875, %v2868
  %v3254 = vpack.c.b16 %v2876, %v2869
  %v3255 = vpack.c.b16 %v2877, %v2870
  %v3256 = vpack.c.b16 %v2885, %v2878
  %v3257 = vpack.c.b16 %v2886, %v2879
  %v3258 = vpack.c.b16 %v2887, %v2880
  %v3259 = vpack.c.b16 %v2888, %v2881
  %v3260 = vpack.c.b16 %v2889, %v2882
  %v3261 = vpack.c.b16 %v2890, %v2883
  %v3262 = vpack.c.b16 %v2891, %v2884
  %v3263 = vpack.c.b16 %v2899, %v2892
  %v3264 = vpack.c.b16 %v2900, %v2893
  %v3265 = vpack.c.b16 %v2901, %v2894
  %v3266 = vpack.c.b16 %v2902, %v2895
  %v3267 = vpack.c.b16 %v2903, %v2896
  %v3268 = vpack.c.b16 %v2904, %v2897
  %v3269 = vpack.c.b16 %v2905, %v2898
  %v3270 = vpack.c.b16 %v2913, %v2906
  %v3271 = vpack.c.b16 %v2914, %v2907
  %v3272 = vpack.c.b16 %v2915, %v2908
  %v3273 = vpack.c.b16 %v2916, %v2909
  %v3274 = vpack.c.b16 %v2917, %v2910
  %v3275 = vpack.c.b16 %v2918, %v2911
  %v3276 = vpack.c.b16 %v2919, %v2912
  %v3277 = vpack.c.b16 %v2927, %v2920
  %v3278 = vpack.c.b16 %v2928, %v2921
  %v3279 = vpack.c.b16 %v2929, %v2922
  %v3280 = vpack.c.b16 %v2930, %v2923
  %v3281 = vpack.c.b16 %v2931, %v2924
  %v3282 = vpack.c.b16 %v2932, %v2925
  %v3283 = vpack.c.b16 %v2933, %v2926
  %v3284 = vpack.c.b16 %v2941, %v2934
  %v3285 = vpack.c.b16 %v2942, %v2935
  %v3286 = vpack.c.b16 %v2943, %v2936
  %v3287 = vpack.c.b16 %v2944, %v2937
  %v3288 = vpack.c.b16 %v2945, %v2938
  %v3289 = vpack.c.b16 %v2946, %v2939
  %v3290 = vpack.c.b16 %v2947, %v2940
  %v3291 = vpack.c.b16 %v2955, %v2948
  %v3292 = vpack.c.b16 %v2956, %v2949
  %v3293 = vpack.c.b16 %v2957, %v2950
  %v3294 = vpack.c.b16 %v2958, %v2951
  %v3295 = vpack.c.b16 %v2959, %v2952
  %v3296 = vpack.c.b16 %v2960, %v2953
  %v3297 = vpack.c.b16 %v2961, %v2954
  %v3298 = vpack.c.b16 %v2969, %v2962
  %v3299 = vpack.c.b16 %v2970, %v2963
  %v3300 = vpack.c.b16 %v2971, %v2964
  %v3301 = vpack.c.b16 %v2972, %v2965
  %v3302 = vpack.c.b16 %v2973, %v2966
  %v3303 = vpack.c.b16 %v2974, %v2967
  %v3304 = vpack.c.b16 %v2975, %v2968
  %v3305 = vpack.c.b16 %v2983, %v2976
  %v3306 = vpack.c.b16 %v2984, %v2977
  %v3307 = vpack.c.b16 %v2985, %v2978
  %v3308 = vpack.c.b16 %v2986, %v2979
  %v3309 = vpack.c.b16 %v2987, %v2980
  %v3310 = vpack.c.b16 %v2988, %v2981
  %v3311 = vpack.c.b16 %v2989, %v2982
  %v3312 = vpack.c.b16 %v2997, %v2990
  %v3313 = vpack.c.b16 %v2998, %v2991
  %v3314 = vpack.c.b16 %v2999, %v2992
  %v3315 = vpack.c.b16 %v3000, %v2993
  %v3316 = vpack.c.b16 %v3001, %v2994
  %v3317 = vpack.c.b16 %v3002, %v2995
  %v3318 = vpack.c.b16 %v3003, %v2996
  %v3319 = vpack.c.b16 %v3011, %v3004
  %v3320 = vpack.c.b16 %v3012, %v3005
  %v3321 = vpack.c.b16 %v3013, %v3006
  %v3322 = vpack.c.b16 %v3014, %v3007
  %v3323 = vpack.c.b16 %v3015, %v3008
  %v3324 = vpack.c.b16 %v3016, %v3009
  %v3325 = vpack.c.b16 %v3017, %v3010
  %v3326 = vpack.c.b16 %v3025, %v3018
  %v3327 = vpack.c.b16 %v3026, %v3019
  %v3328 = vpack.c.b16 %v3027, %v3020
  %v3329 = vpack.c.b16 %v3028, %v3021
  %v3330 = vpack.c.b16 %v3029, %v3022
  %v3331 = vpack.c.b16 %v3030, %v3023
  %v3332 = vpack.c.b16 %v3031, %v3024
  %v3333 = vpack.c.b16 %v3039, %v3032
  %v3334 = vpack.c.b16 %v3040, %v3033
  %v3335 = vpack.c.b16 %v3041, %v3034
  %v3336 = vpack.c.b16 %v3042, %v3035
  %v3337 = vpack.c.b16 %v3043, %v3036
  %v3338 = vpack.c.b16 %v3044, %v3037
  %v3339 = vpack.c.b16 %v3045, %v3038
  %v3340 = vpack.c.b16 %v3053, %v3046
  %v3341 = vpack.c.b16 %v3054, %v3047
  %v3342 = vpack.c.b16 %v3055, %v3048
  %v3343 = vpack.c.b16 %v3056, %v3049
  %v3344 = vpack.c.b16 %v3057, %v3050
  %v3345 = vpack.c.b16 %v3058, %v3051
  %v3346 = vpack.c.b16 %v3059, %v3052
  %v3347 = vpack.c.b16 %v3067, %v3060
  %v3348 = vpack.c.b16 %v3068, %v3061
  %v3349 = vpack.c.b16 %v3069, %v3062
  %v3350 = vpack.c.b16 %v3070, %v3063
  %v3351 = vpack.c.b16 %v3071, %v3064
  %v3352 = vpack.c.b16 %v3072, %v3065
  %v3353 = vpack.c.b16 %v3073, %v3066
  %v3354 = vpack.c.b16 %v3081, %v3074
  %v3355 = vpack.c.b16 %v3082, %v3075
  %v3356 = vpack.c.b16 %v3083, %v3076
  %v3357 = vpack.c.b16 %v3084, %v3077
  %v3358 = vpack.c.b16 %v3085, %v3078
  %v3359 = vpack.c.b16 %v3086, %v3079
  %v3360 = vpack.c.b16 %v3087, %v3080
  %v3361 = vpack.c.b16 %v3095, %v3088
  %v3362 = vpack.c.b16 %v3096, %v3089
  %v3363 = vpack.c.b16 %v3097, %v3090
  %v3364 = vpack.c.b16 %v3098, %v3091
  %v3365 = vpack.c.b16 %v3099, %v3092
  %v3366 = vpack.c.b16 %v3100, %v3093
  %v3367 = vpack.c.b16 %v3101, %v3094
  %v3368 = vpack.c.b16 %v3109, %v3102
  %v3369 = vpack.c.b16 %v3110, %v3103
  %v3370 = vpack.c.b16 %v3111, %v3104
  %v3371 = vpack.c.b16 %v3112, %v3105
  %v3372 = vpack.c.b16 %v3113, %v3106
  %v3373 = vpack.c.b16 %v3114, %v3107
  %v3374 = vpack.c.b16 %v3115, %v3108
  %v3375 = vpack.c.b16 %v3123, %v3116
  %v3376 = vpack.c.b16 %v3124, %v3117
  %v3377 = vpack.c.b16 %v3125, %v3118
  %v3378 = vpack.c.b16 %v3126, %v3119
  %v3379 = vpack.c.b16 %v3127, %v3120
  %v3380 = vpack.c.b16 %v3128, %v3121
  %v3381 = vpack.c.b16 %v3129, %v3122
  %v3382 = vpack.c.b16 %v3137, %v3130
  %v3383 = vpack.c.b16 %v3138, %v3131
  %v3384 = vpack.c.b16 %v3139, %v3132
  %v3385 = vpack.c.b16 %v3140, %v3133
  %v3386 = vpack.c.b16 %v3141, %v3134
  %v3387 = vpack.c.b16 %v3142, %v3135
  %v3388 = vpack.c.b16 %v3143, %v3136
  %v3389 = vpack.c.b16 %v3151, %v3144
  %v3390 = vpack.c.b16 %v3152, %v3145
  %v3391 = vpack.c.b16 %v3153, %v3146
  %v3392 = vpack.c.b16 %v3154, %v3147
  %v3393 = vpack.c.b16 %v3155, %v3148
  %v3394 = vpack.c.b16 %v3156, %v3149
  %v3395 = vpack.c.b16 %v3157, %v3150
  %v3396 = vpack.c.b16 %v3165, %v3158
  %v3397 = vpack.c.b16 %v3166, %v3159
  %v3398 = vpack.c.b16 %v3167, %v3160
  %v3399 = vpack.c.b16 %v3168, %v3161
  %v3400 = vpack.c.b16 %v3169, %v3162
  %v3401 = vpack.c.b16 %v3170, %v3163
  %v3402 = vpack.c.b16 %v3171, %v3164
  %v3403 = vpack.c.b16 %v3179, %v3172
  %v3404 = vpack.c.b16 %v3180, %v3173
  %v3405 = vpack.c.b16 %v3181, %v3174
  %v3406 = vpack.c.b16 %v3182, %v3175
  %v3407 = vpack.c.b16 %v3183, %v3176
  %v3408 = vpack.c.b16 %v3184, %v3177
  %v3409 = vpack.c.b16 %v3185, %v3178
  %3634 = vmatprep.subr.bf16.mxu0 %v3187
  %3635 = vmatpush1.bf16.msra.mxu0 %v3186
  %3636 = vmatprep.subr.bf16.mxu0 %v3194
  %3637 = vmatpush1.bf16.msra.mxu0 %v3193
  %3638 = vmatprep.subr.bf16.mxu0 %v3201
  %3639 = vmatpush1.bf16.msra.mxu0 %v3200
  %3640 = vmatprep.subr.bf16.mxu0 %v3208
  %3641 = vmatpush1.bf16.msra.mxu0 %v3207
  %3642 = vmatprep.subr.bf16.mxu0 %v3215
  %3643 = vmatpush1.bf16.msra.mxu0 %v3214
  %3644 = vmatprep.subr.bf16.mxu0 %v3222
  %3645 = vmatpush1.bf16.msra.mxu0 %v3221
  %3646 = vmatprep.subr.bf16.mxu0 %v3229
  %3647 = vmatpush1.bf16.msra.mxu0 %v3228
  %3648 = vmatprep.subr.bf16.mxu0 %v3236
  %3649 = vmatpush1.bf16.msra.mxu0 %v3235
  %3650 = vmatprep.subr.bf16.mxu0 %v3243
  %3651 = vmatpush1.bf16.msra.mxu0 %v3242
  %3652 = vmatprep.subr.bf16.mxu0 %v3250
  %3653 = vmatpush1.bf16.msra.mxu0 %v3249
  %3654 = vmatprep.subr.bf16.mxu0 %v3257
  %3655 = vmatpush1.bf16.msra.mxu0 %v3256
  %3656 = vmatprep.subr.bf16.mxu0 %v3264
  %3657 = vmatpush1.bf16.msra.mxu0 %v3263
  %3658 = vmatprep.subr.bf16.mxu0 %v3271
  %3659 = vmatpush1.bf16.msra.mxu0 %v3270
  %3660 = vmatprep.subr.bf16.mxu0 %v3278
  %3661 = vmatpush1.bf16.msra.mxu0 %v3277
  %3662 = vmatprep.subr.bf16.mxu0 %v3285
  %3663 = vmatpush1.bf16.msra.mxu0 %v3284
  %3664 = vmatprep.subr.bf16.mxu0 %v3292
  %3665 = vmatpush1.bf16.msra.mxu0 %v3291
  %3666 = vmatprep.mubr.bf16.mxu0 %v2187
  %3667 = vmatmul.mubr.bf16.gmra.mrb[0].mxu0 %v2186
  %v3668 = vpop.f32.mrb[0].mxu0
  %v3669 = vadd.f32 %v2450, %v3668
  %v3670 = vpop.f32.mrb[0].mxu0
  %v3671 = vadd.f32 %v2454, %v3670
  %v3672 = vpop.f32.mrb[0].mxu0
  %v3673 = vpop.f32.mrb[0].mxu0
  %3674 = vdwg.mxu0
  %3675 = vmatprep.subr.bf16.mxu0 %v3299
  %3676 = vmatpush1.bf16.msra.mxu0 %v3298
  %3677 = vmatprep.subr.bf16.mxu0 %v3306
  %3678 = vmatpush1.bf16.msra.mxu0 %v3305
  %3679 = vmatprep.subr.bf16.mxu0 %v3313
  %3680 = vmatpush1.bf16.msra.mxu0 %v3312
  %3681 = vmatprep.subr.bf16.mxu0 %v3320
  %3682 = vmatpush1.bf16.msra.mxu0 %v3319
  %3683 = vmatprep.subr.bf16.mxu0 %v3327
  %3684 = vmatpush1.bf16.msra.mxu0 %v3326
  %3685 = vmatprep.subr.bf16.mxu0 %v3334
  %3686 = vmatpush1.bf16.msra.mxu0 %v3333
  %3687 = vmatprep.subr.bf16.mxu0 %v3341
  %3688 = vmatpush1.bf16.msra.mxu0 %v3340
  %3689 = vmatprep.subr.bf16.mxu0 %v3348
  %3690 = vmatpush1.bf16.msra.mxu0 %v3347
  %3691 = vmatprep.subr.bf16.mxu0 %v3355
  %3692 = vmatpush1.bf16.msra.mxu0 %v3354
  %3693 = vmatprep.subr.bf16.mxu0 %v3362
  %3694 = vmatpush1.bf16.msra.mxu0 %v3361
  %3695 = vmatprep.subr.bf16.mxu0 %v3369
  %3696 = vmatpush1.bf16.msra.mxu0 %v3368
  %3697 = vmatprep.subr.bf16.mxu0 %v3376
  %3698 = vmatpush1.bf16.msra.mxu0 %v3375
  %3699 = vmatprep.subr.bf16.mxu0 %v3383
  %3700 = vmatpush1.bf16.msra.mxu0 %v3382
  %3701 = vmatprep.subr.bf16.mxu0 %v3390
  %3702 = vmatpush1.bf16.msra.mxu0 %v3389
  %3703 = vmatprep.subr.bf16.mxu0 %v3397
  %3704 = vmatpush1.bf16.msra.mxu0 %v3396
  %3705 = vmatprep.subr.bf16.mxu0 %v3404
  %3706 = vmatpush1.bf16.msra.mxu0 %v3403
  %3707 = vmatprep.mubr.bf16.mxu0 %v2189
  %3708 = vmatmul.mubr.bf16.gmra.mrb[0].mxu0 %v2188
  %v3709 = vpop.f32.mrb[0].mxu0
  %v3710 = vadd.f32 %v3669, %v3709
  %v3711 = vpop.f32.mrb[0].mxu0
  %v3712 = vadd.f32 %v3671, %v3711
  %v3713 = vpop.f32.mrb[0].mxu0
  %v3714 = vpop.f32.mrb[0].mxu0
  %3715 = vdwg.mxu0
  %3716 = vmatprep.subr.bf16.mxu0 %v3189
  %3717 = vmatpush1.bf16.msra.mxu0 %v3188
  %3718 = vmatprep.subr.bf16.mxu0 %v3196
  %3719 = vmatpush1.bf16.msra.mxu0 %v3195
  %3720 = vmatprep.subr.bf16.mxu0 %v3203
  %3721 = vmatpush1.bf16.msra.mxu0 %v3202
  %3722 = vmatprep.subr.bf16.mxu0 %v3210
  %3723 = vmatpush1.bf16.msra.mxu0 %v3209
  %3724 = vmatprep.subr.bf16.mxu0 %v3217
  %3725 = vmatpush1.bf16.msra.mxu0 %v3216
  %3726 = vmatprep.subr.bf16.mxu0 %v3224
  %3727 = vmatpush1.bf16.msra.mxu0 %v3223
  %3728 = vmatprep.subr.bf16.mxu0 %v3231
  %3729 = vmatpush1.bf16.msra.mxu0 %v3230
  %3730 = vmatprep.subr.bf16.mxu0 %v3238
  %3731 = vmatpush1.bf16.msra.mxu0 %v3237
  %3732 = vmatprep.subr.bf16.mxu0 %v3245
  %3733 = vmatpush1.bf16.msra.mxu0 %v3244
  %3734 = vmatprep.subr.bf16.mxu0 %v3252
  %3735 = vmatpush1.bf16.msra.mxu0 %v3251
  %3736 = vmatprep.subr.bf16.mxu0 %v3259
  %3737 = vmatpush1.bf16.msra.mxu0 %v3258
  %3738 = vmatprep.subr.bf16.mxu0 %v3266
  %3739 = vmatpush1.bf16.msra.mxu0 %v3265
  %3740 = vmatprep.subr.bf16.mxu0 %v3273
  %3741 = vmatpush1.bf16.msra.mxu0 %v3272
  %3742 = vmatprep.subr.bf16.mxu0 %v3280
  %3743 = vmatpush1.bf16.msra.mxu0 %v3279
  %3744 = vmatprep.subr.bf16.mxu0 %v3287
  %3745 = vmatpush1.bf16.msra.mxu0 %v3286
  %3746 = vmatprep.subr.bf16.mxu0 %v3294
  %3747 = vmatpush1.bf16.msra.mxu0 %v3293
  %3748 = vmatprep.mubr.bf16.mxu0 %v2187
  %3749 = vmatmul.mubr.bf16.gmra.mrb[0].mxu0 %v2186
  %v3750 = vpop.f32.mrb[0].mxu0
  %v3751 = vadd.f32 %v2458, %v3750
  %v3752 = vpop.f32.mrb[0].mxu0
  %v3753 = vadd.f32 %v2462, %v3752
  %v3754 = vpop.f32.mrb[0].mxu0
  %v3755 = vpop.f32.mrb[0].mxu0
  %3756 = vdwg.mxu0
  %3757 = vmatprep.subr.bf16.mxu0 %v3301
  %3758 = vmatpush1.bf16.msra.mxu0 %v3300
  %3759 = vmatprep.subr.bf16.mxu0 %v3308
  %3760 = vmatpush1.bf16.msra.mxu0 %v3307
  %3761 = vmatprep.subr.bf16.mxu0 %v3315
  %3762 = vmatpush1.bf16.msra.mxu0 %v3314
  %3763 = vmatprep.subr.bf16.mxu0 %v3322
  %3764 = vmatpush1.bf16.msra.mxu0 %v3321
  %3765 = vmatprep.subr.bf16.mxu0 %v3329
  %3766 = vmatpush1.bf16.msra.mxu0 %v3328
  %3767 = vmatprep.subr.bf16.mxu0 %v3336
  %3768 = vmatpush1.bf16.msra.mxu0 %v3335
  %3769 = vmatprep.subr.bf16.mxu0 %v3343
  %3770 = vmatpush1.bf16.msra.mxu0 %v3342
  %3771 = vmatprep.subr.bf16.mxu0 %v3350
  %3772 = vmatpush1.bf16.msra.mxu0 %v3349
  %3773 = vmatprep.subr.bf16.mxu0 %v3357
  %3774 = vmatpush1.bf16.msra.mxu0 %v3356
  %3775 = vmatprep.subr.bf16.mxu0 %v3364
  %3776 = vmatpush1.bf16.msra.mxu0 %v3363
  %3777 = vmatprep.subr.bf16.mxu0 %v3371
  %3778 = vmatpush1.bf16.msra.mxu0 %v3370
  %3779 = vmatprep.subr.bf16.mxu0 %v3378
  %3780 = vmatpush1.bf16.msra.mxu0 %v3377
  %3781 = vmatprep.subr.bf16.mxu0 %v3385
  %3782 = vmatpush1.bf16.msra.mxu0 %v3384
  %3783 = vmatprep.subr.bf16.mxu0 %v3392
  %3784 = vmatpush1.bf16.msra.mxu0 %v3391
  %3785 = vmatprep.subr.bf16.mxu0 %v3399
  %3786 = vmatpush1.bf16.msra.mxu0 %v3398
  %3787 = vmatprep.subr.bf16.mxu0 %v3406
  %3788 = vmatpush1.bf16.msra.mxu0 %v3405
  %3789 = vmatprep.mubr.bf16.mxu0 %v2189
  %3790 = vmatmul.mubr.bf16.gmra.mrb[0].mxu0 %v2188
  %v3791 = vpop.f32.mrb[0].mxu0
  %v3792 = vadd.f32 %v3751, %v3791
  %v3793 = vpop.f32.mrb[0].mxu0
  %v3794 = vadd.f32 %v3753, %v3793
  %v3795 = vpop.f32.mrb[0].mxu0
  %v3796 = vpop.f32.mrb[0].mxu0
  %3797 = vdwg.mxu0
  %3798 = vmatprep.subr.bf16.mxu0 %v3191
  %3799 = vmatpush1.bf16.msra.mxu0 %v3190
  %3800 = vmatprep.subr.bf16.mxu0 %v3198
  %3801 = vmatpush1.bf16.msra.mxu0 %v3197
  %3802 = vmatprep.subr.bf16.mxu0 %v3205
  %3803 = vmatpush1.bf16.msra.mxu0 %v3204
  %3804 = vmatprep.subr.bf16.mxu0 %v3212
  %3805 = vmatpush1.bf16.msra.mxu0 %v3211
  %3806 = vmatprep.subr.bf16.mxu0 %v3219
  %3807 = vmatpush1.bf16.msra.mxu0 %v3218
  %3808 = vmatprep.subr.bf16.mxu0 %v3226
  %3809 = vmatpush1.bf16.msra.mxu0 %v3225
  %3810 = vmatprep.subr.bf16.mxu0 %v3233
  %3811 = vmatpush1.bf16.msra.mxu0 %v3232
  %3812 = vmatprep.subr.bf16.mxu0 %v3240
  %3813 = vmatpush1.bf16.msra.mxu0 %v3239
  %3814 = vmatprep.subr.bf16.mxu0 %v3247
  %3815 = vmatpush1.bf16.msra.mxu0 %v3246
  %3816 = vmatprep.subr.bf16.mxu0 %v3254
  %3817 = vmatpush1.bf16.msra.mxu0 %v3253
  %3818 = vmatprep.subr.bf16.mxu0 %v3261
  %3819 = vmatpush1.bf16.msra.mxu0 %v3260
  %3820 = vmatprep.subr.bf16.mxu0 %v3268
  %3821 = vmatpush1.bf16.msra.mxu0 %v3267
  %3822 = vmatprep.subr.bf16.mxu0 %v3275
  %3823 = vmatpush1.bf16.msra.mxu0 %v3274
  %3824 = vmatprep.subr.bf16.mxu0 %v3282
  %3825 = vmatpush1.bf16.msra.mxu0 %v3281
  %3826 = vmatprep.subr.bf16.mxu0 %v3289
  %3827 = vmatpush1.bf16.msra.mxu0 %v3288
  %3828 = vmatprep.subr.bf16.mxu0 %v3296
  %3829 = vmatpush1.bf16.msra.mxu0 %v3295
  %3830 = vmatprep.mubr.bf16.mxu0 %v2187
  %3831 = vmatmul.mubr.bf16.gmra.mrb[0].mxu0 %v2186
  %v3832 = vpop.f32.mrb[0].mxu0
  %v3833 = vadd.f32 %v2466, %v3832
  %v3834 = vpop.f32.mrb[0].mxu0
  %v3835 = vadd.f32 %v2470, %v3834
  %v3836 = vpop.f32.mrb[0].mxu0
  %v3837 = vpop.f32.mrb[0].mxu0
  %3838 = vdwg.mxu0
  %3839 = vmatprep.subr.bf16.mxu0 %v3303
  %3840 = vmatpush1.bf16.msra.mxu0 %v3302
  %3841 = vmatprep.subr.bf16.mxu0 %v3310
  %3842 = vmatpush1.bf16.msra.mxu0 %v3309
  %3843 = vmatprep.subr.bf16.mxu0 %v3317
  %3844 = vmatpush1.bf16.msra.mxu0 %v3316
  %3845 = vmatprep.subr.bf16.mxu0 %v3324
  %3846 = vmatpush1.bf16.msra.mxu0 %v3323
  %3847 = vmatprep.subr.bf16.mxu0 %v3331
  %3848 = vmatpush1.bf16.msra.mxu0 %v3330
  %3849 = vmatprep.subr.bf16.mxu0 %v3338
  %3850 = vmatpush1.bf16.msra.mxu0 %v3337
  %3851 = vmatprep.subr.bf16.mxu0 %v3345
  %3852 = vmatpush1.bf16.msra.mxu0 %v3344
  %3853 = vmatprep.subr.bf16.mxu0 %v3352
  %3854 = vmatpush1.bf16.msra.mxu0 %v3351
  %3855 = vmatprep.subr.bf16.mxu0 %v3359
  %3856 = vmatpush1.bf16.msra.mxu0 %v3358
  %3857 = vmatprep.subr.bf16.mxu0 %v3366
  %3858 = vmatpush1.bf16.msra.mxu0 %v3365
  %3859 = vmatprep.subr.bf16.mxu0 %v3373
  %3860 = vmatpush1.bf16.msra.mxu0 %v3372
  %3861 = vmatprep.subr.bf16.mxu0 %v3380
  %3862 = vmatpush1.bf16.msra.mxu0 %v3379
  %3863 = vmatprep.subr.bf16.mxu0 %v3387
  %3864 = vmatpush1.bf16.msra.mxu0 %v3386
  %3865 = vmatprep.subr.bf16.mxu0 %v3394
  %3866 = vmatpush1.bf16.msra.mxu0 %v3393
  %3867 = vmatprep.subr.bf16.mxu0 %v3401
  %3868 = vmatpush1.bf16.msra.mxu0 %v3400
  %3869 = vmatprep.subr.bf16.mxu0 %v3408
  %3870 = vmatpush1.bf16.msra.mxu0 %v3407
  %3871 = vmatprep.mubr.bf16.mxu0 %v2189
  %3872 = vmatmul.mubr.bf16.gmra.mrb[0].mxu0 %v2188
  %v3873 = vpop.f32.mrb[0].mxu0
  %v3874 = vadd.f32 %v3833, %v3873
  %v3875 = vpop.f32.mrb[0].mxu0
  %v3876 = vadd.f32 %v3835, %v3875
  %v3877 = vpop.f32.mrb[0].mxu0
  %v3878 = vpop.f32.mrb[0].mxu0
  %3879 = vdwg.mxu0
  %3880 = vmatprep.subr.bf16.mxu0 0
  %3881 = vmatpush1.bf16.msra.mxu0 %v3192
  %3882 = vmatprep.subr.bf16.mxu0 0
  %3883 = vmatpush1.bf16.msra.mxu0 %v3199
  %3884 = vmatprep.subr.bf16.mxu0 0
  %3885 = vmatpush1.bf16.msra.mxu0 %v3206
  %3886 = vmatprep.subr.bf16.mxu0 0
  %3887 = vmatpush1.bf16.msra.mxu0 %v3213
  %3888 = vmatprep.subr.bf16.mxu0 0
  %3889 = vmatpush1.bf16.msra.mxu0 %v3220
  %3890 = vmatprep.subr.bf16.mxu0 0
  %3891 = vmatpush1.bf16.msra.mxu0 %v3227
  %3892 = vmatprep.subr.bf16.mxu0 0
  %3893 = vmatpush1.bf16.msra.mxu0 %v3234
  %3894 = vmatprep.subr.bf16.mxu0 0
  %3895 = vmatpush1.bf16.msra.mxu0 %v3241
  %3896 = vmatprep.subr.bf16.mxu0 0
  %3897 = vmatpush1.bf16.msra.mxu0 %v3248
  %3898 = vmatprep.subr.bf16.mxu0 0
  %3899 = vmatpush1.bf16.msra.mxu0 %v3255
  %3900 = vmatprep.subr.bf16.mxu0 0
  %3901 = vmatpush1.bf16.msra.mxu0 %v3262
  %3902 = vmatprep.subr.bf16.mxu0 0
  %3903 = vmatpush1.bf16.msra.mxu0 %v3269
  %3904 = vmatprep.subr.bf16.mxu0 0
  %3905 = vmatpush1.bf16.msra.mxu0 %v3276
  %3906 = vmatprep.subr.bf16.mxu0 0
  %3907 = vmatpush1.bf16.msra.mxu0 %v3283
  %3908 = vmatprep.subr.bf16.mxu0 0
  %3909 = vmatpush1.bf16.msra.mxu0 %v3290
  %3910 = vmatprep.subr.bf16.mxu0 0
  %3911 = vmatpush1.bf16.msra.mxu0 %v3297
  %3912 = vmatprep.mubr.bf16.mxu0 %v2187
  %3913 = vmatmul.mubr.bf16.gmra.mrb[0].mxu0 %v2186
  %v3914 = vpop.f32.mrb[0].mxu0
  %v3915 = vadd.f32 %v2474, %v3914
  %v3916 = vpop.f32.mrb[0].mxu0
  %v3917 = vpop.f32.mrb[0].mxu0
  %v3918 = vpop.f32.mrb[0].mxu0
  %3919 = vdwg.mxu0
  %3920 = vmatprep.subr.bf16.mxu0 0
  %3921 = vmatpush1.bf16.msra.mxu0 %v3304
  %3922 = vmatprep.subr.bf16.mxu0 0
  %3923 = vmatpush1.bf16.msra.mxu0 %v3311
  %3924 = vmatprep.subr.bf16.mxu0 0
  %3925 = vmatpush1.bf16.msra.mxu0 %v3318
  %3926 = vmatprep.subr.bf16.mxu0 0
  %3927 = vmatpush1.bf16.msra.mxu0 %v3325
  %3928 = vmatprep.subr.bf16.mxu0 0
  %3929 = vmatpush1.bf16.msra.mxu0 %v3332
  %3930 = vmatprep.subr.bf16.mxu0 0
  %3931 = vmatpush1.bf16.msra.mxu0 %v3339
  %3932 = vmatprep.subr.bf16.mxu0 0
  %3933 = vmatpush1.bf16.msra.mxu0 %v3346
  %3934 = vmatprep.subr.bf16.mxu0 0
  %3935 = vmatpush1.bf16.msra.mxu0 %v3353
  %3936 = vmatprep.subr.bf16.mxu0 0
  %3937 = vmatpush1.bf16.msra.mxu0 %v3360
  %3938 = vmatprep.subr.bf16.mxu0 0
  %3939 = vmatpush1.bf16.msra.mxu0 %v3367
  %3940 = vmatprep.subr.bf16.mxu0 0
  %3941 = vmatpush1.bf16.msra.mxu0 %v3374
  %3942 = vmatprep.subr.bf16.mxu0 0
  %3943 = vmatpush1.bf16.msra.mxu0 %v3381
  %3944 = vmatprep.subr.bf16.mxu0 0
  %3945 = vmatpush1.bf16.msra.mxu0 %v3388
  %3946 = vmatprep.subr.bf16.mxu0 0
  %3947 = vmatpush1.bf16.msra.mxu0 %v3395
  %3948 = vmatprep.subr.bf16.mxu0 0
  %3949 = vmatpush1.bf16.msra.mxu0 %v3402
  %3950 = vmatprep.subr.bf16.mxu0 0
  %3951 = vmatpush1.bf16.msra.mxu0 %v3409
  %3952 = vmatprep.mubr.bf16.mxu0 %v2189
  %3953 = vmatmul.mubr.bf16.gmra.mrb[0].mxu0 %v2188
  %v3954 = vpop.f32.mrb[0].mxu0
  %v3955 = vadd.f32 %v3915, %v3954
  %v3956 = vpop.f32.mrb[0].mxu0
  %v3957 = vpop.f32.mrb[0].mxu0
  %v3958 = vpop.f32.mrb[0].mxu0
  %3959 = vdwg.mxu0
  %v3960 = vpack.c.bf16 %v3710, %v3710
  %v3961 = vpack.c.bf16 %v3712, %v3712
  %v3962 = vpack.c.bf16 %v3792, %v3792
  %v3963 = vpack.c.bf16 %v3794, %v3794
  %v3964 = vpack.c.bf16 %v3874, %v3874
  %v3965 = vpack.c.bf16 %v3876, %v3876
  %v3966 = vpack.c.bf16 %v3955, %v3955
  %v3967 = vxor.u32 %v3960, 2147516416
  %v3968 = vxor.u32 %v3961, 2147516416
  %v3969 = vxor.u32 %v3962, 2147516416
  %v3970 = vxor.u32 %v3963, 2147516416
  %v3971 = vxor.u32 %v3964, 2147516416
  %v3972 = vxor.u32 %v3965, 2147516416
  %v3973 = vxor.u32 %v3966, 2147516416
  %v3975 = vmul.bf16 %v3967, 1069105081
  %v3976 = vpow.bf16.pop %v3975
  %v3978 = vmul.bf16 %v3968, 1069105081
  %v3979 = vpow.bf16.pop %v3978
  %v3981 = vmul.bf16 %v3969, 1069105081
  %v3982 = vpow.bf16.pop %v3981
  %v3984 = vmul.bf16 %v3970, 1069105081
  %v3985 = vpow.bf16.pop %v3984
  %v3987 = vmul.bf16 %v3971, 1069105081
  %v3988 = vpow.bf16.pop %v3987
  %v3990 = vmul.bf16 %v3972, 1069105081
  %v3991 = vpow.bf16.pop %v3990
  %v3993 = vmul.bf16 %v3973, 1069105081
  %v3994 = vpow.bf16.pop %v3993
  %v3995 = vadd.bf16 %v3976, 1065369472
  %v3996 = vadd.bf16 %v3979, 1065369472
  %v3997 = vadd.bf16 %v3982, 1065369472
  %v3998 = vadd.bf16 %v3985, 1065369472
  %v3999 = vadd.bf16 %v3988, 1065369472
  %v4000 = vadd.bf16 %v3991, 1065369472
  %v4001 = vadd.bf16 %v3994, 1065369472
  %v4002 = vrcp.bf16.pop %v3995
  %v4003 = vmul.bf16 1065369472, %v4002
  %v4004 = vrcp.bf16.pop %v3996
  %v4005 = vmul.bf16 1065369472, %v4004
  %v4006 = vrcp.bf16.pop %v3997
  %v4007 = vmul.bf16 1065369472, %v4006
  %v4008 = vrcp.bf16.pop %v3998
  %v4009 = vmul.bf16 1065369472, %v4008
  %v4010 = vrcp.bf16.pop %v3999
  %v4011 = vmul.bf16 1065369472, %v4010
  %v4012 = vrcp.bf16.pop %v4000
  %v4013 = vmul.bf16 1065369472, %v4012
  %v4014 = vrcp.bf16.pop %v4001
  %v4015 = vmul.bf16 1065369472, %v4014
  %v4023 = vcombine.low %v4003, %v4005
  %v4024 = vcombine.low %v4007, %v4009
  %v4025 = vcombine.low %v4011, %v4013
  %v4027 = vunpack.c.l.s4 1966171168
  %v4028 = vunpack.c.0.s8 %v4027
  %v4029 = vlaneseq
  %v4030 = vshrl.u32 %v4029, 7
  %v4031 = vsub.s32 %v4028, %v4030
  %v4032 = vrot.slane %v4023, %v4031
  %v4034 = vunpack.c.l.s4 1966171168
  %v4035 = vunpack.c.0.s8 %v4034
  %v4036 = vlaneseq
  %v4037 = vshrl.u32 %v4036, 7
  %v4038 = vsub.s32 %v4035, %v4037
  %v4039 = vrot.slane %v4024, %v4038
  %v4041 = vunpack.c.l.s4 1966171168
  %v4042 = vunpack.c.0.s8 %v4041
  %v4043 = vlaneseq
  %v4044 = vshrl.u32 %v4043, 7
  %v4045 = vsub.s32 %v4042, %v4044
  %v4046 = vrot.slane %v4025, %v4045
  %v4048 = vunpack.c.l.s4 1966171168
  %v4049 = vunpack.c.0.s8 %v4048
  %v4050 = vlaneseq
  %v4051 = vshrl.u32 %v4050, 7
  %v4052 = vsub.s32 %v4049, %v4051
  %v4053 = vrot.slane %v4015, %v4052
  %v4054 = vcombine.low %v4032, %v4039
  %v4055 = vcombine.low %v4046, %v4053
  %v4057 = vunpack.c.l.s4 1966171168
  %v4058 = vunpack.c.0.s8 %v4057
  %v4059 = vlaneseq
  %v4060 = vshrl.u32 %v4059, 7
  %v4061 = vsub.s32 %v4058, %v4060
  %v4062 = vrot.slane %v4054, %v4061
  %v4064 = vunpack.c.l.s4 1966171168
  %v4065 = vunpack.c.0.s8 %v4064
  %v4066 = vlaneseq
  %v4067 = vshrl.u32 %v4066, 7
  %v4068 = vsub.s32 %v4065, %v4067
  %v4069 = vrot.slane %v4055, %v4068
  %v4070 = vcombine.low %v4062, %v4069
  %vm4072 = vcmask 1040384
  %vm4073 = vcmask 1041409
  %vm4074 = vmor %vm4073, %vm4072
  %vm4075 = vcmask 1042434
  %vm4076 = vmor %vm4075, %vm4074
  %vm4077 = vcmask 1043459
  %vm4078 = vmor %vm4077, %vm4076
  %vm4079 = vcmask 1044484
  %vm4080 = vmor %vm4079, %vm4078
  %vm4081 = vcmask 1045509
  %vm4082 = vmor %vm4081, %vm4080
  %vm4083 = vcmask 129030
  %vm4084 = vmor %vm4083, %vm4082
  %4085 = vst.msk [vmem:[%s7] sm:$0x7f] %vm4084, %v4070
  %4086 = vst [vmem:[%s8] sm:$0x3] %v1959
  // Predicated region
  $region30: #{vae_forward.1} parent=0 // pred_check
    _
  $region31: #{vae_forward.1} parent=0 // pred_check_branch
    %4088 = sbr.rel (0) target = $region33
  $region32: #{vae_forward.1} parent=0 // pred_region
    _
  $region33: #{vae_forward.1} parent=0 // pred_fallthru
    _
  // Predicated region
  $region34: #{vae_forward.1} parent=0 // pred_check
    _
  $region35: #{vae_forward.1} parent=0 // pred_check_branch
    %4090 = sbr.rel (0) target = $region37
  $region36: #{vae_forward.1} parent=0 // pred_region
    _
  $region37: #{vae_forward.1} parent=0 // pred_fallthru
    _
  // Predicated region
  $region38: #{vae_forward.1} parent=0 // pred_check
    _
  $region39: #{vae_forward.1} parent=0 // pred_check_branch
    %4092 = sbr.rel (0) target = $region41
  $region40: #{vae_forward.1} parent=0 // pred_region
    _
  $region41: #{vae_forward.1} parent=0 // pred_fallthru
    _
  // Predicated region
  $region42: #{vae_forward.1} parent=0 // pred_check
    _
  $region43: #{vae_forward.1} parent=0 // pred_check_branch
    %4094 = sbr.rel (0) target = $region45
  $region44: #{vae_forward.1} parent=0 // pred_region
    _
  $region45: #{vae_forward.1} parent=0 // pred_fallthru
    _

</llo_original>
